<compile_context>
chip_gen: v5e
topology: v5e:2x2
jax: 0.10.0
libtpu: 0.0.40
codegen_flags: <defaults>
</compile_context>

<pallas_src>
import functools
from typing import NamedTuple

import jax
import jax.numpy as jnp
from jax.experimental import pallas as pl
from jax.experimental.pallas import tpu as pltpu


class Arch(NamedTuple):
    groups: int = 4
    stem_c: int = 16
    b1_mid: int = 32
    b1_cout: int = 64
    b2_mid: int = 64
    b2_cout: int = 128
    feature_dim: int = 32


# --------------------------------------------------------------------------
# Pallas kernels (3 total for the whole network)
# --------------------------------------------------------------------------
def _stem_head_kernel(p_ref, w0_ref, s0_ref, b0_ref,
                      wh_ref, sh_ref, bh_ref, gate_ref, o_ref):
    """stem 3x3 conv (im2col GEMM) + BN + ReLU, then the fused [w1 | ws]
    1x1 head of block 1 (BN folded; ReLU only on the w1 columns)."""
    x0 = jnp.dot(p_ref[...], w0_ref[...], preferred_element_type=jnp.float32)
    x0 = jnp.maximum(x0 * s0_ref[...] + b0_ref[...], 0.0)
    h = jnp.dot(x0.astype(jnp.bfloat16), wh_ref[...],
                preferred_element_type=jnp.float32)
    h = h * sh_ref[...] + bh_ref[...]
    h = jnp.where(gate_ref[...] > 0.0, jnp.maximum(h, 0.0), h)
    o_ref[...] = h.astype(o_ref.dtype)


def _block_tail_head_kernel(patch_ref, w2_ref, s2_ref, b2_ref,
                            w3_ref, s3_ref, b3_ref, sc_ref,
                            wh_ref, sh_ref, bh_ref, gate_ref,
                            o_ref, *, groups):
    """ResNeXt block tail: grouped 3x3 stride-2 conv (patches) + BN + ReLU,
    1x1 expand conv + BN, residual add + ReLU; fused with the [w1 | ws]
    1x1 head of the NEXT block."""
    m = patch_ref.shape[1]
    cout = w3_ref.shape[2]
    acc = jnp.zeros((m, cout), jnp.float32)
    for g in range(groups):                       # static unroll, all on MXU
        u = jnp.dot(patch_ref[g], w2_ref[g],
                    preferred_element_type=jnp.float32)
        u = jnp.maximum(u * s2_ref[g] + b2_ref[g], 0.0)
        acc = acc + jnp.dot(u.astype(jnp.bfloat16), w3_ref[g],
                            preferred_element_type=jnp.float32)
    o1 = acc * s3_ref[...] + b3_ref[...] + sc_ref[...].astype(jnp.float32)
    o1 = jnp.maximum(o1, 0.0)                      # block output (residual ReLU)
    h = jnp.dot(o1.astype(jnp.bfloat16), wh_ref[...],
                preferred_element_type=jnp.float32)
    h = h * sh_ref[...] + bh_ref[...]
    h = jnp.where(gate_ref[...] > 0.0, jnp.maximum(h, 0.0), h)
    o_ref[...] = h.astype(o_ref.dtype)


def _tail_gap_fc_kernel(patch_ref, w2_ref, s2_ref, b2_ref,
                        w3_ref, s3_ref, b3_ref, sc_ref,
                        pool_ref, fcw_ref, fcb_ref, o_ref, *, groups):
    """Last block tail + global average pool (as a matmul) + FC head."""
    m = patch_ref.shape[1]
    cout = w3_ref.shape[2]
    acc = jnp.zeros((m, cout), jnp.float32)
    for g in range(groups):
        u = jnp.dot(patch_ref[g], w2_ref[g],
                    preferred_element_type=jnp.float32)
        u = jnp.maximum(u * s2_ref[g] + b2_ref[g], 0.0)
        acc = acc + jnp.dot(u.astype(jnp.bfloat16), w3_ref[g],
                            preferred_element_type=jnp.float32)
    o2 = jnp.maximum(acc * s3_ref[...] + b3_ref[...]
                     + sc_ref[...].astype(jnp.float32), 0.0)
    pooled = jnp.dot(pool_ref[...], o2.astype(jnp.bfloat16),
                     preferred_element_type=jnp.float32)
    feat = jnp.dot(pooled.astype(jnp.bfloat16), fcw_ref[...],
                   preferred_element_type=jnp.float32) + fcb_ref[...]
    o_ref[...] = feat


# --------------------------------------------------------------------------
# pallas_call wrappers
# --------------------------------------------------------------------------
def _full_spec(a):
    n = a.ndim
    return pl.BlockSpec(a.shape, lambda i, _n=n: (0,) * _n)


def _row_tile(m, target):
    if m % 8 or m <= target:
        return m
    t = min(target, m)
    t -= t % 8
    while t > 8 and m % t:
        t -= 8
    return t if (t >= 8 and m % t == 0) else m


def stem_head(patches, stem, head):
    M, K = patches.shape
    NP = head['w'].shape[1]
    tm = _row_tile(M, 256)
    return pl.pallas_call(
        _stem_head_kernel,
        out_shape=jax.ShapeDtypeStruct((M, NP), jnp.bfloat16),
        grid=(M // tm,),
        in_specs=[pl.BlockSpec((tm, K), lambda i: (i, 0)),
                  _full_spec(stem['w']), _full_spec(stem['s']),
                  _full_spec(stem['b']),
                  _full_spec(head['w']), _full_spec(head['s']),
                  _full_spec(head['b']), _full_spec(head['gate'])],
        out_specs=pl.BlockSpec((tm, NP), lambda i: (i, 0)),
        compiler_params=pltpu.CompilerParams(
            dimension_semantics=("parallel",)),
    )(patches, stem['w'], stem['s'], stem['b'],
      head['w'], head['s'], head['b'], head['gate'])


def block_tail_head(patches, sc, bp, head):
    groups, M, Kg = patches.shape
    cout = bp['w3'].shape[2]
    NP = head['w'].shape[1]
    tm = _row_tile(M, 64)
    return pl.pallas_call(
        functools.partial(_block_tail_head_kernel, groups=groups),
        out_shape=jax.ShapeDtypeStruct((M, NP), jnp.bfloat16),
        grid=(M // tm,),
        in_specs=[pl.BlockSpec((groups, tm, Kg), lambda i: (0, i, 0)),
                  _full_spec(bp['w2']), _full_spec(bp['s2']),
                  _full_spec(bp['b2']),
                  _full_spec(bp['w3']), _full_spec(bp['s3']),
                  _full_spec(bp['b3']),
                  pl.BlockSpec((tm, cout), lambda i: (i, 0)),
                  _full_spec(head['w']), _full_spec(head['s']),
                  _full_spec(head['b']), _full_spec(head['gate'])],
        out_specs=pl.BlockSpec((tm, NP), lambda i: (i, 0)),
        compiler_params=pltpu.CompilerParams(
            dimension_semantics=("parallel",)),
    )(patches, bp['w2'], bp['s2'], bp['b2'],
      bp['w3'], bp['s3'], bp['b3'], sc,
      head['w'], head['s'], head['b'], head['gate'])


def tail_gap_fc(patches, sc, pool, bp, fc):
    groups, M, Kg = patches.shape
    Nb = pool.shape[0]
    NP = fc['w'].shape[1]
    # single step: the GAP reduces over all rows (M is tiny here anyway).
    return pl.pallas_call(
        functools.partial(_tail_gap_fc_kernel, groups=groups),
        out_shape=jax.ShapeDtypeStruct((Nb, NP), jnp.float32),
        grid=(1,),
        in_specs=[_full_spec(patches),
                  _full_spec(bp['w2']), _full_spec(bp['s2']),
                  _full_spec(bp['b2']),
                  _full_spec(bp['w3']), _full_spec(bp['s3']),
                  _full_spec(bp['b3']),
                  _full_spec(sc), _full_spec(pool),
                  _full_spec(fc['w']), _full_spec(fc['b'])],
        out_specs=pl.BlockSpec((Nb, NP), lambda i: (0, 0)),
        compiler_params=pltpu.CompilerParams(
            dimension_semantics=("arbitrary",)),
    )(patches, bp['w2'], bp['s2'], bp['b2'],
      bp['w3'], bp['s3'], bp['b3'], sc, pool, fc['w'], fc['b'])


# --------------------------------------------------------------------------
# XLA-side glue (tiny strided slices between kernels; runs inside jit)
# --------------------------------------------------------------------------
def _im2col_stem(x_nhwc, k_pad):
    """3x3 stride-1 pad-1 im2col -> (N*H*W, 9*C), K padded to k_pad."""
    N, H, W, C = x_nhwc.shape
    xp = jnp.pad(x_nhwc, ((0, 0), (1, 1), (1, 1), (0, 0)))
    cols = [xp[:, i:i + H, j:j + W, :] for i in range(3) for j in range(3)]
    cols = jnp.concatenate(cols, axis=-1).reshape(N * H * W, 9 * C)
    return jnp.pad(cols, ((0, 0), (0, k_pad - 9 * C)))


def _grouped_im2col_s2(t, groups):
    """3x3 stride-2 pad-1 grouped im2col.
    t: (N,H,W,mid) -> (groups, N*(H//2)*(W//2), 9*mid_g), with the K axis
    ordered (ki,kj)-major / channel-minor, matching the w2 weight layout."""
    N, H, W, mid = t.shape
    mid_g = mid // groups
    oh, ow = H // 2, W // 2
    tp = jnp.pad(t, ((0, 0), (1, 1), (1, 1), (0, 0)))
    cols = [tp[:, i:i + 2 * oh:2, j:j + 2 * ow:2, :]
            for i in range(3) for j in range(3)]
    cols = jnp.stack(cols, axis=3)                       # (N,oh,ow,9,mid)
    cols = cols.reshape(N, oh, ow, 9, groups, mid_g)
    cols = jnp.transpose(cols, (4, 0, 1, 2, 3, 5))       # (g,N,oh,ow,9,mid_g)
    return cols.reshape(groups, N * oh * ow, 9 * mid_g)


# --------------------------------------------------------------------------
# Deterministic parameter construction (BN folded, bf16 weights, padded)
# --------------------------------------------------------------------------
def _he(key, shape, fan_in):
    return jax.random.normal(key, shape, jnp.float32) * (2.0 / fan_in) ** 0.5


def _bn_fold(key, c):
    k1, k2, k3, k4 = jax.random.split(key, 4)
    gamma = 1.0 + 0.1 * jax.random.normal(k1, (c,), jnp.float32)
    beta = 0.1 * jax.random.normal(k2, (c,), jnp.float32)
    mean = 0.05 * jax.random.normal(k3, (c,), jnp.float32)
    var = 1.0 + 0.2 * jnp.abs(jax.random.normal(k4, (c,), jnp.float32))
    scale = gamma / jnp.sqrt(var + 1e-5)
    bias = beta - mean * scale
    return scale, bias


def _pad_cols(a, n):
    return jnp.pad(a, ((0, 0), (0, n - a.shape[1])))


def _pad_vec(v, n):
    return jnp.pad(v, (0, n - v.shape[0]))


def init_params(key, arch, in_ch=3):
    keys = iter(jax.random.split(key, 32))
    g = arch.groups

    def fused_head(cin, mid, cout):
        w1 = _he(next(keys), (cin, mid), cin)
        s1, bi1 = _bn_fold(next(keys), mid)
        ws = _he(next(keys), (cin, cout), cin)
        ss, bis = _bn_fold(next(keys), cout)
        npad = ((mid + cout + 127) // 128) * 128         # lane-dense output
        w = jnp.concatenate([w1, ws], axis=1)
        s = jnp.concatenate([s1, ss])
        b = jnp.concatenate([bi1, bis])
        gate = jnp.concatenate([jnp.ones((mid,), jnp.float32),
                                jnp.zeros((cout,), jnp.float32)])
        return {'w': _pad_cols(w, npad).astype(jnp.bfloat16),
                's': _pad_vec(s, npad).reshape(1, npad),
                'b': _pad_vec(b, npad).reshape(1, npad),
                'gate': _pad_vec(gate, npad).reshape(1, npad)}

    def block_tail(mid, cout):
        mg = mid // g
        w2 = _he(next(keys), (g, 9 * mg, mg), 9 * mg)
        s2, b2 = _bn_fold(next(keys), mid)
        w3 = _he(next(keys), (mid, cout), mid)
        s3, b3 = _bn_fold(next(keys), cout)
        return {'w2': w2.astype(jnp.bfloat16),
                's2': s2.reshape(g, 1, mg), 'b2': b2.reshape(g, 1, mg),
                'w3': w3.reshape(g, mg, cout).astype(jnp.bfloat16),
                's3': s3.reshape(1, cout), 'b3': b3.reshape(1, cout)}

    p = {}
    k_stem = 9 * in_ch
    k_pad = ((k_stem + 7) // 8) * 8                      # 27 -> 32
    w0 = _he(next(keys), (k_stem, arch.stem_c), k_stem)
    s0, b0 = _bn_fold(next(keys), arch.stem_c)
    p['stem'] = {'w': jnp.pad(w0, ((0, k_pad - k_stem), (0, 0))
                              ).astype(jnp.bfloat16),
                 's': s0.reshape(1, arch.stem_c),
                 'b': b0.reshape(1, arch.stem_c)}
    p['head1'] = fused_head(arch.stem_c, arch.b1_mid, arch.b1_cout)
    p['b1'] = block_tail(arch.b1_mid, arch.b1_cout)
    p['head2'] = fused_head(arch.b1_cout, arch.b2_mid, arch.b2_cout)
    p['b2'] = block_tail(arch.b2_mid, arch.b2_cout)

    fpad = ((arch.feature_dim + 127) // 128) * 128
    fcw = _he(next(keys), (arch.b2_cout, arch.feature_dim), arch.b2_cout)
    fcb = 0.1 * jax.random.normal(next(keys), (arch.feature_dim,), jnp.float32)
    p['fc'] = {'w': _pad_cols(fcw, fpad).astype(jnp.bfloat16),
               'b': _pad_vec(fcb, fpad).reshape(1, fpad)}
    return p


# --------------------------------------------------------------------------
# Forward pass (ResFaceNextModel.forward == backbone(input))
# --------------------------------------------------------------------------
def resfacenext_forward(params, x_nchw, arch):
    p = params
    x = jnp.transpose(x_nchw, (0, 2, 3, 1)).astype(jnp.bfloat16)  # NCHW->NHWC
    N, H, W, _ = x.shape

    # --- kernel 1: stem conv + fused block-1 head ([w1 | shortcut]) --------
    patches0 = _im2col_stem(x, p['stem']['w'].shape[0])
    y1 = stem_head(patches0, p['stem'], p['head1'])      # (N*H*W, 128) bf16
    mid1, cout1 = arch.b1_mid, arch.b1_cout
    H2, W2 = H // 2, W // 2
    t1 = y1[:, :mid1].reshape(N, H, W, mid1)
    sc1 = (y1[:, mid1:mid1 + cout1].reshape(N, H, W, cout1)
           [:, ::2, ::2, :].reshape(N * H2 * W2, cout1))  # stride-2 shortcut

    # --- kernel 2: block-1 tail + fused block-2 head -----------------------
    patches1 = _grouped_im2col_s2(t1, arch.groups)
    y2 = block_tail_head(patches1, sc1, p['b1'], p['head2'])  # (N*H2*W2, 256)
    mid2, cout2 = arch.b2_mid, arch.b2_cout
    H3, W3 = H2 // 2, W2 // 2
    t2 = y2[:, :mid2].reshape(N, H2, W2, mid2)
    sc2 = (y2[:, mid2:mid2 + cout2].reshape(N, H2, W2, cout2)
           [:, ::2, ::2, :].reshape(N * H3 * W3, cout2))

    # --- kernel 3: block-2 tail + GAP (as matmul) + FC ----------------------
    patches2 = _grouped_im2col_s2(t2, arch.groups)
    pool = (jnp.repeat(jnp.eye(N, dtype=jnp.float32), H3 * W3, axis=1)
            / float(H3 * W3)).astype(jnp.bfloat16)       # (N, N*H3*W3)
    feat = tail_gap_fc(patches2, sc2, pool, p['b2'], p['fc'])
    return feat[:, :arch.feature_dim]                    # (N, feature_dim)


if __name__ == "__main__":
    key = jax.random.PRNGKey(0)
    pkey, xkey = jax.random.split(key)

    arch = Arch(feature_dim=32)
    params = init_params(pkey, arch, in_ch=3)

    # PyTorch-style NCHW input: small face crops (batch=2, C=3, 16x16)
    x = jax.random.normal(xkey, (2, 3, 16, 16), jnp.float32)

    fwd = jax.jit(resfacenext_forward, static_argnums=(2,))
    out = fwd(params, x, arch)
    out = jax.block_until_ready(out)
    assert out.shape == (2, arch.feature_dim), out.shape
    assert bool(jnp.all(jnp.isfinite(out)))
    print("KERNEL_OK")
</pallas_src>

<mosaic_0001>
module attributes {stable_mosaic.version = 11 : i64} {
  func.func @_stem_head_kernel(%arg0: i32, %arg1: memref<256x32xbf16, #tpu.memory_space<vmem>>, %arg2: memref<32x16xbf16, #tpu.memory_space<vmem>>, %arg3: memref<1x16xf32, #tpu.memory_space<vmem>>, %arg4: memref<1x16xf32, #tpu.memory_space<vmem>>, %arg5: memref<16x128xbf16, #tpu.memory_space<vmem>>, %arg6: memref<1x128xf32, #tpu.memory_space<vmem>>, %arg7: memref<1x128xf32, #tpu.memory_space<vmem>>, %arg8: memref<1x128xf32, #tpu.memory_space<vmem>>, %arg9: memref<256x128xbf16, #tpu.memory_space<vmem>>) attributes {dimension_semantics = [#tpu.dimension_semantics<parallel>], iteration_bounds = array<i64: 2>, scalar_prefetch = 0 : i64, scratch_operands = 0 : i64, tpu.core_type = #tpu.core_type<tc>, window_params = [{transform_indices = @transform_0, window_bounds = array<i64: 256, 32>}, {pipeline_mode = #tpu.pipeline_mode<synchronous>, transform_indices = @transform_1, window_bounds = array<i64: 32, 16>}, {pipeline_mode = #tpu.pipeline_mode<synchronous>, transform_indices = @transform_2, window_bounds = array<i64: 1, 16>}, {pipeline_mode = #tpu.pipeline_mode<synchronous>, transform_indices = @transform_3, window_bounds = array<i64: 1, 16>}, {pipeline_mode = #tpu.pipeline_mode<synchronous>, transform_indices = @transform_4, window_bounds = array<i64: 16, 128>}, {pipeline_mode = #tpu.pipeline_mode<synchronous>, transform_indices = @transform_5, window_bounds = array<i64: 1, 128>}, {pipeline_mode = #tpu.pipeline_mode<synchronous>, transform_indices = @transform_6, window_bounds = array<i64: 1, 128>}, {pipeline_mode = #tpu.pipeline_mode<synchronous>, transform_indices = @transform_7, window_bounds = array<i64: 1, 128>}, {transform_indices = @transform_8, window_bounds = array<i64: 256, 128>}]} {
    %c0 = arith.constant 0 : index
    %c0_0 = arith.constant 0 : index
    %0 = vector.load %arg1[%c0, %c0_0] : memref<256x32xbf16, #tpu.memory_space<vmem>>, vector<256x32xbf16>
    %c0_1 = arith.constant 0 : index
    %c0_2 = arith.constant 0 : index
    %1 = vector.load %arg2[%c0_1, %c0_2] : memref<32x16xbf16, #tpu.memory_space<vmem>>, vector<32x16xbf16>
    %cst = arith.constant dense<0.000000e+00> : vector<256x16xf32>
    %2 = tpu.matmul %0, %1, %cst {dimension_numbers = #tpu.dot_dimension_numbers<[1], [0], [0], [1], [0, 0, 1, 1], [], []>} : vector<256x32xbf16>, vector<32x16xbf16>, vector<256x16xf32> -> vector<256x16xf32>
    %c0_3 = arith.constant 0 : index
    %c0_4 = arith.constant 0 : index
    %3 = vector.load %arg3[%c0_3, %c0_4] : memref<1x16xf32, #tpu.memory_space<vmem>>, vector<1x16xf32>
    %4 = vector.broadcast %3 : vector<1x16xf32> to vector<256x16xf32>
    %5 = arith.mulf %2, %4 : vector<256x16xf32>
    %c0_5 = arith.constant 0 : index
    %c0_6 = arith.constant 0 : index
    %6 = vector.load %arg4[%c0_5, %c0_6] : memref<1x16xf32, #tpu.memory_space<vmem>>, vector<1x16xf32>
    %7 = vector.broadcast %6 : vector<1x16xf32> to vector<256x16xf32>
    %8 = arith.addf %5, %7 : vector<256x16xf32>
    %cst_7 = arith.constant 0.000000e+00 : f32
    %9 = vector.broadcast %cst_7 : f32 to vector<256x16xf32>
    %10 = arith.maximumf %8, %9 : vector<256x16xf32>
    %11 = arith.truncf %10 : vector<256x16xf32> to vector<256x16xbf16>
    %c0_8 = arith.constant 0 : index
    %c0_9 = arith.constant 0 : index
    %12 = vector.load %arg5[%c0_8, %c0_9] : memref<16x128xbf16, #tpu.memory_space<vmem>>, vector<16x128xbf16>
    %cst_10 = arith.constant dense<0.000000e+00> : vector<256x128xf32>
    %13 = tpu.matmul %11, %12, %cst_10 {dimension_numbers = #tpu.dot_dimension_numbers<[1], [0], [0], [1], [0, 0, 1, 1], [], []>} : vector<256x16xbf16>, vector<16x128xbf16>, vector<256x128xf32> -> vector<256x128xf32>
    %c0_11 = arith.constant 0 : index
    %c0_12 = arith.constant 0 : index
    %14 = vector.load %arg6[%c0_11, %c0_12] : memref<1x128xf32, #tpu.memory_space<vmem>>, vector<1x128xf32>
    %15 = vector.broadcast %14 : vector<1x128xf32> to vector<256x128xf32>
    %16 = arith.mulf %13, %15 : vector<256x128xf32>
    %c0_13 = arith.constant 0 : index
    %c0_14 = arith.constant 0 : index
    %17 = vector.load %arg7[%c0_13, %c0_14] : memref<1x128xf32, #tpu.memory_space<vmem>>, vector<1x128xf32>
    %18 = vector.broadcast %17 : vector<1x128xf32> to vector<256x128xf32>
    %19 = arith.addf %16, %18 : vector<256x128xf32>
    %c0_15 = arith.constant 0 : index
    %c0_16 = arith.constant 0 : index
    %20 = vector.load %arg8[%c0_15, %c0_16] : memref<1x128xf32, #tpu.memory_space<vmem>>, vector<1x128xf32>
    %cst_17 = arith.constant 0.000000e+00 : f32
    %21 = vector.broadcast %cst_17 : f32 to vector<1x128xf32>
    %22 = arith.cmpf ogt, %20, %21 : vector<1x128xf32>
    %cst_18 = arith.constant 0.000000e+00 : f32
    %23 = vector.broadcast %cst_18 : f32 to vector<256x128xf32>
    %24 = arith.maximumf %19, %23 : vector<256x128xf32>
    %25 = vector.shape_cast %22 : vector<1x128xi1> to vector<1x128xi1>
    %26 = vector.broadcast %25 : vector<1x128xi1> to vector<256x128xi1>
    %27 = arith.select %26, %24, %19 : vector<256x128xi1>, vector<256x128xf32>
    %28 = arith.truncf %27 : vector<256x128xf32> to vector<256x128xbf16>
    %c0_19 = arith.constant 0 : index
    %c0_20 = arith.constant 0 : index
    %29 = vector.load %arg9[%c0_19, %c0_20] : memref<256x128xbf16, #tpu.memory_space<vmem>>, vector<256x128xbf16>
    tpu.vector_store %arg9[%c0_19, %c0_20], %28 {strides = array<i32>} : memref<256x128xbf16, #tpu.memory_space<vmem>>, vector<256x128xbf16>,
    return
  }
  func.func @transform_0(%arg0: i32) -> (i32, i32) {
    %c0_i32 = arith.constant 0 : i32
    %c0_i32_0 = arith.constant 0 : i32
    return %arg0, %c0_i32 : i32, i32
  }
  func.func @transform_1(%arg0: i32) -> (i32, i32) {
    %c0_i32 = arith.constant 0 : i32
    %c0_i32_0 = arith.constant 0 : i32
    %c0_i32_1 = arith.constant 0 : i32
    return %c0_i32, %c0_i32_0 : i32, i32
  }
  func.func @transform_2(%arg0: i32) -> (i32, i32) {
    %c0_i32 = arith.constant 0 : i32
    %c0_i32_0 = arith.constant 0 : i32
    %c0_i32_1 = arith.constant 0 : i32
    return %c0_i32, %c0_i32_0 : i32, i32
  }
  func.func @transform_3(%arg0: i32) -> (i32, i32) {
    %c0_i32 = arith.constant 0 : i32
    %c0_i32_0 = arith.constant 0 : i32
    %c0_i32_1 = arith.constant 0 : i32
    return %c0_i32, %c0_i32_0 : i32, i32
  }
  func.func @transform_4(%arg0: i32) -> (i32, i32) {
    %c0_i32 = arith.constant 0 : i32
    %c0_i32_0 = arith.constant 0 : i32
    %c0_i32_1 = arith.constant 0 : i32
    return %c0_i32, %c0_i32_0 : i32, i32
  }
  func.func @transform_5(%arg0: i32) -> (i32, i32) {
    %c0_i32 = arith.constant 0 : i32
    %c0_i32_0 = arith.constant 0 : i32
    %c0_i32_1 = arith.constant 0 : i32
    return %c0_i32, %c0_i32_0 : i32, i32
  }
  func.func @transform_6(%arg0: i32) -> (i32, i32) {
    %c0_i32 = arith.constant 0 : i32
    %c0_i32_0 = arith.constant 0 : i32
    %c0_i32_1 = arith.constant 0 : i32
    return %c0_i32, %c0_i32_0 : i32, i32
  }
  func.func @transform_7(%arg0: i32) -> (i32, i32) {
    %c0_i32 = arith.constant 0 : i32
    %c0_i32_0 = arith.constant 0 : i32
    %c0_i32_1 = arith.constant 0 : i32
    return %c0_i32, %c0_i32_0 : i32, i32
  }
  func.func @transform_8(%arg0: i32) -> (i32, i32) {
    %c0_i32 = arith.constant 0 : i32
    %c0_i32_0 = arith.constant 0 : i32
    return %arg0, %c0_i32 : i32, i32
  }
}

module attributes {stable_mosaic.version = 11 : i64} {
  func.func @_block_tail_head_kernel(%arg0: i32, %arg1: memref<4x64x72xbf16, #tpu.memory_space<vmem>>, %arg2: memref<4x72x8xbf16, #tpu.memory_space<vmem>>, %arg3: memref<4x1x8xf32, #tpu.memory_space<vmem>>, %arg4: memref<4x1x8xf32, #tpu.memory_space<vmem>>, %arg5: memref<4x8x64xbf16, #tpu.memory_space<vmem>>, %arg6: memref<1x64xf32, #tpu.memory_space<vmem>>, %arg7: memref<1x64xf32, #tpu.memory_space<vmem>>, %arg8: memref<64x64xbf16, #tpu.memory_space<vmem>>, %arg9: memref<64x256xbf16, #tpu.memory_space<vmem>>, %arg10: memref<1x256xf32, #tpu.memory_space<vmem>>, %arg11: memref<1x256xf32, #tpu.memory_space<vmem>>, %arg12: memref<1x256xf32, #tpu.memory_space<vmem>>, %arg13: memref<64x256xbf16, #tpu.memory_space<vmem>>) attributes {dimension_semantics = [#tpu.dimension_semantics<parallel>], iteration_bounds = array<i64: 2>, scalar_prefetch = 0 : i64, scratch_operands = 0 : i64, tpu.core_type = #tpu.core_type<tc>, window_params = [{transform_indices = @transform_0, window_bounds = array<i64: 4, 64, 72>}, {pipeline_mode = #tpu.pipeline_mode<synchronous>, transform_indices = @transform_1, window_bounds = array<i64: 4, 72, 8>}, {pipeline_mode = #tpu.pipeline_mode<synchronous>, transform_indices = @transform_2, window_bounds = array<i64: 4, 1, 8>}, {pipeline_mode = #tpu.pipeline_mode<synchronous>, transform_indices = @transform_3, window_bounds = array<i64: 4, 1, 8>}, {pipeline_mode = #tpu.pipeline_mode<synchronous>, transform_indices = @transform_4, window_bounds = array<i64: 4, 8, 64>}, {pipeline_mode = #tpu.pipeline_mode<synchronous>, transform_indices = @transform_5, window_bounds = array<i64: 1, 64>}, {pipeline_mode = #tpu.pipeline_mode<synchronous>, transform_indices = @transform_6, window_bounds = array<i64: 1, 64>}, {transform_indices = @transform_7, window_bounds = array<i64: 64, 64>}, {pipeline_mode = #tpu.pipeline_mode<synchronous>, transform_indices = @transform_8, window_bounds = array<i64: 64, 256>}, {pipeline_mode = #tpu.pipeline_mode<synchronous>, transform_indices = @transform_9, window_bounds = array<i64: 1, 256>}, {pipeline_mode = #tpu.pipeline_mode<synchronous>, transform_indices = @transform_10, window_bounds = array<i64: 1, 256>}, {pipeline_mode = #tpu.pipeline_mode<synchronous>, transform_indices = @transform_11, window_bounds = array<i64: 1, 256>}, {transform_indices = @transform_12, window_bounds = array<i64: 64, 256>}]} {
    %cst = arith.constant 0.000000e+00 : f32
    %0 = vector.broadcast %cst : f32 to vector<64x64xf32>
    %c0 = arith.constant 0 : index
    %c0_0 = arith.constant 0 : index
    %c0_1 = arith.constant 0 : index
    %1 = vector.load %arg1[%c0, %c0_0, %c0_1] : memref<4x64x72xbf16, #tpu.memory_space<vmem>>, vector<1x64x72xbf16>
    %2 = vector.shape_cast %1 : vector<1x64x72xbf16> to vector<64x72xbf16>
    %c0_2 = arith.constant 0 : index
    %c0_3 = arith.constant 0 : index
    %c0_4 = arith.constant 0 : index
    %3 = vector.load %arg2[%c0_2, %c0_3, %c0_4] : memref<4x72x8xbf16, #tpu.memory_space<vmem>>, vector<1x72x8xbf16>
    %4 = vector.shape_cast %3 : vector<1x72x8xbf16> to vector<72x8xbf16>
    %cst_5 = arith.constant dense<0.000000e+00> : vector<64x8xf32>
    %5 = tpu.matmul %2, %4, %cst_5 {dimension_numbers = #tpu.dot_dimension_numbers<[1], [0], [0], [1], [0, 0, 1, 1], [], []>} : vector<64x72xbf16>, vector<72x8xbf16>, vector<64x8xf32> -> vector<64x8xf32>
    %c0_6 = arith.constant 0 : index
    %c0_7 = arith.constant 0 : index
    %c0_8 = arith.constant 0 : index
    %6 = vector.load %arg3[%c0_6, %c0_7, %c0_8] : memref<4x1x8xf32, #tpu.memory_space<vmem>>, vector<1x1x8xf32>
    %7 = vector.shape_cast %6 : vector<1x1x8xf32> to vector<1x8xf32>
    %8 = vector.broadcast %7 : vector<1x8xf32> to vector<64x8xf32>
    %9 = arith.mulf %5, %8 : vector<64x8xf32>
    %c0_9 = arith.constant 0 : index
    %c0_10 = arith.constant 0 : index
    %c0_11 = arith.constant 0 : index
    %10 = vector.load %arg4[%c0_9, %c0_10, %c0_11] : memref<4x1x8xf32, #tpu.memory_space<vmem>>, vector<1x1x8xf32>
    %11 = vector.shape_cast %10 : vector<1x1x8xf32> to vector<1x8xf32>
    %12 = vector.broadcast %11 : vector<1x8xf32> to vector<64x8xf32>
    %13 = arith.addf %9, %12 : vector<64x8xf32>
    %cst_12 = arith.constant 0.000000e+00 : f32
    %14 = vector.broadcast %cst_12 : f32 to vector<64x8xf32>
    %15 = arith.maximumf %13, %14 : vector<64x8xf32>
    %16 = arith.truncf %15 : vector<64x8xf32> to vector<64x8xbf16>
    %c0_13 = arith.constant 0 : index
    %c0_14 = arith.constant 0 : index
    %c0_15 = arith.constant 0 : index
    %17 = vector.load %arg5[%c0_13, %c0_14, %c0_15] : memref<4x8x64xbf16, #tpu.memory_space<vmem>>, vector<1x8x64xbf16>
    %18 = vector.shape_cast %17 : vector<1x8x64xbf16> to vector<8x64xbf16>
    %cst_16 = arith.constant dense<0.000000e+00> : vector<64x64xf32>
    %19 = tpu.matmul %16, %18, %cst_16 {dimension_numbers = #tpu.dot_dimension_numbers<[1], [0], [0], [1], [0, 0, 1, 1], [], []>} : vector<64x8xbf16>, vector<8x64xbf16>, vector<64x64xf32> -> vector<64x64xf32>
    %20 = arith.addf %0, %19 : vector<64x64xf32>
    %c1 = arith.constant 1 : index
    %c0_17 = arith.constant 0 : index
    %c0_18 = arith.constant 0 : index
    %21 = vector.load %arg1[%c1, %c0_17, %c0_18] : memref<4x64x72xbf16, #tpu.memory_space<vmem>>, vector<1x64x72xbf16>
    %22 = vector.shape_cast %21 : vector<1x64x72xbf16> to vector<64x72xbf16>
    %c1_19 = arith.constant 1 : index
    %c0_20 = arith.constant 0 : index
    %c0_21 = arith.constant 0 : index
    %23 = vector.load %arg2[%c1_19, %c0_20, %c0_21] : memref<4x72x8xbf16, #tpu.memory_space<vmem>>, vector<1x72x8xbf16>
    %24 = vector.shape_cast %23 : vector<1x72x8xbf16> to vector<72x8xbf16>
    %cst_22 = arith.constant dense<0.000000e+00> : vector<64x8xf32>
    %25 = tpu.matmul %22, %24, %cst_22 {dimension_numbers = #tpu.dot_dimension_numbers<[1], [0], [0], [1], [0, 0, 1, 1], [], []>} : vector<64x72xbf16>, vector<72x8xbf16>, vector<64x8xf32> -> vector<64x8xf32>
    %c1_23 = arith.constant 1 : index
    %c0_24 = arith.constant 0 : index
    %c0_25 = arith.constant 0 : index
    %26 = vector.load %arg3[%c1_23, %c0_24, %c0_25] : memref<4x1x8xf32, #tpu.memory_space<vmem>>, vector<1x1x8xf32>
    %27 = vector.shape_cast %26 : vector<1x1x8xf32> to vector<1x8xf32>
    %28 = vector.broadcast %27 : vector<1x8xf32> to vector<64x8xf32>
    %29 = arith.mulf %25, %28 : vector<64x8xf32>
    %c1_26 = arith.constant 1 : index
    %c0_27 = arith.constant 0 : index
    %c0_28 = arith.constant 0 : index
    %30 = vector.load %arg4[%c1_26, %c0_27, %c0_28] : memref<4x1x8xf32, #tpu.memory_space<vmem>>, vector<1x1x8xf32>
    %31 = vector.shape_cast %30 : vector<1x1x8xf32> to vector<1x8xf32>
    %32 = vector.broadcast %31 : vector<1x8xf32> to vector<64x8xf32>
    %33 = arith.addf %29, %32 : vector<64x8xf32>
    %cst_29 = arith.constant 0.000000e+00 : f32
    %34 = vector.broadcast %cst_29 : f32 to vector<64x8xf32>
    %35 = arith.maximumf %33, %34 : vector<64x8xf32>
    %36 = arith.truncf %35 : vector<64x8xf32> to vector<64x8xbf16>
    %c1_30 = arith.constant 1 : index
    %c0_31 = arith.constant 0 : index
    %c0_32 = arith.constant 0 : index
    %37 = vector.load %arg5[%c1_30, %c0_31, %c0_32] : memref<4x8x64xbf16, #tpu.memory_space<vmem>>, vector<1x8x64xbf16>
    %38 = vector.shape_cast %37 : vector<1x8x64xbf16> to vector<8x64xbf16>
    %cst_33 = arith.constant dense<0.000000e+00> : vector<64x64xf32>
    %39 = tpu.matmul %36, %38, %cst_33 {dimension_numbers = #tpu.dot_dimension_numbers<[1], [0], [0], [1], [0, 0, 1, 1], [], []>} : vector<64x8xbf16>, vector<8x64xbf16>, vector<64x64xf32> -> vector<64x64xf32>
    %40 = arith.addf %20, %39 : vector<64x64xf32>
    %c2 = arith.constant 2 : index
    %c0_34 = arith.constant 0 : index
    %c0_35 = arith.constant 0 : index
    %41 = vector.load %arg1[%c2, %c0_34, %c0_35] : memref<4x64x72xbf16, #tpu.memory_space<vmem>>, vector<1x64x72xbf16>
    %42 = vector.shape_cast %41 : vector<1x64x72xbf16> to vector<64x72xbf16>
    %c2_36 = arith.constant 2 : index
    %c0_37 = arith.constant 0 : index
    %c0_38 = arith.constant 0 : index
    %43 = vector.load %arg2[%c2_36, %c0_37, %c0_38] : memref<4x72x8xbf16, #tpu.memory_space<vmem>>, vector<1x72x8xbf16>
    %44 = vector.shape_cast %43 : vector<1x72x8xbf16> to vector<72x8xbf16>
    %cst_39 = arith.constant dense<0.000000e+00> : vector<64x8xf32>
    %45 = tpu.matmul %42, %44, %cst_39 {dimension_numbers = #tpu.dot_dimension_numbers<[1], [0], [0], [1], [0, 0, 1, 1], [], []>} : vector<64x72xbf16>, vector<72x8xbf16>, vector<64x8xf32> -> vector<64x8xf32>
    %c2_40 = arith.constant 2 : index
    %c0_41 = arith.constant 0 : index
    %c0_42 = arith.constant 0 : index
    %46 = vector.load %arg3[%c2_40, %c0_41, %c0_42] : memref<4x1x8xf32, #tpu.memory_space<vmem>>, vector<1x1x8xf32>
    %47 = vector.shape_cast %46 : vector<1x1x8xf32> to vector<1x8xf32>
    %48 = vector.broadcast %47 : vector<1x8xf32> to vector<64x8xf32>
    %49 = arith.mulf %45, %48 : vector<64x8xf32>
    %c2_43 = arith.constant 2 : index
    %c0_44 = arith.constant 0 : index
    %c0_45 = arith.constant 0 : index
    %50 = vector.load %arg4[%c2_43, %c0_44, %c0_45] : memref<4x1x8xf32, #tpu.memory_space<vmem>>, vector<1x1x8xf32>
    %51 = vector.shape_cast %50 : vector<1x1x8xf32> to vector<1x8xf32>
    %52 = vector.broadcast %51 : vector<1x8xf32> to vector<64x8xf32>
    %53 = arith.addf %49, %52 : vector<64x8xf32>
    %cst_46 = arith.constant 0.000000e+00 : f32
    %54 = vector.broadcast %cst_46 : f32 to vector<64x8xf32>
    %55 = arith.maximumf %53, %54 : vector<64x8xf32>
    %56 = arith.truncf %55 : vector<64x8xf32> to vector<64x8xbf16>
    %c2_47 = arith.constant 2 : index
    %c0_48 = arith.constant 0 : index
    %c0_49 = arith.constant 0 : index
    %57 = vector.load %arg5[%c2_47, %c0_48, %c0_49] : memref<4x8x64xbf16, #tpu.memory_space<vmem>>, vector<1x8x64xbf16>
    %58 = vector.shape_cast %57 : vector<1x8x64xbf16> to vector<8x64xbf16>
    %cst_50 = arith.constant dense<0.000000e+00> : vector<64x64xf32>
    %59 = tpu.matmul %56, %58, %cst_50 {dimension_numbers = #tpu.dot_dimension_numbers<[1], [0], [0], [1], [0, 0, 1, 1], [], []>} : vector<64x8xbf16>, vector<8x64xbf16>, vector<64x64xf32> -> vector<64x64xf32>
    %60 = arith.addf %40, %59 : vector<64x64xf32>
    %c3 = arith.constant 3 : index
    %c0_51 = arith.constant 0 : index
    %c0_52 = arith.constant 0 : index
    %61 = vector.load %arg1[%c3, %c0_51, %c0_52] : memref<4x64x72xbf16, #tpu.memory_space<vmem>>, vector<1x64x72xbf16>
    %62 = vector.shape_cast %61 : vector<1x64x72xbf16> to vector<64x72xbf16>
    %c3_53 = arith.constant 3 : index
    %c0_54 = arith.constant 0 : index
    %c0_55 = arith.constant 0 : index
    %63 = vector.load %arg2[%c3_53, %c0_54, %c0_55] : memref<4x72x8xbf16, #tpu.memory_space<vmem>>, vector<1x72x8xbf16>
    %64 = vector.shape_cast %63 : vector<1x72x8xbf16> to vector<72x8xbf16>
    %cst_56 = arith.constant dense<0.000000e+00> : vector<64x8xf32>
    %65 = tpu.matmul %62, %64, %cst_56 {dimension_numbers = #tpu.dot_dimension_numbers<[1], [0], [0], [1], [0, 0, 1, 1], [], []>} : vector<64x72xbf16>, vector<72x8xbf16>, vector<64x8xf32> -> vector<64x8xf32>
    %c3_57 = arith.constant 3 : index
    %c0_58 = arith.constant 0 : index
    %c0_59 = arith.constant 0 : index
    %66 = vector.load %arg3[%c3_57, %c0_58, %c0_59] : memref<4x1x8xf32, #tpu.memory_space<vmem>>, vector<1x1x8xf32>
    %67 = vector.shape_cast %66 : vector<1x1x8xf32> to vector<1x8xf32>
    %68 = vector.broadcast %67 : vector<1x8xf32> to vector<64x8xf32>
    %69 = arith.mulf %65, %68 : vector<64x8xf32>
    %c3_60 = arith.constant 3 : index
    %c0_61 = arith.constant 0 : index
    %c0_62 = arith.constant 0 : index
    %70 = vector.load %arg4[%c3_60, %c0_61, %c0_62] : memref<4x1x8xf32, #tpu.memory_space<vmem>>, vector<1x1x8xf32>
    %71 = vector.shape_cast %70 : vector<1x1x8xf32> to vector<1x8xf32>
    %72 = vector.broadcast %71 : vector<1x8xf32> to vector<64x8xf32>
    %73 = arith.addf %69, %72 : vector<64x8xf32>
    %cst_63 = arith.constant 0.000000e+00 : f32
    %74 = vector.broadcast %cst_63 : f32 to vector<64x8xf32>
    %75 = arith.maximumf %73, %74 : vector<64x8xf32>
    %76 = arith.truncf %75 : vector<64x8xf32> to vector<64x8xbf16>
    %c3_64 = arith.constant 3 : index
    %c0_65 = arith.constant 0 : index
    %c0_66 = arith.constant 0 : index
    %77 = vector.load %arg5[%c3_64, %c0_65, %c0_66] : memref<4x8x64xbf16, #tpu.memory_space<vmem>>, vector<1x8x64xbf16>
    %78 = vector.shape_cast %77 : vector<1x8x64xbf16> to vector<8x64xbf16>
    %cst_67 = arith.constant dense<0.000000e+00> : vector<64x64xf32>
    %79 = tpu.matmul %76, %78, %cst_67 {dimension_numbers = #tpu.dot_dimension_numbers<[1], [0], [0], [1], [0, 0, 1, 1], [], []>} : vector<64x8xbf16>, vector<8x64xbf16>, vector<64x64xf32> -> vector<64x64xf32>
    %80 = arith.addf %60, %79 : vector<64x64xf32>
    %c0_68 = arith.constant 0 : index
    %c0_69 = arith.constant 0 : index
    %81 = vector.load %arg6[%c0_68, %c0_69] : memref<1x64xf32, #tpu.memory_space<vmem>>, vector<1x64xf32>
    %82 = vector.broadcast %81 : vector<1x64xf32> to vector<64x64xf32>
    %83 = arith.mulf %80, %82 : vector<64x64xf32>
    %c0_70 = arith.constant 0 : index
    %c0_71 = arith.constant 0 : index
    %84 = vector.load %arg7[%c0_70, %c0_71] : memref<1x64xf32, #tpu.memory_space<vmem>>, vector<1x64xf32>
    %85 = vector.broadcast %84 : vector<1x64xf32> to vector<64x64xf32>
    %86 = arith.addf %83, %85 : vector<64x64xf32>
    %c0_72 = arith.constant 0 : index
    %c0_73 = arith.constant 0 : index
    %87 = vector.load %arg8[%c0_72, %c0_73] : memref<64x64xbf16, #tpu.memory_space<vmem>>, vector<64x64xbf16>
    %88 = arith.extf %87 : vector<64x64xbf16> to vector<64x64xf32>
    %89 = arith.addf %86, %88 : vector<64x64xf32>
    %cst_74 = arith.constant 0.000000e+00 : f32
    %90 = vector.broadcast %cst_74 : f32 to vector<64x64xf32>
    %91 = arith.maximumf %89, %90 : vector<64x64xf32>
    %92 = arith.truncf %91 : vector<64x64xf32> to vector<64x64xbf16>
    %c0_75 = arith.constant 0 : index
    %c0_76 = arith.constant 0 : index
    %93 = vector.load %arg9[%c0_75, %c0_76] : memref<64x256xbf16, #tpu.memory_space<vmem>>, vector<64x256xbf16>
    %cst_77 = arith.constant dense<0.000000e+00> : vector<64x256xf32>
    %94 = tpu.matmul %92, %93, %cst_77 {dimension_numbers = #tpu.dot_dimension_numbers<[1], [0], [0], [1], [0, 0, 1, 1], [], []>} : vector<64x64xbf16>, vector<64x256xbf16>, vector<64x256xf32> -> vector<64x256xf32>
    %c0_78 = arith.constant 0 : index
    %c0_79 = arith.constant 0 : index
    %95 = vector.load %arg10[%c0_78, %c0_79] : memref<1x256xf32, #tpu.memory_space<vmem>>, vector<1x256xf32>
    %96 = vector.broadcast %95 : vector<1x256xf32> to vector<64x256xf32>
    %97 = arith.mulf %94, %96 : vector<64x256xf32>
    %c0_80 = arith.constant 0 : index
    %c0_81 = arith.constant 0 : index
    %98 = vector.load %arg11[%c0_80, %c0_81] : memref<1x256xf32, #tpu.memory_space<vmem>>, vector<1x256xf32>
    %99 = vector.broadcast %98 : vector<1x256xf32> to vector<64x256xf32>
    %100 = arith.addf %97, %99 : vector<64x256xf32>
    %c0_82 = arith.constant 0 : index
    %c0_83 = arith.constant 0 : index
    %101 = vector.load %arg12[%c0_82, %c0_83] : memref<1x256xf32, #tpu.memory_space<vmem>>, vector<1x256xf32>
    %cst_84 = arith.constant 0.000000e+00 : f32
    %102 = vector.broadcast %cst_84 : f32 to vector<1x256xf32>
    %103 = arith.cmpf ogt, %101, %102 : vector<1x256xf32>
    %cst_85 = arith.constant 0.000000e+00 : f32
    %104 = vector.broadcast %cst_85 : f32 to vector<64x256xf32>
    %105 = arith.maximumf %100, %104 : vector<64x256xf32>
    %106 = vector.shape_cast %103 : vector<1x256xi1> to vector<1x256xi1>
    %107 = vector.broadcast %106 : vector<1x256xi1> to vector<64x256xi1>
    %108 = arith.select %107, %105, %100 : vector<64x256xi1>, vector<64x256xf32>
    %109 = arith.truncf %108 : vector<64x256xf32> to vector<64x256xbf16>
    %c0_86 = arith.constant 0 : index
    %c0_87 = arith.constant 0 : index
    %110 = vector.load %arg13[%c0_86, %c0_87] : memref<64x256xbf16, #tpu.memory_space<vmem>>, vector<64x256xbf16>
    tpu.vector_store %arg13[%c0_86, %c0_87], %109 {strides = array<i32>} : memref<64x256xbf16, #tpu.memory_space<vmem>>, vector<64x256xbf16>,
    return
  }
  func.func @transform_0(%arg0: i32) -> (i32, i32, i32) {
    %c0_i32 = arith.constant 0 : i32
    %c0_i32_0 = arith.constant 0 : i32
    %c0_i32_1 = arith.constant 0 : i32
    return %c0_i32, %arg0, %c0_i32_0 : i32, i32, i32
  }
  func.func @transform_1(%arg0: i32) -> (i32, i32, i32) {
    %c0_i32 = arith.constant 0 : i32
    %c0_i32_0 = arith.constant 0 : i32
    %c0_i32_1 = arith.constant 0 : i32
    %c0_i32_2 = arith.constant 0 : i32
    return %c0_i32, %c0_i32_0, %c0_i32_1 : i32, i32, i32
  }
  func.func @transform_2(%arg0: i32) -> (i32, i32, i32) {
    %c0_i32 = arith.constant 0 : i32
    %c0_i32_0 = arith.constant 0 : i32
    %c0_i32_1 = arith.constant 0 : i32
    %c0_i32_2 = arith.constant 0 : i32
    return %c0_i32, %c0_i32_0, %c0_i32_1 : i32, i32, i32
  }
  func.func @transform_3(%arg0: i32) -> (i32, i32, i32) {
    %c0_i32 = arith.constant 0 : i32
    %c0_i32_0 = arith.constant 0 : i32
    %c0_i32_1 = arith.constant 0 : i32
    %c0_i32_2 = arith.constant 0 : i32
    return %c0_i32, %c0_i32_0, %c0_i32_1 : i32, i32, i32
  }
  func.func @transform_4(%arg0: i32) -> (i32, i32, i32) {
    %c0_i32 = arith.constant 0 : i32
    %c0_i32_0 = arith.constant 0 : i32
    %c0_i32_1 = arith.constant 0 : i32
    %c0_i32_2 = arith.constant 0 : i32
    return %c0_i32, %c0_i32_0, %c0_i32_1 : i32, i32, i32
  }
  func.func @transform_5(%arg0: i32) -> (i32, i32) {
    %c0_i32 = arith.constant 0 : i32
    %c0_i32_0 = arith.constant 0 : i32
    %c0_i32_1 = arith.constant 0 : i32
    return %c0_i32, %c0_i32_0 : i32, i32
  }
  func.func @transform_6(%arg0: i32) -> (i32, i32) {
    %c0_i32 = arith.constant 0 : i32
    %c0_i32_0 = arith.constant 0 : i32
    %c0_i32_1 = arith.constant 0 : i32
    return %c0_i32, %c0_i32_0 : i32, i32
  }
  func.func @transform_7(%arg0: i32) -> (i32, i32) {
    %c0_i32 = arith.constant 0 : i32
    %c0_i32_0 = arith.constant 0 : i32
    return %arg0, %c0_i32 : i32, i32
  }
  func.func @transform_8(%arg0: i32) -> (i32, i32) {
    %c0_i32 = arith.constant 0 : i32
    %c0_i32_0 = arith.constant 0 : i32
    %c0_i32_1 = arith.constant 0 : i32
    return %c0_i32, %c0_i32_0 : i32, i32
  }
  func.func @transform_9(%arg0: i32) -> (i32, i32) {
    %c0_i32 = arith.constant 0 : i32
    %c0_i32_0 = arith.constant 0 : i32
    %c0_i32_1 = arith.constant 0 : i32
    return %c0_i32, %c0_i32_0 : i32, i32
  }
  func.func @transform_10(%arg0: i32) -> (i32, i32) {
    %c0_i32 = arith.constant 0 : i32
    %c0_i32_0 = arith.constant 0 : i32
    %c0_i32_1 = arith.constant 0 : i32
    return %c0_i32, %c0_i32_0 : i32, i32
  }
  func.func @transform_11(%arg0: i32) -> (i32, i32) {
    %c0_i32 = arith.constant 0 : i32
    %c0_i32_0 = arith.constant 0 : i32
    %c0_i32_1 = arith.constant 0 : i32
    return %c0_i32, %c0_i32_0 : i32, i32
  }
  func.func @transform_12(%arg0: i32) -> (i32, i32) {
    %c0_i32 = arith.constant 0 : i32
    %c0_i32_0 = arith.constant 0 : i32
    return %arg0, %c0_i32 : i32, i32
  }
}

module attributes {stable_mosaic.version = 11 : i64} {
  func.func @_tail_gap_fc_kernel(%arg0: i32, %arg1: memref<4x32x144xbf16, #tpu.memory_space<vmem>>, %arg2: memref<4x144x16xbf16, #tpu.memory_space<vmem>>, %arg3: memref<4x1x16xf32, #tpu.memory_space<vmem>>, %arg4: memref<4x1x16xf32, #tpu.memory_space<vmem>>, %arg5: memref<4x16x128xbf16, #tpu.memory_space<vmem>>, %arg6: memref<1x128xf32, #tpu.memory_space<vmem>>, %arg7: memref<1x128xf32, #tpu.memory_space<vmem>>, %arg8: memref<32x128xbf16, #tpu.memory_space<vmem>>, %arg9: memref<2x32xbf16, #tpu.memory_space<vmem>>, %arg10: memref<128x128xbf16, #tpu.memory_space<vmem>>, %arg11: memref<1x128xf32, #tpu.memory_space<vmem>>, %arg12: memref<2x128xf32, #tpu.memory_space<vmem>>) attributes {dimension_semantics = [#tpu.dimension_semantics<arbitrary>], iteration_bounds = array<i64: 1>, scalar_prefetch = 0 : i64, scratch_operands = 0 : i64, tpu.core_type = #tpu.core_type<tc>, window_params = [{pipeline_mode = #tpu.pipeline_mode<synchronous>, transform_indices = @transform_0, window_bounds = array<i64: 4, 32, 144>}, {pipeline_mode = #tpu.pipeline_mode<synchronous>, transform_indices = @transform_1, window_bounds = array<i64: 4, 144, 16>}, {pipeline_mode = #tpu.pipeline_mode<synchronous>, transform_indices = @transform_2, window_bounds = array<i64: 4, 1, 16>}, {pipeline_mode = #tpu.pipeline_mode<synchronous>, transform_indices = @transform_3, window_bounds = array<i64: 4, 1, 16>}, {pipeline_mode = #tpu.pipeline_mode<synchronous>, transform_indices = @transform_4, window_bounds = array<i64: 4, 16, 128>}, {pipeline_mode = #tpu.pipeline_mode<synchronous>, transform_indices = @transform_5, window_bounds = array<i64: 1, 128>}, {pipeline_mode = #tpu.pipeline_mode<synchronous>, transform_indices = @transform_6, window_bounds = array<i64: 1, 128>}, {pipeline_mode = #tpu.pipeline_mode<synchronous>, transform_indices = @transform_7, window_bounds = array<i64: 32, 128>}, {pipeline_mode = #tpu.pipeline_mode<synchronous>, transform_indices = @transform_8, window_bounds = array<i64: 2, 32>}, {pipeline_mode = #tpu.pipeline_mode<synchronous>, transform_indices = @transform_9, window_bounds = array<i64: 128, 128>}, {pipeline_mode = #tpu.pipeline_mode<synchronous>, transform_indices = @transform_10, window_bounds = array<i64: 1, 128>}, {pipeline_mode = #tpu.pipeline_mode<synchronous>, transform_indices = @transform_11, window_bounds = array<i64: 2, 128>}]} {
    %cst = arith.constant 0.000000e+00 : f32
    %0 = vector.broadcast %cst : f32 to vector<32x128xf32>
    %c0 = arith.constant 0 : index
    %c0_0 = arith.constant 0 : index
    %c0_1 = arith.constant 0 : index
    %1 = vector.load %arg1[%c0, %c0_0, %c0_1] : memref<4x32x144xbf16, #tpu.memory_space<vmem>>, vector<1x32x144xbf16>
    %2 = vector.shape_cast %1 : vector<1x32x144xbf16> to vector<32x144xbf16>
    %c0_2 = arith.constant 0 : index
    %c0_3 = arith.constant 0 : index
    %c0_4 = arith.constant 0 : index
    %3 = vector.load %arg2[%c0_2, %c0_3, %c0_4] : memref<4x144x16xbf16, #tpu.memory_space<vmem>>, vector<1x144x16xbf16>
    %4 = vector.shape_cast %3 : vector<1x144x16xbf16> to vector<144x16xbf16>
    %cst_5 = arith.constant dense<0.000000e+00> : vector<32x16xf32>
    %5 = tpu.matmul %2, %4, %cst_5 {dimension_numbers = #tpu.dot_dimension_numbers<[1], [0], [0], [1], [0, 0, 1, 1], [], []>} : vector<32x144xbf16>, vector<144x16xbf16>, vector<32x16xf32> -> vector<32x16xf32>
    %c0_6 = arith.constant 0 : index
    %c0_7 = arith.constant 0 : index
    %c0_8 = arith.constant 0 : index
    %6 = vector.load %arg3[%c0_6, %c0_7, %c0_8] : memref<4x1x16xf32, #tpu.memory_space<vmem>>, vector<1x1x16xf32>
    %7 = vector.shape_cast %6 : vector<1x1x16xf32> to vector<1x16xf32>
    %8 = vector.broadcast %7 : vector<1x16xf32> to vector<32x16xf32>
    %9 = arith.mulf %5, %8 : vector<32x16xf32>
    %c0_9 = arith.constant 0 : index
    %c0_10 = arith.constant 0 : index
    %c0_11 = arith.constant 0 : index
    %10 = vector.load %arg4[%c0_9, %c0_10, %c0_11] : memref<4x1x16xf32, #tpu.memory_space<vmem>>, vector<1x1x16xf32>
    %11 = vector.shape_cast %10 : vector<1x1x16xf32> to vector<1x16xf32>
    %12 = vector.broadcast %11 : vector<1x16xf32> to vector<32x16xf32>
    %13 = arith.addf %9, %12 : vector<32x16xf32>
    %cst_12 = arith.constant 0.000000e+00 : f32
    %14 = vector.broadcast %cst_12 : f32 to vector<32x16xf32>
    %15 = arith.maximumf %13, %14 : vector<32x16xf32>
    %16 = arith.truncf %15 : vector<32x16xf32> to vector<32x16xbf16>
    %c0_13 = arith.constant 0 : index
    %c0_14 = arith.constant 0 : index
    %c0_15 = arith.constant 0 : index
    %17 = vector.load %arg5[%c0_13, %c0_14, %c0_15] : memref<4x16x128xbf16, #tpu.memory_space<vmem>>, vector<1x16x128xbf16>
    %18 = vector.shape_cast %17 : vector<1x16x128xbf16> to vector<16x128xbf16>
    %cst_16 = arith.constant dense<0.000000e+00> : vector<32x128xf32>
    %19 = tpu.matmul %16, %18, %cst_16 {dimension_numbers = #tpu.dot_dimension_numbers<[1], [0], [0], [1], [0, 0, 1, 1], [], []>} : vector<32x16xbf16>, vector<16x128xbf16>, vector<32x128xf32> -> vector<32x128xf32>
    %20 = arith.addf %0, %19 : vector<32x128xf32>
    %c1 = arith.constant 1 : index
    %c0_17 = arith.constant 0 : index
    %c0_18 = arith.constant 0 : index
    %21 = vector.load %arg1[%c1, %c0_17, %c0_18] : memref<4x32x144xbf16, #tpu.memory_space<vmem>>, vector<1x32x144xbf16>
    %22 = vector.shape_cast %21 : vector<1x32x144xbf16> to vector<32x144xbf16>
    %c1_19 = arith.constant 1 : index
    %c0_20 = arith.constant 0 : index
    %c0_21 = arith.constant 0 : index
    %23 = vector.load %arg2[%c1_19, %c0_20, %c0_21] : memref<4x144x16xbf16, #tpu.memory_space<vmem>>, vector<1x144x16xbf16>
    %24 = vector.shape_cast %23 : vector<1x144x16xbf16> to vector<144x16xbf16>
    %cst_22 = arith.constant dense<0.000000e+00> : vector<32x16xf32>
    %25 = tpu.matmul %22, %24, %cst_22 {dimension_numbers = #tpu.dot_dimension_numbers<[1], [0], [0], [1], [0, 0, 1, 1], [], []>} : vector<32x144xbf16>, vector<144x16xbf16>, vector<32x16xf32> -> vector<32x16xf32>
    %c1_23 = arith.constant 1 : index
    %c0_24 = arith.constant 0 : index
    %c0_25 = arith.constant 0 : index
    %26 = vector.load %arg3[%c1_23, %c0_24, %c0_25] : memref<4x1x16xf32, #tpu.memory_space<vmem>>, vector<1x1x16xf32>
    %27 = vector.shape_cast %26 : vector<1x1x16xf32> to vector<1x16xf32>
    %28 = vector.broadcast %27 : vector<1x16xf32> to vector<32x16xf32>
    %29 = arith.mulf %25, %28 : vector<32x16xf32>
    %c1_26 = arith.constant 1 : index
    %c0_27 = arith.constant 0 : index
    %c0_28 = arith.constant 0 : index
    %30 = vector.load %arg4[%c1_26, %c0_27, %c0_28] : memref<4x1x16xf32, #tpu.memory_space<vmem>>, vector<1x1x16xf32>
    %31 = vector.shape_cast %30 : vector<1x1x16xf32> to vector<1x16xf32>
    %32 = vector.broadcast %31 : vector<1x16xf32> to vector<32x16xf32>
    %33 = arith.addf %29, %32 : vector<32x16xf32>
    %cst_29 = arith.constant 0.000000e+00 : f32
    %34 = vector.broadcast %cst_29 : f32 to vector<32x16xf32>
    %35 = arith.maximumf %33, %34 : vector<32x16xf32>
    %36 = arith.truncf %35 : vector<32x16xf32> to vector<32x16xbf16>
    %c1_30 = arith.constant 1 : index
    %c0_31 = arith.constant 0 : index
    %c0_32 = arith.constant 0 : index
    %37 = vector.load %arg5[%c1_30, %c0_31, %c0_32] : memref<4x16x128xbf16, #tpu.memory_space<vmem>>, vector<1x16x128xbf16>
    %38 = vector.shape_cast %37 : vector<1x16x128xbf16> to vector<16x128xbf16>
    %cst_33 = arith.constant dense<0.000000e+00> : vector<32x128xf32>
    %39 = tpu.matmul %36, %38, %cst_33 {dimension_numbers = #tpu.dot_dimension_numbers<[1], [0], [0], [1], [0, 0, 1, 1], [], []>} : vector<32x16xbf16>, vector<16x128xbf16>, vector<32x128xf32> -> vector<32x128xf32>
    %40 = arith.addf %20, %39 : vector<32x128xf32>
    %c2 = arith.constant 2 : index
    %c0_34 = arith.constant 0 : index
    %c0_35 = arith.constant 0 : index
    %41 = vector.load %arg1[%c2, %c0_34, %c0_35] : memref<4x32x144xbf16, #tpu.memory_space<vmem>>, vector<1x32x144xbf16>
    %42 = vector.shape_cast %41 : vector<1x32x144xbf16> to vector<32x144xbf16>
    %c2_36 = arith.constant 2 : index
    %c0_37 = arith.constant 0 : index
    %c0_38 = arith.constant 0 : index
    %43 = vector.load %arg2[%c2_36, %c0_37, %c0_38] : memref<4x144x16xbf16, #tpu.memory_space<vmem>>, vector<1x144x16xbf16>
    %44 = vector.shape_cast %43 : vector<1x144x16xbf16> to vector<144x16xbf16>
    %cst_39 = arith.constant dense<0.000000e+00> : vector<32x16xf32>
    %45 = tpu.matmul %42, %44, %cst_39 {dimension_numbers = #tpu.dot_dimension_numbers<[1], [0], [0], [1], [0, 0, 1, 1], [], []>} : vector<32x144xbf16>, vector<144x16xbf16>, vector<32x16xf32> -> vector<32x16xf32>
    %c2_40 = arith.constant 2 : index
    %c0_41 = arith.constant 0 : index
    %c0_42 = arith.constant 0 : index
    %46 = vector.load %arg3[%c2_40, %c0_41, %c0_42] : memref<4x1x16xf32, #tpu.memory_space<vmem>>, vector<1x1x16xf32>
    %47 = vector.shape_cast %46 : vector<1x1x16xf32> to vector<1x16xf32>
    %48 = vector.broadcast %47 : vector<1x16xf32> to vector<32x16xf32>
    %49 = arith.mulf %45, %48 : vector<32x16xf32>
    %c2_43 = arith.constant 2 : index
    %c0_44 = arith.constant 0 : index
    %c0_45 = arith.constant 0 : index
    %50 = vector.load %arg4[%c2_43, %c0_44, %c0_45] : memref<4x1x16xf32, #tpu.memory_space<vmem>>, vector<1x1x16xf32>
    %51 = vector.shape_cast %50 : vector<1x1x16xf32> to vector<1x16xf32>
    %52 = vector.broadcast %51 : vector<1x16xf32> to vector<32x16xf32>
    %53 = arith.addf %49, %52 : vector<32x16xf32>
    %cst_46 = arith.constant 0.000000e+00 : f32
    %54 = vector.broadcast %cst_46 : f32 to vector<32x16xf32>
    %55 = arith.maximumf %53, %54 : vector<32x16xf32>
    %56 = arith.truncf %55 : vector<32x16xf32> to vector<32x16xbf16>
    %c2_47 = arith.constant 2 : index
    %c0_48 = arith.constant 0 : index
    %c0_49 = arith.constant 0 : index
    %57 = vector.load %arg5[%c2_47, %c0_48, %c0_49] : memref<4x16x128xbf16, #tpu.memory_space<vmem>>, vector<1x16x128xbf16>
    %58 = vector.shape_cast %57 : vector<1x16x128xbf16> to vector<16x128xbf16>
    %cst_50 = arith.constant dense<0.000000e+00> : vector<32x128xf32>
    %59 = tpu.matmul %56, %58, %cst_50 {dimension_numbers = #tpu.dot_dimension_numbers<[1], [0], [0], [1], [0, 0, 1, 1], [], []>} : vector<32x16xbf16>, vector<16x128xbf16>, vector<32x128xf32> -> vector<32x128xf32>
    %60 = arith.addf %40, %59 : vector<32x128xf32>
    %c3 = arith.constant 3 : index
    %c0_51 = arith.constant 0 : index
    %c0_52 = arith.constant 0 : index
    %61 = vector.load %arg1[%c3, %c0_51, %c0_52] : memref<4x32x144xbf16, #tpu.memory_space<vmem>>, vector<1x32x144xbf16>
    %62 = vector.shape_cast %61 : vector<1x32x144xbf16> to vector<32x144xbf16>
    %c3_53 = arith.constant 3 : index
    %c0_54 = arith.constant 0 : index
    %c0_55 = arith.constant 0 : index
    %63 = vector.load %arg2[%c3_53, %c0_54, %c0_55] : memref<4x144x16xbf16, #tpu.memory_space<vmem>>, vector<1x144x16xbf16>
    %64 = vector.shape_cast %63 : vector<1x144x16xbf16> to vector<144x16xbf16>
    %cst_56 = arith.constant dense<0.000000e+00> : vector<32x16xf32>
    %65 = tpu.matmul %62, %64, %cst_56 {dimension_numbers = #tpu.dot_dimension_numbers<[1], [0], [0], [1], [0, 0, 1, 1], [], []>} : vector<32x144xbf16>, vector<144x16xbf16>, vector<32x16xf32> -> vector<32x16xf32>
    %c3_57 = arith.constant 3 : index
    %c0_58 = arith.constant 0 : index
    %c0_59 = arith.constant 0 : index
    %66 = vector.load %arg3[%c3_57, %c0_58, %c0_59] : memref<4x1x16xf32, #tpu.memory_space<vmem>>, vector<1x1x16xf32>
    %67 = vector.shape_cast %66 : vector<1x1x16xf32> to vector<1x16xf32>
    %68 = vector.broadcast %67 : vector<1x16xf32> to vector<32x16xf32>
    %69 = arith.mulf %65, %68 : vector<32x16xf32>
    %c3_60 = arith.constant 3 : index
    %c0_61 = arith.constant 0 : index
    %c0_62 = arith.constant 0 : index
    %70 = vector.load %arg4[%c3_60, %c0_61, %c0_62] : memref<4x1x16xf32, #tpu.memory_space<vmem>>, vector<1x1x16xf32>
    %71 = vector.shape_cast %70 : vector<1x1x16xf32> to vector<1x16xf32>
    %72 = vector.broadcast %71 : vector<1x16xf32> to vector<32x16xf32>
    %73 = arith.addf %69, %72 : vector<32x16xf32>
    %cst_63 = arith.constant 0.000000e+00 : f32
    %74 = vector.broadcast %cst_63 : f32 to vector<32x16xf32>
    %75 = arith.maximumf %73, %74 : vector<32x16xf32>
    %76 = arith.truncf %75 : vector<32x16xf32> to vector<32x16xbf16>
    %c3_64 = arith.constant 3 : index
    %c0_65 = arith.constant 0 : index
    %c0_66 = arith.constant 0 : index
    %77 = vector.load %arg5[%c3_64, %c0_65, %c0_66] : memref<4x16x128xbf16, #tpu.memory_space<vmem>>, vector<1x16x128xbf16>
    %78 = vector.shape_cast %77 : vector<1x16x128xbf16> to vector<16x128xbf16>
    %cst_67 = arith.constant dense<0.000000e+00> : vector<32x128xf32>
    %79 = tpu.matmul %76, %78, %cst_67 {dimension_numbers = #tpu.dot_dimension_numbers<[1], [0], [0], [1], [0, 0, 1, 1], [], []>} : vector<32x16xbf16>, vector<16x128xbf16>, vector<32x128xf32> -> vector<32x128xf32>
    %80 = arith.addf %60, %79 : vector<32x128xf32>
    %c0_68 = arith.constant 0 : index
    %c0_69 = arith.constant 0 : index
    %81 = vector.load %arg6[%c0_68, %c0_69] : memref<1x128xf32, #tpu.memory_space<vmem>>, vector<1x128xf32>
    %82 = vector.broadcast %81 : vector<1x128xf32> to vector<32x128xf32>
    %83 = arith.mulf %80, %82 : vector<32x128xf32>
    %c0_70 = arith.constant 0 : index
    %c0_71 = arith.constant 0 : index
    %84 = vector.load %arg7[%c0_70, %c0_71] : memref<1x128xf32, #tpu.memory_space<vmem>>, vector<1x128xf32>
    %85 = vector.broadcast %84 : vector<1x128xf32> to vector<32x128xf32>
    %86 = arith.addf %83, %85 : vector<32x128xf32>
    %c0_72 = arith.constant 0 : index
    %c0_73 = arith.constant 0 : index
    %87 = vector.load %arg8[%c0_72, %c0_73] : memref<32x128xbf16, #tpu.memory_space<vmem>>, vector<32x128xbf16>
    %88 = arith.extf %87 : vector<32x128xbf16> to vector<32x128xf32>
    %89 = arith.addf %86, %88 : vector<32x128xf32>
    %cst_74 = arith.constant 0.000000e+00 : f32
    %90 = vector.broadcast %cst_74 : f32 to vector<32x128xf32>
    %91 = arith.maximumf %89, %90 : vector<32x128xf32>
    %c0_75 = arith.constant 0 : index
    %c0_76 = arith.constant 0 : index
    %92 = vector.load %arg9[%c0_75, %c0_76] : memref<2x32xbf16, #tpu.memory_space<vmem>>, vector<2x32xbf16>
    %93 = arith.truncf %91 : vector<32x128xf32> to vector<32x128xbf16>
    %cst_77 = arith.constant dense<0.000000e+00> : vector<2x128xf32>
    %94 = tpu.matmul %92, %93, %cst_77 {dimension_numbers = #tpu.dot_dimension_numbers<[1], [0], [0], [1], [0, 0, 1, 1], [], []>} : vector<2x32xbf16>, vector<32x128xbf16>, vector<2x128xf32> -> vector<2x128xf32>
    %95 = arith.truncf %94 : vector<2x128xf32> to vector<2x128xbf16>
    %c0_78 = arith.constant 0 : index
    %c0_79 = arith.constant 0 : index
    %96 = vector.load %arg10[%c0_78, %c0_79] : memref<128x128xbf16, #tpu.memory_space<vmem>>, vector<128x128xbf16>
    %cst_80 = arith.constant dense<0.000000e+00> : vector<2x128xf32>
    %97 = tpu.matmul %95, %96, %cst_80 {dimension_numbers = #tpu.dot_dimension_numbers<[1], [0], [0], [1], [0, 0, 1, 1], [], []>} : vector<2x128xbf16>, vector<128x128xbf16>, vector<2x128xf32> -> vector<2x128xf32>
    %c0_81 = arith.constant 0 : index
    %c0_82 = arith.constant 0 : index
    %98 = vector.load %arg11[%c0_81, %c0_82] : memref<1x128xf32, #tpu.memory_space<vmem>>, vector<1x128xf32>
    %99 = vector.broadcast %98 : vector<1x128xf32> to vector<2x128xf32>
    %100 = arith.addf %97, %99 : vector<2x128xf32>
    %c0_83 = arith.constant 0 : index
    %c0_84 = arith.constant 0 : index
    %101 = vector.load %arg12[%c0_83, %c0_84] : memref<2x128xf32, #tpu.memory_space<vmem>>, vector<2x128xf32>
    tpu.vector_store %arg12[%c0_83, %c0_84], %100 {strides = array<i32>} : memref<2x128xf32, #tpu.memory_space<vmem>>, vector<2x128xf32>,
    return
  }
  func.func @transform_0(%arg0: i32) -> (i32, i32, i32) {
    %c0_i32 = arith.constant 0 : i32
    %c0_i32_0 = arith.constant 0 : i32
    %c0_i32_1 = arith.constant 0 : i32
    %c0_i32_2 = arith.constant 0 : i32
    return %c0_i32, %c0_i32_0, %c0_i32_1 : i32, i32, i32
  }
  func.func @transform_1(%arg0: i32) -> (i32, i32, i32) {
    %c0_i32 = arith.constant 0 : i32
    %c0_i32_0 = arith.constant 0 : i32
    %c0_i32_1 = arith.constant 0 : i32
    %c0_i32_2 = arith.constant 0 : i32
    return %c0_i32, %c0_i32_0, %c0_i32_1 : i32, i32, i32
  }
  func.func @transform_2(%arg0: i32) -> (i32, i32, i32) {
    %c0_i32 = arith.constant 0 : i32
    %c0_i32_0 = arith.constant 0 : i32
    %c0_i32_1 = arith.constant 0 : i32
    %c0_i32_2 = arith.constant 0 : i32
    return %c0_i32, %c0_i32_0, %c0_i32_1 : i32, i32, i32
  }
  func.func @transform_3(%arg0: i32) -> (i32, i32, i32) {
    %c0_i32 = arith.constant 0 : i32
    %c0_i32_0 = arith.constant 0 : i32
    %c0_i32_1 = arith.constant 0 : i32
    %c0_i32_2 = arith.constant 0 : i32
    return %c0_i32, %c0_i32_0, %c0_i32_1 : i32, i32, i32
  }
  func.func @transform_4(%arg0: i32) -> (i32, i32, i32) {
    %c0_i32 = arith.constant 0 : i32
    %c0_i32_0 = arith.constant 0 : i32
    %c0_i32_1 = arith.constant 0 : i32
    %c0_i32_2 = arith.constant 0 : i32
    return %c0_i32, %c0_i32_0, %c0_i32_1 : i32, i32, i32
  }
  func.func @transform_5(%arg0: i32) -> (i32, i32) {
    %c0_i32 = arith.constant 0 : i32
    %c0_i32_0 = arith.constant 0 : i32
    %c0_i32_1 = arith.constant 0 : i32
    return %c0_i32, %c0_i32_0 : i32, i32
  }
  func.func @transform_6(%arg0: i32) -> (i32, i32) {
    %c0_i32 = arith.constant 0 : i32
    %c0_i32_0 = arith.constant 0 : i32
    %c0_i32_1 = arith.constant 0 : i32
    return %c0_i32, %c0_i32_0 : i32, i32
  }
  func.func @transform_7(%arg0: i32) -> (i32, i32) {
    %c0_i32 = arith.constant 0 : i32
    %c0_i32_0 = arith.constant 0 : i32
    %c0_i32_1 = arith.constant 0 : i32
    return %c0_i32, %c0_i32_0 : i32, i32
  }
  func.func @transform_8(%arg0: i32) -> (i32, i32) {
    %c0_i32 = arith.constant 0 : i32
    %c0_i32_0 = arith.constant 0 : i32
    %c0_i32_1 = arith.constant 0 : i32
    return %c0_i32, %c0_i32_0 : i32, i32
  }
  func.func @transform_9(%arg0: i32) -> (i32, i32) {
    %c0_i32 = arith.constant 0 : i32
    %c0_i32_0 = arith.constant 0 : i32
    %c0_i32_1 = arith.constant 0 : i32
    return %c0_i32, %c0_i32_0 : i32, i32
  }
  func.func @transform_10(%arg0: i32) -> (i32, i32) {
    %c0_i32 = arith.constant 0 : i32
    %c0_i32_0 = arith.constant 0 : i32
    %c0_i32_1 = arith.constant 0 : i32
    return %c0_i32, %c0_i32_0 : i32, i32
  }
  func.func @transform_11(%arg0: i32) -> (i32, i32) {
    %c0_i32 = arith.constant 0 : i32
    %c0_i32_0 = arith.constant 0 : i32
    %c0_i32_1 = arith.constant 0 : i32
    return %c0_i32, %c0_i32_0 : i32, i32
  }
}

</mosaic_0001>

<llo_original>
// kernel: resfacenext_forward.3
$region0: #{resfacenext_forward.3}
  #allocation0 [shape = 'u32[]', space=smem, size = 0x4, offset = 0x4, fixed_abs, tag = 'smem constant byte address 0x4 - core index']
  #allocation1 [shape = 'u32[72,128]{1,0:T(1,128)}', space=vmem, size = 0x9000, scoped, tag = 'internal scratch']
  %s0 = inlined_call_operand.vmem [shape: bf16[512,32], index: 0, kind: input, shape index: {}]
  %s1 = inlined_call_operand.vmem [shape: bf16[32,16], index: 1, kind: input, shape index: {}]
  %s2 = inlined_call_operand.hbm [shape: f32[1,16], index: 2, kind: input, shape index: {}]
  %s3 = inlined_call_operand.hbm [shape: f32[1,16], index: 3, kind: input, shape index: {}]
  %s4 = inlined_call_operand.hbm [shape: bf16[16,128], index: 4, kind: input, shape index: {}]
  %s5 = inlined_call_operand.hbm [shape: f32[1,128], index: 5, kind: input, shape index: {}]
  %s6 = inlined_call_operand.vmem [shape: f32[1,128], index: 6, kind: input, shape index: {}]
  %s7 = inlined_call_operand.hbm [shape: f32[1,128], index: 7, kind: input, shape index: {}]
  %s8 = inlined_call_operand.vmem [shape: bf16[512,128], index: 8, kind: output, shape index: {}]
  %s9 = sld [smem:[#allocation0]]
  $region85: #{resfacenext_forward.3} parent=0
    _
  %s11 = ssub.s32 1, %s9
  %s12 = scalar_select 0, %s11, %s9
  $region1: #{resfacenext_forward.3} parent=0
    #allocation2 [shape = 'u8[512]{0}', space=vmem, size = 0x400, scoped, tag = 'input window, operand 2, single buffered']
    #allocation3 [shape = 's32[2]{0}', space=sflag, size = 0x8, scoped, tag = 'scoped memory for resfacenext_forward.3']
    #allocation4 [shape = 'u8[512]{0}', space=vmem, size = 0x400, scoped, tag = 'input window, operand 3, single buffered']
    #allocation5 [shape = 's32[1]{0}', space=sflag, size = 0x4, scoped, tag = 'scoped memory for resfacenext_forward.3']
    #allocation6 [shape = 'u8[4096]{0}', space=vmem, size = 0x1000, scoped, tag = 'input window, operand 4, single buffered']
    #allocation7 [shape = 'u8[512]{0}', space=vmem, size = 0x400, scoped, tag = 'input window, operand 5, single buffered']
    #allocation8 [shape = 's32[1]{0}', space=sflag, size = 0x4, scoped, tag = 'scoped memory for resfacenext_forward.3']
    #allocation9 [shape = 'u8[512]{0}', space=vmem, size = 0x400, scoped, tag = 'input window, operand 7, single buffered']
    %13 = vsyncpa [#allocation3], 0
    %14 = vsyncpa [#allocation5], 0
    %15 = vsyncpa [#allocation8], 0
    loop: start=0, step=1, limit=4
    $region2: #{resfacenext_forward.3} parent=1 // loop_pre_header
      _
    $region3: #{resfacenext_forward.3} parent=1 // loop_header
      %s17 = sphi 0, %s21
      %p18 = scmp.ge.s32.totalorder %s17, 4
      %s27 = sphi 0, %s29
      %s30 = sphi 0, %s27
      %s31 = sphi 0, %s30
      %s47 = sphi 0, %s31
      %s51 = sphi 0, %s51
      %s53 = sphi 0, %s51
      %s54 = sphi 0, %s53
      %s68 = sphi 0, %s54
      %s72 = sphi 0, %s72
      %s74 = sphi 0, %s72
      %s75 = sphi 0, %s74
      %s89 = sphi 0, %s75
      %s93 = sphi 0, %s93
      %s95 = sphi 0, %s93
      %s96 = sphi 0, %s95
      %s110 = sphi 0, %s96
      %s114 = sphi 0, %s114
      %s116 = sphi 0, %s114
      %s117 = sphi 0, %s116
      %s131 = sphi 0, %s117
      %s135 = sphi 0, %s135
      %s137 = sphi 0, %s135
      %s138 = sphi 0, %s137
      %s152 = sphi 0, %s138
      %s156 = sphi 0, %s156
      %s158 = sphi 0, %s156
      %s159 = sphi 0, %s158
      %s173 = sphi 0, %s159
      %s177 = sphi 0, %s177
      %s179 = sphi 0, %s177
      %s180 = sphi 0, %s179
      %s194 = sphi 0, %s180
      %s200 = sphi 0, %s202
      %s203 = sphi 0, %s200
      %s204 = sphi 0, %s203
      %s220 = sphi 0, %s204
    $region4: #{resfacenext_forward.3} parent=1 // loop_header_branch
      %20 = sbr.rel (%p18) target = $region8
    $region5: #{resfacenext_forward.3} parent=1 // loop_body
      %s22 = ssub.s32 %s17, 1
      %s23 = ssub.s32 %s17, 2
      %s24 = sadd.s32 %s17, 1
      %s25 = ssub.s32 %s17, %s24
      %p26 = scmp.eq.s32.totalorder %s25, 0
      %s28 = sadd.s32 %s27, 1
      %s29 = scalar_select %p26, %s27, %s28
      %p32 = pneg %p26
      %p33 = scmp.eq.s32.totalorder %s17, 1
      %p34 = por %p32, %p33
      %p35 = scmp.ne.s32.totalorder %s27, %s30
      %p36 = scmp.eq.s32.totalorder %s17, 0
      %p37 = por %p35, %p36
      %p38 = scmp.ne.s32.totalorder %s27, %s30
      %p39 = scmp.eq.s32.totalorder %s22, 1
      %p40 = por %p38, %p39
      %p41 = scmp.ne.s32.totalorder %s30, %s31
      %p42 = scmp.eq.s32.totalorder %s22, 0
      %p43 = por %p41, %p42
      %p44 = scmp.ne.s32.totalorder %s30, %s31
      %p45 = scmp.eq.s32.totalorder %s23, 1
      %p46 = por %p44, %p45
      %p48 = scmp.ne.s32.totalorder %s31, %s47
      %p49 = scmp.eq.s32.totalorder %s23, 0
      %p50 = por %p48, %p49
      %s52 = sadd.s32 %s51, 1
      %p55 = scmp.eq.s32.totalorder %s17, 1
      %p56 = scmp.ne.s32.totalorder %s51, %s53
      %p57 = scmp.eq.s32.totalorder %s17, 0
      %p58 = por %p56, %p57
      %p59 = scmp.ne.s32.totalorder %s51, %s53
      %p60 = scmp.eq.s32.totalorder %s22, 1
      %p61 = por %p59, %p60
      %p62 = scmp.ne.s32.totalorder %s53, %s54
      %p63 = scmp.eq.s32.totalorder %s22, 0
      %p64 = por %p62, %p63
      %p65 = scmp.ne.s32.totalorder %s53, %s54
      %p66 = scmp.eq.s32.totalorder %s23, 1
      %p67 = por %p65, %p66
      %p69 = scmp.ne.s32.totalorder %s54, %s68
      %p70 = scmp.eq.s32.totalorder %s23, 0
      %p71 = por %p69, %p70
      %s73 = sadd.s32 %s72, 1
      %p76 = scmp.eq.s32.totalorder %s17, 1
      %p77 = scmp.ne.s32.totalorder %s72, %s74
      %p78 = scmp.eq.s32.totalorder %s17, 0
      %p79 = por %p77, %p78
      %p80 = scmp.ne.s32.totalorder %s72, %s74
      %p81 = scmp.eq.s32.totalorder %s22, 1
      %p82 = por %p80, %p81
      %p83 = scmp.ne.s32.totalorder %s74, %s75
      %p84 = scmp.eq.s32.totalorder %s22, 0
      %p85 = por %p83, %p84
      %p86 = scmp.ne.s32.totalorder %s74, %s75
      %p87 = scmp.eq.s32.totalorder %s23, 1
      %p88 = por %p86, %p87
      %p90 = scmp.ne.s32.totalorder %s75, %s89
      %p91 = scmp.eq.s32.totalorder %s23, 0
      %p92 = por %p90, %p91
      %s94 = sadd.s32 %s93, 1
      %p97 = scmp.eq.s32.totalorder %s17, 1
      %p98 = scmp.ne.s32.totalorder %s93, %s95
      %p99 = scmp.eq.s32.totalorder %s17, 0
      %p100 = por %p98, %p99
      %p101 = scmp.ne.s32.totalorder %s93, %s95
      %p102 = scmp.eq.s32.totalorder %s22, 1
      %p103 = por %p101, %p102
      %p104 = scmp.ne.s32.totalorder %s95, %s96
      %p105 = scmp.eq.s32.totalorder %s22, 0
      %p106 = por %p104, %p105
      %p107 = scmp.ne.s32.totalorder %s95, %s96
      %p108 = scmp.eq.s32.totalorder %s23, 1
      %p109 = por %p107, %p108
      %p111 = scmp.ne.s32.totalorder %s96, %s110
      %p112 = scmp.eq.s32.totalorder %s23, 0
      %p113 = por %p111, %p112
      %s115 = sadd.s32 %s114, 1
      %p118 = scmp.eq.s32.totalorder %s17, 1
      %p119 = scmp.ne.s32.totalorder %s114, %s116
      %p120 = scmp.eq.s32.totalorder %s17, 0
      %p121 = por %p119, %p120
      %p122 = scmp.ne.s32.totalorder %s114, %s116
      %p123 = scmp.eq.s32.totalorder %s22, 1
      %p124 = por %p122, %p123
      %p125 = scmp.ne.s32.totalorder %s116, %s117
      %p126 = scmp.eq.s32.totalorder %s22, 0
      %p127 = por %p125, %p126
      %p128 = scmp.ne.s32.totalorder %s116, %s117
      %p129 = scmp.eq.s32.totalorder %s23, 1
      %p130 = por %p128, %p129
      %p132 = scmp.ne.s32.totalorder %s117, %s131
      %p133 = scmp.eq.s32.totalorder %s23, 0
      %p134 = por %p132, %p133
      %s136 = sadd.s32 %s135, 1
      %p139 = scmp.eq.s32.totalorder %s17, 1
      %p140 = scmp.ne.s32.totalorder %s135, %s137
      %p141 = scmp.eq.s32.totalorder %s17, 0
      %p142 = por %p140, %p141
      %p143 = scmp.ne.s32.totalorder %s135, %s137
      %p144 = scmp.eq.s32.totalorder %s22, 1
      %p145 = por %p143, %p144
      %p146 = scmp.ne.s32.totalorder %s137, %s138
      %p147 = scmp.eq.s32.totalorder %s22, 0
      %p148 = por %p146, %p147
      %p149 = scmp.ne.s32.totalorder %s137, %s138
      %p150 = scmp.eq.s32.totalorder %s23, 1
      %p151 = por %p149, %p150
      %p153 = scmp.ne.s32.totalorder %s138, %s152
      %p154 = scmp.eq.s32.totalorder %s23, 0
      %p155 = por %p153, %p154
      %s157 = sadd.s32 %s156, 1
      %p160 = scmp.eq.s32.totalorder %s17, 1
      %p161 = scmp.ne.s32.totalorder %s156, %s158
      %p162 = scmp.eq.s32.totalorder %s17, 0
      %p163 = por %p161, %p162
      %p164 = scmp.ne.s32.totalorder %s156, %s158
      %p165 = scmp.eq.s32.totalorder %s22, 1
      %p166 = por %p164, %p165
      %p167 = scmp.ne.s32.totalorder %s158, %s159
      %p168 = scmp.eq.s32.totalorder %s22, 0
      %p169 = por %p167, %p168
      %p170 = scmp.ne.s32.totalorder %s158, %s159
      %p171 = scmp.eq.s32.totalorder %s23, 1
      %p172 = por %p170, %p171
      %p174 = scmp.ne.s32.totalorder %s159, %s173
      %p175 = scmp.eq.s32.totalorder %s23, 0
      %p176 = por %p174, %p175
      %s178 = sadd.s32 %s177, 1
      %p181 = scmp.eq.s32.totalorder %s17, 1
      %p182 = scmp.ne.s32.totalorder %s177, %s179
      %p183 = scmp.eq.s32.totalorder %s17, 0
      %p184 = por %p182, %p183
      %p185 = scmp.ne.s32.totalorder %s177, %s179
      %p186 = scmp.eq.s32.totalorder %s22, 1
      %p187 = por %p185, %p186
      %p188 = scmp.ne.s32.totalorder %s179, %s180
      %p189 = scmp.eq.s32.totalorder %s22, 0
      %p190 = por %p188, %p189
      %p191 = scmp.ne.s32.totalorder %s179, %s180
      %p192 = scmp.eq.s32.totalorder %s23, 1
      %p193 = por %p191, %p192
      %p195 = scmp.ne.s32.totalorder %s180, %s194
      %p196 = scmp.eq.s32.totalorder %s23, 0
      %p197 = por %p195, %p196
      %s198 = ssub.s32 %s17, %s24
      %p199 = scmp.eq.s32.totalorder %s198, 0
      %s201 = sadd.s32 %s200, 1
      %s202 = scalar_select %p199, %s200, %s201
      %p205 = pneg %p199
      %p206 = scmp.eq.s32.totalorder %s17, 1
      %p207 = por %p205, %p206
      %p208 = scmp.ne.s32.totalorder %s200, %s203
      %p209 = scmp.eq.s32.totalorder %s17, 0
      %p210 = por %p208, %p209
      %p211 = scmp.ne.s32.totalorder %s200, %s203
      %p212 = scmp.eq.s32.totalorder %s22, 1
      %p213 = por %p211, %p212
      %p214 = scmp.ne.s32.totalorder %s203, %s204
      %p215 = scmp.eq.s32.totalorder %s22, 0
      %p216 = por %p214, %p215
      %p217 = scmp.ne.s32.totalorder %s203, %s204
      %p218 = scmp.eq.s32.totalorder %s23, 1
      %p219 = por %p217, %p218
      %p221 = scmp.ne.s32.totalorder %s204, %s220
      %p222 = scmp.eq.s32.totalorder %s23, 0
      %p223 = por %p221, %p222
      %p224 = scmp.le.s32.totalorder 1, %s17
      %p225 = scmp.lt.s32.totalorder %s17, 3
      %p226 = pnand %p224, %p225
      %p227 = pneg %p226
      // Predicated region
      $region9: #{resfacenext_forward.3} parent=5 // pred_check
        _
      $region10: #{resfacenext_forward.3} parent=5 // pred_check_branch
        %229 = sbr.rel (%p226) target = $region12
      $region11: #{resfacenext_forward.3} parent=5 // pred_region
        %s230 = ssub.s32 %s17, 1
        // Predicated region
        $region13: #{resfacenext_forward.3} parent=11 // pred_check
          %p231 = pneg %p64
        $region14: #{resfacenext_forward.3} parent=11 // pred_check_branch
          %233 = sbr.rel (%p231) target = $region16
        $region15: #{resfacenext_forward.3} parent=11 // pred_region
          _
        $region16: #{resfacenext_forward.3} parent=11 // pred_fallthru
          _
        // Predicated region
        $region17: #{resfacenext_forward.3} parent=11 // pred_check
          %p234 = pneg %p85
        $region18: #{resfacenext_forward.3} parent=11 // pred_check_branch
          %236 = sbr.rel (%p234) target = $region20
        $region19: #{resfacenext_forward.3} parent=11 // pred_region
          %238 = vsyncadd [#allocation3], 0
          %s240 = sshll.u32 %s2, 4
          %s241 = int_to_ptr.hbm [resolvable:$true] %s240
          %s242 = sshll.u32 [#allocation2], 4
          %s243 = int_to_ptr.vmem [resolvable:$true] %s242
          %245 = dma.hbm_to_vmem [thread:$0]  %s241, 16, %s243, [#allocation3]
        $region20: #{resfacenext_forward.3} parent=11 // pred_fallthru
          _
        // Predicated region
        $region21: #{resfacenext_forward.3} parent=11 // pred_check
          %p246 = pneg %p106
        $region22: #{resfacenext_forward.3} parent=11 // pred_check_branch
          %248 = sbr.rel (%p246) target = $region24
        $region23: #{resfacenext_forward.3} parent=11 // pred_region
          %250 = vsyncadd [#allocation5], 0
          %s252 = sshll.u32 %s3, 4
          %s253 = int_to_ptr.hbm [resolvable:$true] %s252
          %s254 = sshll.u32 [#allocation4], 4
          %s255 = int_to_ptr.vmem [resolvable:$true] %s254
          %257 = dma.hbm_to_vmem [thread:$0]  %s253, 16, %s255, [#allocation5]
        $region24: #{resfacenext_forward.3} parent=11 // pred_fallthru
          _
        // Predicated region
        $region25: #{resfacenext_forward.3} parent=11 // pred_check
          %p258 = pneg %p127
        $region26: #{resfacenext_forward.3} parent=11 // pred_check_branch
          %260 = sbr.rel (%p258) target = $region28
        $region27: #{resfacenext_forward.3} parent=11 // pred_region
          %262 = vsyncadd [#allocation5], 0
          %s263 = sshll.u32 %s4, 4
          %s264 = int_to_ptr.hbm [resolvable:$true] %s263
          %s265 = sshll.u32 [#allocation6], 4
          %s266 = int_to_ptr.vmem [resolvable:$true] %s265
          %271 = dma.hbm_to_vmem [thread:$0]  %s264, 128, %s266, [#allocation5], 64, 64, 4
        $region28: #{resfacenext_forward.3} parent=11 // pred_fallthru
          _
        // Predicated region
        $region29: #{resfacenext_forward.3} parent=11 // pred_check
          %p272 = pneg %p148
        $region30: #{resfacenext_forward.3} parent=11 // pred_check_branch
          %274 = sbr.rel (%p272) target = $region32
        $region31: #{resfacenext_forward.3} parent=11 // pred_region
          %276 = vsyncadd [#allocation8], 0
          %s278 = sshll.u32 %s5, 4
          %s279 = int_to_ptr.hbm [resolvable:$true] %s278
          %s280 = sshll.u32 [#allocation7], 4
          %s281 = int_to_ptr.vmem [resolvable:$true] %s280
          %283 = dma.hbm_to_vmem [thread:$0]  %s279, 16, %s281, [#allocation8]
        $region32: #{resfacenext_forward.3} parent=11 // pred_fallthru
          _
        // Predicated region
        $region33: #{resfacenext_forward.3} parent=11 // pred_check
          %p284 = pneg %p169
        $region34: #{resfacenext_forward.3} parent=11 // pred_check_branch
          %286 = sbr.rel (%p284) target = $region36
        $region35: #{resfacenext_forward.3} parent=11 // pred_region
          _
        $region36: #{resfacenext_forward.3} parent=11 // pred_fallthru
          _
        // Predicated region
        $region37: #{resfacenext_forward.3} parent=11 // pred_check
          %p287 = pneg %p190
        $region38: #{resfacenext_forward.3} parent=11 // pred_check_branch
          %289 = sbr.rel (%p287) target = $region40
        $region39: #{resfacenext_forward.3} parent=11 // pred_region
          %291 = vsyncadd [#allocation8], 0
          %s293 = sshll.u32 %s7, 4
          %s294 = int_to_ptr.hbm [resolvable:$true] %s293
          %s295 = sshll.u32 [#allocation9], 4
          %s296 = int_to_ptr.vmem [resolvable:$true] %s295
          %298 = dma.hbm_to_vmem [thread:$0]  %s294, 16, %s296, [#allocation8]
        $region40: #{resfacenext_forward.3} parent=11 // pred_fallthru
          _
      $region12: #{resfacenext_forward.3} parent=5 // pred_fallthru
        _
      %p299 = scmp.lt.s32.totalorder %s17, 2
      // Predicated region
      $region41: #{resfacenext_forward.3} parent=5 // pred_check
        %p300 = pneg %p299
      $region42: #{resfacenext_forward.3} parent=5 // pred_check_branch
        %302 = sbr.rel (%p300) target = $region44
      $region43: #{resfacenext_forward.3} parent=5 // pred_region
        // Predicated region
        $region45: #{resfacenext_forward.3} parent=43 // pred_check
          %p303 = pneg %p37
        $region46: #{resfacenext_forward.3} parent=43 // pred_check_branch
          %305 = sbr.rel (%p303) target = $region48
        $region47: #{resfacenext_forward.3} parent=43 // pred_region
          %s306 = smul.u32 32, %s17
          %p307 = scmp.lt.s32.totalorder %s306, 63
          %s308 = scalar_select %p307, %s306, 63
          %s309 = smul.addr %s308, 4
          %s310 = scalar_lea.vmem %s0, %s309
          %s311 = smul.u32 32, %s17
        $region48: #{resfacenext_forward.3} parent=43 // pred_fallthru
          _
      $region44: #{resfacenext_forward.3} parent=5 // pred_fallthru
        _
      %p312 = scmp.le.s32.totalorder 1, %s17
      %p313 = scmp.lt.s32.totalorder %s17, 3
      %p314 = pnand %p312, %p313
      %p315 = pneg %p314
      // Predicated region
      $region49: #{resfacenext_forward.3} parent=5 // pred_check
        _
      $region50: #{resfacenext_forward.3} parent=5 // pred_check_branch
        %317 = sbr.rel (%p314) target = $region52
      $region51: #{resfacenext_forward.3} parent=5 // pred_region
        %s318 = ssub.s32 %s17, 1
        // Predicated region
        $region53: #{resfacenext_forward.3} parent=51 // pred_check
          %p319 = pneg %p85
        $region54: #{resfacenext_forward.3} parent=51 // pred_check_branch
          %321 = sbr.rel (%p319) target = $region56
        $region55: #{resfacenext_forward.3} parent=51 // pred_region
          %323 = dma.done [#allocation3], 16
        $region56: #{resfacenext_forward.3} parent=51 // pred_fallthru
          _
        // Predicated region
        $region57: #{resfacenext_forward.3} parent=51 // pred_check
          %p324 = pneg %p106
        $region58: #{resfacenext_forward.3} parent=51 // pred_check_branch
          %326 = sbr.rel (%p324) target = $region60
        $region59: #{resfacenext_forward.3} parent=51 // pred_region
          %328 = dma.done [#allocation5], 16
        $region60: #{resfacenext_forward.3} parent=51 // pred_fallthru
          _
        // Predicated region
        $region61: #{resfacenext_forward.3} parent=51 // pred_check
          %p329 = pneg %p127
        $region62: #{resfacenext_forward.3} parent=51 // pred_check_branch
          %331 = sbr.rel (%p329) target = $region64
        $region63: #{resfacenext_forward.3} parent=51 // pred_region
          %333 = dma.done [#allocation5], 128
        $region64: #{resfacenext_forward.3} parent=51 // pred_fallthru
          _
        // Predicated region
        $region65: #{resfacenext_forward.3} parent=51 // pred_check
          %p334 = pneg %p148
        $region66: #{resfacenext_forward.3} parent=51 // pred_check_branch
          %336 = sbr.rel (%p334) target = $region68
        $region67: #{resfacenext_forward.3} parent=51 // pred_region
          %338 = dma.done [#allocation8], 16
        $region68: #{resfacenext_forward.3} parent=51 // pred_fallthru
          _
        // Predicated region
        $region69: #{resfacenext_forward.3} parent=51 // pred_check
          %p339 = pneg %p190
        $region70: #{resfacenext_forward.3} parent=51 // pred_check_branch
          %341 = sbr.rel (%p339) target = $region72
        $region71: #{resfacenext_forward.3} parent=51 // pred_region
          %343 = dma.done [#allocation8], 16
        $region72: #{resfacenext_forward.3} parent=51 // pred_fallthru
          _
        %s344 = smul.u32 32, %s22
        %p345 = scmp.lt.s32.totalorder %s344, 63
        %s346 = scalar_select %p345, %s344, 63
        %s347 = smul.addr %s346, 4
        %s348 = scalar_lea.vmem %s0, %s347
        %p349 = pneg %p43
        %p350 = pneg %p40
        %p351 = pneg %p64
        %p352 = pneg %p61
        %p353 = pneg %p85
        %p354 = pneg %p82
        %p355 = pneg %p106
        %p356 = pneg %p103
        %p357 = pneg %p127
        %p358 = pneg %p124
        %p359 = pneg %p148
        %p360 = pneg %p145
        %p361 = pneg %p169
        %p362 = pneg %p166
        %p363 = pneg %p190
        %p364 = pneg %p187
        %p365 = pneg %p216
        %p366 = pneg %p213
        %s367 = smul.u32 32, %s22
        %p368 = scmp.lt.s32.totalorder %s367, 63
        %s369 = scalar_select %p368, %s367, 63
        %s370 = smul.addr %s369, 4
        %s371 = scalar_lea.vmem %s8, %s370
        %s372 = smul.u32 32, %s22
        %p373 = scmp.lt.s32.totalorder %s372, 63
        %s374 = scalar_select %p373, %s372, 63
        %s375 = smul.addr %s374, 4
        %s376 = scalar_lea.vmem %s0, %s375
        %s377 = smul.u32 32, %s22
        %s378 = smul.u32 32, %s22
        %p379 = scmp.lt.s32.totalorder %s378, 63
        %s380 = scalar_select %p379, %s378, 63
        %s381 = smul.addr %s380, 4
        %s382 = scalar_lea.vmem %s8, %s381
        %s383 = smul.u32 32, %s22
        %v385 = vld [vmem:[%s376] sm:$0xf]
        %v386 = vld [vmem:[%s376 + $0x4] sm:$0xf]
        %v387 = vld [vmem:[%s376 + $0x8] sm:$0xf]
        %v388 = vld [vmem:[%s376 + $0xc] sm:$0xf]
        %v389 = vld [vmem:[%s376 + $0x10] sm:$0xf]
        %v390 = vld [vmem:[%s376 + $0x14] sm:$0xf]
        %v391 = vld [vmem:[%s376 + $0x18] sm:$0xf]
        %v392 = vld [vmem:[%s376 + $0x1c] sm:$0xf]
        %v393 = vld [vmem:[%s376 + $0x20] sm:$0xf]
        %v394 = vld [vmem:[%s376 + $0x24] sm:$0xf]
        %v395 = vld [vmem:[%s376 + $0x28] sm:$0xf]
        %v396 = vld [vmem:[%s376 + $0x2c] sm:$0xf]
        %v397 = vld [vmem:[%s376 + $0x30] sm:$0xf]
        %v398 = vld [vmem:[%s376 + $0x34] sm:$0xf]
        %v399 = vld [vmem:[%s376 + $0x38] sm:$0xf]
        %v400 = vld [vmem:[%s376 + $0x3c] sm:$0xf]
        %v401 = vld [vmem:[%s376 + $0x40] sm:$0xf]
        %v402 = vld [vmem:[%s376 + $0x44] sm:$0xf]
        %v403 = vld [vmem:[%s376 + $0x48] sm:$0xf]
        %v404 = vld [vmem:[%s376 + $0x4c] sm:$0xf]
        %v405 = vld [vmem:[%s376 + $0x50] sm:$0xf]
        %v406 = vld [vmem:[%s376 + $0x54] sm:$0xf]
        %v407 = vld [vmem:[%s376 + $0x58] sm:$0xf]
        %v408 = vld [vmem:[%s376 + $0x5c] sm:$0xf]
        %v409 = vld [vmem:[%s376 + $0x60] sm:$0xf]
        %v410 = vld [vmem:[%s376 + $0x64] sm:$0xf]
        %v411 = vld [vmem:[%s376 + $0x68] sm:$0xf]
        %v412 = vld [vmem:[%s376 + $0x6c] sm:$0xf]
        %v413 = vld [vmem:[%s376 + $0x70] sm:$0xf]
        %v414 = vld [vmem:[%s376 + $0x74] sm:$0xf]
        %v415 = vld [vmem:[%s376 + $0x78] sm:$0xf]
        %v416 = vld [vmem:[%s376 + $0x7c] sm:$0xf]
        %v417 = vld [vmem:[%s1] sm:$0xf]
        %v418 = vld [vmem:[%s1 + $0x4] sm:$0xf]
        %v419 = vld [vmem:[%s1 + $0x8] sm:$0xf]
        %v420 = vld [vmem:[%s1 + $0xc] sm:$0xf]
        %v453 = vunpack.c.l.b16 %v385
        %v454 = vunpack.c.l.b16 %v386
        %v455 = vunpack.c.l.b16 %v387
        %v456 = vunpack.c.l.b16 %v388
        %v457 = vunpack.c.l.b16 %v389
        %v458 = vunpack.c.l.b16 %v390
        %v459 = vunpack.c.l.b16 %v391
        %v460 = vunpack.c.l.b16 %v392
        %v461 = vunpack.c.l.b16 %v393
        %v462 = vunpack.c.l.b16 %v394
        %v463 = vunpack.c.l.b16 %v395
        %v464 = vunpack.c.l.b16 %v396
        %v465 = vunpack.c.l.b16 %v397
        %v466 = vunpack.c.l.b16 %v398
        %v467 = vunpack.c.l.b16 %v399
        %v468 = vunpack.c.l.b16 %v400
        %v469 = vunpack.c.l.b16 %v401
        %v470 = vunpack.c.l.b16 %v402
        %v471 = vunpack.c.l.b16 %v403
        %v472 = vunpack.c.l.b16 %v404
        %v473 = vunpack.c.l.b16 %v405
        %v474 = vunpack.c.l.b16 %v406
        %v475 = vunpack.c.l.b16 %v407
        %v476 = vunpack.c.l.b16 %v408
        %v477 = vunpack.c.l.b16 %v409
        %v478 = vunpack.c.l.b16 %v410
        %v479 = vunpack.c.l.b16 %v411
        %v480 = vunpack.c.l.b16 %v412
        %v481 = vunpack.c.l.b16 %v413
        %v482 = vunpack.c.l.b16 %v414
        %v483 = vunpack.c.l.b16 %v415
        %v484 = vunpack.c.l.b16 %v416
        %v485 = vpack.c.b16 %v454, %v453
        %v486 = vpack.c.b16 %v456, %v455
        %v487 = vpack.c.b16 %v458, %v457
        %v488 = vpack.c.b16 %v460, %v459
        %v489 = vpack.c.b16 %v462, %v461
        %v490 = vpack.c.b16 %v464, %v463
        %v491 = vpack.c.b16 %v466, %v465
        %v492 = vpack.c.b16 %v468, %v467
        %v493 = vpack.c.b16 %v470, %v469
        %v494 = vpack.c.b16 %v472, %v471
        %v495 = vpack.c.b16 %v474, %v473
        %v496 = vpack.c.b16 %v476, %v475
        %v497 = vpack.c.b16 %v478, %v477
        %v498 = vpack.c.b16 %v480, %v479
        %v499 = vpack.c.b16 %v482, %v481
        %v500 = vpack.c.b16 %v484, %v483
        %v505 = vunpack.c.l.b16 %v417
        %v506 = vunpack.c.l.b16 %v418
        %v507 = vunpack.c.l.b16 %v419
        %v508 = vunpack.c.l.b16 %v420
        %v509 = vpack.c.b16 %v506, %v505
        %v510 = vpack.c.b16 %v508, %v507
        %vm513 = vcmask 261120
        %v515 = vsel %vm513, %v485, 0
        %v518 = vsel %vm513, %v486, 0
        %v521 = vsel %vm513, %v487, 0
        %v524 = vsel %vm513, %v488, 0
        %v527 = vsel %vm513, %v489, 0
        %v530 = vsel %vm513, %v490, 0
        %v533 = vsel %vm513, %v491, 0
        %v536 = vsel %vm513, %v492, 0
        %v539 = vsel %vm513, %v493, 0
        %v542 = vsel %vm513, %v494, 0
        %v545 = vsel %vm513, %v495, 0
        %v548 = vsel %vm513, %v496, 0
        %v551 = vsel %vm513, %v497, 0
        %v554 = vsel %vm513, %v498, 0
        %v557 = vsel %vm513, %v499, 0
        %v560 = vsel %vm513, %v500, 0
        %562 = vmatpush.bf16.msra.mxu0 0
        %563 = vmatpush.bf16.msra.mxu0 0
        %564 = vmatpush.bf16.msra.mxu0 0
        %565 = vmatpush.bf16.msra.mxu0 0
        %566 = vmatpush.bf16.msra.mxu0 0
        %567 = vmatpush.bf16.msra.mxu0 0
        %568 = vmatpush.bf16.msra.mxu0 %v510
        %569 = vmatpush.bf16.msra.mxu0 %v509
        %570 = vmatmul.bf16.gmra.mxu0 %v515
        %v571 = vpop.f32.mrf.mxu0
        %v572 = vadd.f32 0.0, %v571
        %v573 = vpop.f32.mrf.mxu0
        %v574 = vadd.f32 0.0, %v573
        %575 = vmatmul.bf16.gmra.mxu0 %v518
        %v576 = vpop.f32.mrf.mxu0
        %v577 = vadd.f32 0.0, %v576
        %v578 = vpop.f32.mrf.mxu0
        %v579 = vadd.f32 0.0, %v578
        %580 = vmatmul.bf16.gmra.mxu0 %v521
        %v581 = vpop.f32.mrf.mxu0
        %v582 = vadd.f32 0.0, %v581
        %v583 = vpop.f32.mrf.mxu0
        %v584 = vadd.f32 0.0, %v583
        %585 = vmatmul.bf16.gmra.mxu0 %v524
        %v586 = vpop.f32.mrf.mxu0
        %v587 = vadd.f32 0.0, %v586
        %v588 = vpop.f32.mrf.mxu0
        %v589 = vadd.f32 0.0, %v588
        %590 = vmatmul.bf16.gmra.mxu0 %v527
        %v591 = vpop.f32.mrf.mxu0
        %v592 = vadd.f32 0.0, %v591
        %v593 = vpop.f32.mrf.mxu0
        %v594 = vadd.f32 0.0, %v593
        %595 = vmatmul.bf16.gmra.mxu0 %v530
        %v596 = vpop.f32.mrf.mxu0
        %v597 = vadd.f32 0.0, %v596
        %v598 = vpop.f32.mrf.mxu0
        %v599 = vadd.f32 0.0, %v598
        %600 = vmatmul.bf16.gmra.mxu0 %v533
        %v601 = vpop.f32.mrf.mxu0
        %v602 = vadd.f32 0.0, %v601
        %v603 = vpop.f32.mrf.mxu0
        %v604 = vadd.f32 0.0, %v603
        %605 = vmatmul.bf16.gmra.mxu0 %v536
        %v606 = vpop.f32.mrf.mxu0
        %v607 = vadd.f32 0.0, %v606
        %v608 = vpop.f32.mrf.mxu0
        %v609 = vadd.f32 0.0, %v608
        %610 = vmatmul.bf16.gmra.mxu0 %v539
        %v611 = vpop.f32.mrf.mxu0
        %v612 = vadd.f32 0.0, %v611
        %v613 = vpop.f32.mrf.mxu0
        %v614 = vadd.f32 0.0, %v613
        %615 = vmatmul.bf16.gmra.mxu0 %v542
        %v616 = vpop.f32.mrf.mxu0
        %v617 = vadd.f32 0.0, %v616
        %v618 = vpop.f32.mrf.mxu0
        %v619 = vadd.f32 0.0, %v618
        %620 = vmatmul.bf16.gmra.mxu0 %v545
        %v621 = vpop.f32.mrf.mxu0
        %v622 = vadd.f32 0.0, %v621
        %v623 = vpop.f32.mrf.mxu0
        %v624 = vadd.f32 0.0, %v623
        %625 = vmatmul.bf16.gmra.mxu0 %v548
        %v626 = vpop.f32.mrf.mxu0
        %v627 = vadd.f32 0.0, %v626
        %v628 = vpop.f32.mrf.mxu0
        %v629 = vadd.f32 0.0, %v628
        %630 = vmatmul.bf16.gmra.mxu0 %v551
        %v631 = vpop.f32.mrf.mxu0
        %v632 = vadd.f32 0.0, %v631
        %v633 = vpop.f32.mrf.mxu0
        %v634 = vadd.f32 0.0, %v633
        %635 = vmatmul.bf16.gmra.mxu0 %v554
        %v636 = vpop.f32.mrf.mxu0
        %v637 = vadd.f32 0.0, %v636
        %v638 = vpop.f32.mrf.mxu0
        %v639 = vadd.f32 0.0, %v638
        %640 = vmatmul.bf16.gmra.mxu0 %v557
        %v641 = vpop.f32.mrf.mxu0
        %v642 = vadd.f32 0.0, %v641
        %v643 = vpop.f32.mrf.mxu0
        %v644 = vadd.f32 0.0, %v643
        %645 = vmatmul.bf16.gmra.mxu0 %v560
        %v646 = vpop.f32.mrf.mxu0
        %v647 = vadd.f32 0.0, %v646
        %v648 = vpop.f32.mrf.mxu0
        %v649 = vadd.f32 0.0, %v648
        %650 = vdwg.mxu0
        %v651 = vld [vmem:[#allocation2] sm:$0x1]
        %v653 = vperm.slane %v651, 0
        %v655 = vmul.f32 %v572, %v653
        %v656 = vmul.f32 %v574, %v653
        %v657 = vmul.f32 %v577, %v653
        %v658 = vmul.f32 %v579, %v653
        %v659 = vmul.f32 %v582, %v653
        %v660 = vmul.f32 %v584, %v653
        %v661 = vmul.f32 %v587, %v653
        %v662 = vmul.f32 %v589, %v653
        %v663 = vmul.f32 %v592, %v653
        %v664 = vmul.f32 %v594, %v653
        %v665 = vmul.f32 %v597, %v653
        %v666 = vmul.f32 %v599, %v653
        %v667 = vmul.f32 %v602, %v653
        %v668 = vmul.f32 %v604, %v653
        %v669 = vmul.f32 %v607, %v653
        %v670 = vmul.f32 %v609, %v653
        %v671 = vmul.f32 %v612, %v653
        %v672 = vmul.f32 %v614, %v653
        %v673 = vmul.f32 %v617, %v653
        %v674 = vmul.f32 %v619, %v653
        %v675 = vmul.f32 %v622, %v653
        %v676 = vmul.f32 %v624, %v653
        %v677 = vmul.f32 %v627, %v653
        %v678 = vmul.f32 %v629, %v653
        %v679 = vmul.f32 %v632, %v653
        %v680 = vmul.f32 %v634, %v653
        %v681 = vmul.f32 %v637, %v653
        %v682 = vmul.f32 %v639, %v653
        %v683 = vmul.f32 %v642, %v653
        %v684 = vmul.f32 %v644, %v653
        %v685 = vmul.f32 %v647, %v653
        %v686 = vmul.f32 %v649, %v653
        %v687 = vld [vmem:[#allocation4] sm:$0x1]
        %v689 = vperm.slane %v687, 0
        %v691 = vadd.f32 %v655, %v689
        %v692 = vadd.f32 %v656, %v689
        %v693 = vadd.f32 %v657, %v689
        %v694 = vadd.f32 %v658, %v689
        %v695 = vadd.f32 %v659, %v689
        %v696 = vadd.f32 %v660, %v689
        %v697 = vadd.f32 %v661, %v689
        %v698 = vadd.f32 %v662, %v689
        %v699 = vadd.f32 %v663, %v689
        %v700 = vadd.f32 %v664, %v689
        %v701 = vadd.f32 %v665, %v689
        %v702 = vadd.f32 %v666, %v689
        %v703 = vadd.f32 %v667, %v689
        %v704 = vadd.f32 %v668, %v689
        %v705 = vadd.f32 %v669, %v689
        %v706 = vadd.f32 %v670, %v689
        %v707 = vadd.f32 %v671, %v689
        %v708 = vadd.f32 %v672, %v689
        %v709 = vadd.f32 %v673, %v689
        %v710 = vadd.f32 %v674, %v689
        %v711 = vadd.f32 %v675, %v689
        %v712 = vadd.f32 %v676, %v689
        %v713 = vadd.f32 %v677, %v689
        %v714 = vadd.f32 %v678, %v689
        %v715 = vadd.f32 %v679, %v689
        %v716 = vadd.f32 %v680, %v689
        %v717 = vadd.f32 %v681, %v689
        %v718 = vadd.f32 %v682, %v689
        %v719 = vadd.f32 %v683, %v689
        %v720 = vadd.f32 %v684, %v689
        %v721 = vadd.f32 %v685, %v689
        %v722 = vadd.f32 %v686, %v689
        %v723 = vmax.f32 %v691, 0.0
        %v724 = vmax.f32 %v692, 0.0
        %v725 = vmax.f32 %v693, 0.0
        %v726 = vmax.f32 %v694, 0.0
        %v727 = vmax.f32 %v695, 0.0
        %v728 = vmax.f32 %v696, 0.0
        %v729 = vmax.f32 %v697, 0.0
        %v730 = vmax.f32 %v698, 0.0
        %v731 = vmax.f32 %v699, 0.0
        %v732 = vmax.f32 %v700, 0.0
        %v733 = vmax.f32 %v701, 0.0
        %v734 = vmax.f32 %v702, 0.0
        %v735 = vmax.f32 %v703, 0.0
        %v736 = vmax.f32 %v704, 0.0
        %v737 = vmax.f32 %v705, 0.0
        %v738 = vmax.f32 %v706, 0.0
        %v739 = vmax.f32 %v707, 0.0
        %v740 = vmax.f32 %v708, 0.0
        %v741 = vmax.f32 %v709, 0.0
        %v742 = vmax.f32 %v710, 0.0
        %v743 = vmax.f32 %v711, 0.0
        %v744 = vmax.f32 %v712, 0.0
        %v745 = vmax.f32 %v713, 0.0
        %v746 = vmax.f32 %v714, 0.0
        %v747 = vmax.f32 %v715, 0.0
        %v748 = vmax.f32 %v716, 0.0
        %v749 = vmax.f32 %v717, 0.0
        %v750 = vmax.f32 %v718, 0.0
        %v751 = vmax.f32 %v719, 0.0
        %v752 = vmax.f32 %v720, 0.0
        %v753 = vmax.f32 %v721, 0.0
        %v754 = vmax.f32 %v722, 0.0
        %v755 = vpack.c.bf16 %v724, %v723
        %v756 = vpack.c.bf16 %v726, %v725
        %v757 = vpack.c.bf16 %v728, %v727
        %v758 = vpack.c.bf16 %v730, %v729
        %v759 = vpack.c.bf16 %v732, %v731
        %v760 = vpack.c.bf16 %v734, %v733
        %v761 = vpack.c.bf16 %v736, %v735
        %v762 = vpack.c.bf16 %v738, %v737
        %v763 = vpack.c.bf16 %v740, %v739
        %v764 = vpack.c.bf16 %v742, %v741
        %v765 = vpack.c.bf16 %v744, %v743
        %v766 = vpack.c.bf16 %v746, %v745
        %v767 = vpack.c.bf16 %v748, %v747
        %v768 = vpack.c.bf16 %v750, %v749
        %v769 = vpack.c.bf16 %v752, %v751
        %v770 = vpack.c.bf16 %v754, %v753
        %v771 = vld [vmem:[#allocation6] sm:$0xf]
        %v772 = vld [vmem:[#allocation6 + $0x4] sm:$0xf]
        %v775 = vunpack.c.l.b16 %v771
        %v776 = vunpack.c.l.b16 %v772
        %v777 = vpack.c.b16 %v776, %v775
        %vm779 = vcmask 130048
        %v781 = vsel %vm779, %v755, 0
        %v784 = vsel %vm779, %v756, 0
        %v787 = vsel %vm779, %v757, 0
        %v790 = vsel %vm779, %v758, 0
        %v793 = vsel %vm779, %v759, 0
        %v796 = vsel %vm779, %v760, 0
        %v799 = vsel %vm779, %v761, 0
        %v802 = vsel %vm779, %v762, 0
        %v805 = vsel %vm779, %v763, 0
        %v808 = vsel %vm779, %v764, 0
        %v811 = vsel %vm779, %v765, 0
        %v814 = vsel %vm779, %v766, 0
        %v817 = vsel %vm779, %v767, 0
        %v820 = vsel %vm779, %v768, 0
        %v823 = vsel %vm779, %v769, 0
        %v826 = vsel %vm779, %v770, 0
        %828 = vmatpush.bf16.msra.mxu0 0
        %829 = vmatpush.bf16.msra.mxu0 0
        %830 = vmatpush.bf16.msra.mxu0 0
        %831 = vmatpush.bf16.msra.mxu0 0
        %832 = vmatpush.bf16.msra.mxu0 0
        %833 = vmatpush.bf16.msra.mxu0 0
        %834 = vmatpush.bf16.msra.mxu0 0
        %835 = vmatpush.bf16.msra.mxu0 %v777
        %836 = vmatmul.bf16.gmra.mxu0 %v781
        %v837 = vpop.f32.mrf.mxu0
        %v838 = vadd.f32 0.0, %v837
        %v839 = vpop.f32.mrf.mxu0
        %v840 = vadd.f32 0.0, %v839
        %841 = vmatmul.bf16.gmra.mxu0 %v784
        %v842 = vpop.f32.mrf.mxu0
        %v843 = vadd.f32 0.0, %v842
        %v844 = vpop.f32.mrf.mxu0
        %v845 = vadd.f32 0.0, %v844
        %846 = vmatmul.bf16.gmra.mxu0 %v787
        %v847 = vpop.f32.mrf.mxu0
        %v848 = vadd.f32 0.0, %v847
        %v849 = vpop.f32.mrf.mxu0
        %v850 = vadd.f32 0.0, %v849
        %851 = vmatmul.bf16.gmra.mxu0 %v790
        %v852 = vpop.f32.mrf.mxu0
        %v853 = vadd.f32 0.0, %v852
        %v854 = vpop.f32.mrf.mxu0
        %v855 = vadd.f32 0.0, %v854
        %856 = vmatmul.bf16.gmra.mxu0 %v793
        %v857 = vpop.f32.mrf.mxu0
        %v858 = vadd.f32 0.0, %v857
        %v859 = vpop.f32.mrf.mxu0
        %v860 = vadd.f32 0.0, %v859
        %861 = vmatmul.bf16.gmra.mxu0 %v796
        %v862 = vpop.f32.mrf.mxu0
        %v863 = vadd.f32 0.0, %v862
        %v864 = vpop.f32.mrf.mxu0
        %v865 = vadd.f32 0.0, %v864
        %866 = vmatmul.bf16.gmra.mxu0 %v799
        %v867 = vpop.f32.mrf.mxu0
        %v868 = vadd.f32 0.0, %v867
        %v869 = vpop.f32.mrf.mxu0
        %v870 = vadd.f32 0.0, %v869
        %871 = vmatmul.bf16.gmra.mxu0 %v802
        %v872 = vpop.f32.mrf.mxu0
        %v873 = vadd.f32 0.0, %v872
        %v874 = vpop.f32.mrf.mxu0
        %v875 = vadd.f32 0.0, %v874
        %876 = vmatmul.bf16.gmra.mxu0 %v805
        %v877 = vpop.f32.mrf.mxu0
        %v878 = vadd.f32 0.0, %v877
        %v879 = vpop.f32.mrf.mxu0
        %v880 = vadd.f32 0.0, %v879
        %881 = vmatmul.bf16.gmra.mxu0 %v808
        %v882 = vpop.f32.mrf.mxu0
        %v883 = vadd.f32 0.0, %v882
        %v884 = vpop.f32.mrf.mxu0
        %v885 = vadd.f32 0.0, %v884
        %886 = vmatmul.bf16.gmra.mxu0 %v811
        %v887 = vpop.f32.mrf.mxu0
        %v888 = vadd.f32 0.0, %v887
        %v889 = vpop.f32.mrf.mxu0
        %v890 = vadd.f32 0.0, %v889
        %891 = vmatmul.bf16.gmra.mxu0 %v814
        %v892 = vpop.f32.mrf.mxu0
        %v893 = vadd.f32 0.0, %v892
        %v894 = vpop.f32.mrf.mxu0
        %v895 = vadd.f32 0.0, %v894
        %896 = vmatmul.bf16.gmra.mxu0 %v817
        %v897 = vpop.f32.mrf.mxu0
        %v898 = vadd.f32 0.0, %v897
        %v899 = vpop.f32.mrf.mxu0
        %v900 = vadd.f32 0.0, %v899
        %901 = vmatmul.bf16.gmra.mxu0 %v820
        %v902 = vpop.f32.mrf.mxu0
        %v903 = vadd.f32 0.0, %v902
        %v904 = vpop.f32.mrf.mxu0
        %v905 = vadd.f32 0.0, %v904
        %906 = vmatmul.bf16.gmra.mxu0 %v823
        %v907 = vpop.f32.mrf.mxu0
        %v908 = vadd.f32 0.0, %v907
        %v909 = vpop.f32.mrf.mxu0
        %v910 = vadd.f32 0.0, %v909
        %911 = vmatmul.bf16.gmra.mxu0 %v826
        %v912 = vpop.f32.mrf.mxu0
        %v913 = vadd.f32 0.0, %v912
        %v914 = vpop.f32.mrf.mxu0
        %v915 = vadd.f32 0.0, %v914
        %916 = vdwg.mxu0
        %v917 = vld [vmem:[#allocation7] sm:$0x1]
        %v919 = vperm.slane %v917, 0
        %v921 = vmul.f32 %v838, %v919
        %v922 = vmul.f32 %v840, %v919
        %v923 = vmul.f32 %v843, %v919
        %v924 = vmul.f32 %v845, %v919
        %v925 = vmul.f32 %v848, %v919
        %v926 = vmul.f32 %v850, %v919
        %v927 = vmul.f32 %v853, %v919
        %v928 = vmul.f32 %v855, %v919
        %v929 = vmul.f32 %v858, %v919
        %v930 = vmul.f32 %v860, %v919
        %v931 = vmul.f32 %v863, %v919
        %v932 = vmul.f32 %v865, %v919
        %v933 = vmul.f32 %v868, %v919
        %v934 = vmul.f32 %v870, %v919
        %v935 = vmul.f32 %v873, %v919
        %v936 = vmul.f32 %v875, %v919
        %v937 = vmul.f32 %v878, %v919
        %v938 = vmul.f32 %v880, %v919
        %v939 = vmul.f32 %v883, %v919
        %v940 = vmul.f32 %v885, %v919
        %v941 = vmul.f32 %v888, %v919
        %v942 = vmul.f32 %v890, %v919
        %v943 = vmul.f32 %v893, %v919
        %v944 = vmul.f32 %v895, %v919
        %v945 = vmul.f32 %v898, %v919
        %v946 = vmul.f32 %v900, %v919
        %v947 = vmul.f32 %v903, %v919
        %v948 = vmul.f32 %v905, %v919
        %v949 = vmul.f32 %v908, %v919
        %v950 = vmul.f32 %v910, %v919
        %v951 = vmul.f32 %v913, %v919
        %v952 = vmul.f32 %v915, %v919
        %v953 = vld [vmem:[%s6] sm:$0x1]
        %v955 = vperm.slane %v953, 0
        %v957 = vadd.f32 %v921, %v955
        %v958 = vadd.f32 %v922, %v955
        %v959 = vadd.f32 %v923, %v955
        %v960 = vadd.f32 %v924, %v955
        %v961 = vadd.f32 %v925, %v955
        %v962 = vadd.f32 %v926, %v955
        %v963 = vadd.f32 %v927, %v955
        %v964 = vadd.f32 %v928, %v955
        %v965 = vadd.f32 %v929, %v955
        %v966 = vadd.f32 %v930, %v955
        %v967 = vadd.f32 %v931, %v955
        %v968 = vadd.f32 %v932, %v955
        %v969 = vadd.f32 %v933, %v955
        %v970 = vadd.f32 %v934, %v955
        %v971 = vadd.f32 %v935, %v955
        %v972 = vadd.f32 %v936, %v955
        %v973 = vadd.f32 %v937, %v955
        %v974 = vadd.f32 %v938, %v955
        %v975 = vadd.f32 %v939, %v955
        %v976 = vadd.f32 %v940, %v955
        %v977 = vadd.f32 %v941, %v955
        %v978 = vadd.f32 %v942, %v955
        %v979 = vadd.f32 %v943, %v955
        %v980 = vadd.f32 %v944, %v955
        %v981 = vadd.f32 %v945, %v955
        %v982 = vadd.f32 %v946, %v955
        %v983 = vadd.f32 %v947, %v955
        %v984 = vadd.f32 %v948, %v955
        %v985 = vadd.f32 %v949, %v955
        %v986 = vadd.f32 %v950, %v955
        %v987 = vadd.f32 %v951, %v955
        %v988 = vadd.f32 %v952, %v955
        %v989 = vld [vmem:[#allocation9] sm:$0x1]
        %vm990 = vcmp.gt.f32.partialorder %v989, 0.0
        %v991 = vmax.f32 %v957, 0.0
        %v992 = vmax.f32 %v958, 0.0
        %v993 = vmax.f32 %v959, 0.0
        %v994 = vmax.f32 %v960, 0.0
        %v995 = vmax.f32 %v961, 0.0
        %v996 = vmax.f32 %v962, 0.0
        %v997 = vmax.f32 %v963, 0.0
        %v998 = vmax.f32 %v964, 0.0
        %v999 = vmax.f32 %v965, 0.0
        %v1000 = vmax.f32 %v966, 0.0
        %v1001 = vmax.f32 %v967, 0.0
        %v1002 = vmax.f32 %v968, 0.0
        %v1003 = vmax.f32 %v969, 0.0
        %v1004 = vmax.f32 %v970, 0.0
        %v1005 = vmax.f32 %v971, 0.0
        %v1006 = vmax.f32 %v972, 0.0
        %v1007 = vmax.f32 %v973, 0.0
        %v1008 = vmax.f32 %v974, 0.0
        %v1009 = vmax.f32 %v975, 0.0
        %v1010 = vmax.f32 %v976, 0.0
        %v1011 = vmax.f32 %v977, 0.0
        %v1012 = vmax.f32 %v978, 0.0
        %v1013 = vmax.f32 %v979, 0.0
        %v1014 = vmax.f32 %v980, 0.0
        %v1015 = vmax.f32 %v981, 0.0
        %v1016 = vmax.f32 %v982, 0.0
        %v1017 = vmax.f32 %v983, 0.0
        %v1018 = vmax.f32 %v984, 0.0
        %v1019 = vmax.f32 %v985, 0.0
        %v1020 = vmax.f32 %v986, 0.0
        %v1021 = vmax.f32 %v987, 0.0
        %v1022 = vmax.f32 %v988, 0.0
        %v1023 = vsel %vm990, 1, 0
        %v1024 = vperm.slane %v1023, 0
        %vm1025 = vcmp.eq.s32.totalorder %v1024, 1
        %v1026 = vsel %vm1025, %v991, %v957
        %v1027 = vsel %vm1025, %v992, %v958
        %v1028 = vsel %vm1025, %v993, %v959
        %v1029 = vsel %vm1025, %v994, %v960
        %v1030 = vsel %vm1025, %v995, %v961
        %v1031 = vsel %vm1025, %v996, %v962
        %v1032 = vsel %vm1025, %v997, %v963
        %v1033 = vsel %vm1025, %v998, %v964
        %v1034 = vsel %vm1025, %v999, %v965
        %v1035 = vsel %vm1025, %v1000, %v966
        %v1036 = vsel %vm1025, %v1001, %v967
        %v1037 = vsel %vm1025, %v1002, %v968
        %v1038 = vsel %vm1025, %v1003, %v969
        %v1039 = vsel %vm1025, %v1004, %v970
        %v1040 = vsel %vm1025, %v1005, %v971
        %v1041 = vsel %vm1025, %v1006, %v972
        %v1042 = vsel %vm1025, %v1007, %v973
        %v1043 = vsel %vm1025, %v1008, %v974
        %v1044 = vsel %vm1025, %v1009, %v975
        %v1045 = vsel %vm1025, %v1010, %v976
        %v1046 = vsel %vm1025, %v1011, %v977
        %v1047 = vsel %vm1025, %v1012, %v978
        %v1048 = vsel %vm1025, %v1013, %v979
        %v1049 = vsel %vm1025, %v1014, %v980
        %v1050 = vsel %vm1025, %v1015, %v981
        %v1051 = vsel %vm1025, %v1016, %v982
        %v1052 = vsel %vm1025, %v1017, %v983
        %v1053 = vsel %vm1025, %v1018, %v984
        %v1054 = vsel %vm1025, %v1019, %v985
        %v1055 = vsel %vm1025, %v1020, %v986
        %v1056 = vsel %vm1025, %v1021, %v987
        %v1057 = vsel %vm1025, %v1022, %v988
        %v1058 = vpack.c.bf16 %v1026, %v1026
        %v1059 = vpack.c.bf16 %v1027, %v1027
        %v1060 = vpack.c.bf16 %v1028, %v1028
        %v1061 = vpack.c.bf16 %v1029, %v1029
        %v1062 = vpack.c.bf16 %v1030, %v1030
        %v1063 = vpack.c.bf16 %v1031, %v1031
        %v1064 = vpack.c.bf16 %v1032, %v1032
        %v1065 = vpack.c.bf16 %v1033, %v1033
        %v1066 = vpack.c.bf16 %v1034, %v1034
        %v1067 = vpack.c.bf16 %v1035, %v1035
        %v1068 = vpack.c.bf16 %v1036, %v1036
        %v1069 = vpack.c.bf16 %v1037, %v1037
        %v1070 = vpack.c.bf16 %v1038, %v1038
        %v1071 = vpack.c.bf16 %v1039, %v1039
        %v1072 = vpack.c.bf16 %v1040, %v1040
        %v1073 = vpack.c.bf16 %v1041, %v1041
        %v1074 = vpack.c.bf16 %v1042, %v1042
        %v1075 = vpack.c.bf16 %v1043, %v1043
        %v1076 = vpack.c.bf16 %v1044, %v1044
        %v1077 = vpack.c.bf16 %v1045, %v1045
        %v1078 = vpack.c.bf16 %v1046, %v1046
        %v1079 = vpack.c.bf16 %v1047, %v1047
        %v1080 = vpack.c.bf16 %v1048, %v1048
        %v1081 = vpack.c.bf16 %v1049, %v1049
        %v1082 = vpack.c.bf16 %v1050, %v1050
        %v1083 = vpack.c.bf16 %v1051, %v1051
        %v1084 = vpack.c.bf16 %v1052, %v1052
        %v1085 = vpack.c.bf16 %v1053, %v1053
        %v1086 = vpack.c.bf16 %v1054, %v1054
        %v1087 = vpack.c.bf16 %v1055, %v1055
        %v1088 = vpack.c.bf16 %v1056, %v1056
        %v1089 = vpack.c.bf16 %v1057, %v1057
        %1090 = vst [vmem:[%s382] sm:$0xf] %v1058
        %1091 = vst [vmem:[%s382 + $0x4] sm:$0xf] %v1059
        %1092 = vst [vmem:[%s382 + $0x8] sm:$0xf] %v1060
        %1093 = vst [vmem:[%s382 + $0xc] sm:$0xf] %v1061
        %1094 = vst [vmem:[%s382 + $0x10] sm:$0xf] %v1062
        %1095 = vst [vmem:[%s382 + $0x14] sm:$0xf] %v1063
        %1096 = vst [vmem:[%s382 + $0x18] sm:$0xf] %v1064
        %1097 = vst [vmem:[%s382 + $0x1c] sm:$0xf] %v1065
        %1098 = vst [vmem:[%s382 + $0x20] sm:$0xf] %v1066
        %1099 = vst [vmem:[%s382 + $0x24] sm:$0xf] %v1067
        %1100 = vst [vmem:[%s382 + $0x28] sm:$0xf] %v1068
        %1101 = vst [vmem:[%s382 + $0x2c] sm:$0xf] %v1069
        %1102 = vst [vmem:[%s382 + $0x30] sm:$0xf] %v1070
        %1103 = vst [vmem:[%s382 + $0x34] sm:$0xf] %v1071
        %1104 = vst [vmem:[%s382 + $0x38] sm:$0xf] %v1072
        %1105 = vst [vmem:[%s382 + $0x3c] sm:$0xf] %v1073
        %1106 = vst [vmem:[%s382 + $0x40] sm:$0xf] %v1074
        %1107 = vst [vmem:[%s382 + $0x44] sm:$0xf] %v1075
        %1108 = vst [vmem:[%s382 + $0x48] sm:$0xf] %v1076
        %1109 = vst [vmem:[%s382 + $0x4c] sm:$0xf] %v1077
        %1110 = vst [vmem:[%s382 + $0x50] sm:$0xf] %v1078
        %1111 = vst [vmem:[%s382 + $0x54] sm:$0xf] %v1079
        %1112 = vst [vmem:[%s382 + $0x58] sm:$0xf] %v1080
        %1113 = vst [vmem:[%s382 + $0x5c] sm:$0xf] %v1081
        %1114 = vst [vmem:[%s382 + $0x60] sm:$0xf] %v1082
        %1115 = vst [vmem:[%s382 + $0x64] sm:$0xf] %v1083
        %1116 = vst [vmem:[%s382 + $0x68] sm:$0xf] %v1084
        %1117 = vst [vmem:[%s382 + $0x6c] sm:$0xf] %v1085
        %1118 = vst [vmem:[%s382 + $0x70] sm:$0xf] %v1086
        %1119 = vst [vmem:[%s382 + $0x74] sm:$0xf] %v1087
        %1120 = vst [vmem:[%s382 + $0x78] sm:$0xf] %v1088
        %1121 = vst [vmem:[%s382 + $0x7c] sm:$0xf] %v1089
        %s1122 = smul.u32 32, %s22
        %p1123 = scmp.lt.s32.totalorder %s1122, 63
        %s1124 = scalar_select %p1123, %s1122, 63
        %s1125 = smul.addr %s1124, 4
        %s1126 = scalar_lea.vmem %s8, %s1125
        // Predicated region
        $region73: #{resfacenext_forward.3} parent=51 // pred_check
          %p1127 = pneg %p213
        $region74: #{resfacenext_forward.3} parent=51 // pred_check_branch
          %1129 = sbr.rel (%p1127) target = $region76
        $region75: #{resfacenext_forward.3} parent=51 // pred_region
          %s1130 = smul.u32 32, %s22
        $region76: #{resfacenext_forward.3} parent=51 // pred_fallthru
          _
      $region52: #{resfacenext_forward.3} parent=5 // pred_fallthru
        _
      %p1131 = scmp.le.s32.totalorder 2, %s17
      // Predicated region
      $region77: #{resfacenext_forward.3} parent=5 // pred_check
        %p1132 = pneg %p1131
      $region78: #{resfacenext_forward.3} parent=5 // pred_check_branch
        %1134 = sbr.rel (%p1132) target = $region80
      $region79: #{resfacenext_forward.3} parent=5 // pred_region
        %s1135 = ssub.s32 %s17, 2
        // Predicated region
        $region81: #{resfacenext_forward.3} parent=79 // pred_check
          %p1136 = pneg %p219
        $region82: #{resfacenext_forward.3} parent=79 // pred_check_branch
          %1138 = sbr.rel (%p1136) target = $region84
        $region83: #{resfacenext_forward.3} parent=79 // pred_region
          %s1139 = smul.u32 32, %s23
          %p1140 = scmp.lt.s32.totalorder %s1139, 63
          %s1141 = scalar_select %p1140, %s1139, 63
          %s1142 = smul.addr %s1141, 4
          %s1143 = scalar_lea.vmem %s8, %s1142
        $region84: #{resfacenext_forward.3} parent=79 // pred_fallthru
          _
      $region80: #{resfacenext_forward.3} parent=5 // pred_fallthru
        _
    $region6: #{resfacenext_forward.3} parent=1 // loop_footer
      %s21 = sadd.s32 1, %s17
    $region7: #{resfacenext_forward.3} parent=1 // loop_footer_branch
      %16 = sbr.rel target = $region3
    $region8: #{resfacenext_forward.3} parent=1 // loop_exit
      _
    %1144 = vsyncpa [#allocation3], 1
    %s1145 = scalar_lea.sflag [#allocation3], 1
    %1146 = vsyncpa %s1145, 1
    %1147 = vsyncpa [#allocation5], 1
    %1148 = vsyncpa [#allocation8], 1

// kernel: resfacenext_forward.4
$region0: #{resfacenext_forward.4}
  #allocation0 [shape = 'u32[]', space=smem, size = 0x4, offset = 0x4, fixed_abs, tag = 'smem constant byte address 0x4 - core index']
  #allocation1 [shape = 'u32[72,128]{1,0:T(1,128)}', space=vmem, size = 0x9000, scoped, tag = 'internal scratch']
  %s0 = inlined_call_operand.vmem [shape: bf16[4,128,72], index: 0, kind: input, shape index: {}]
  %s1 = inlined_call_operand.vmem [shape: bf16[4,72,8], index: 1, kind: input, shape index: {}]
  %s2 = inlined_call_operand.vmem [shape: f32[4,1,8], index: 2, kind: input, shape index: {}]
  %s3 = inlined_call_operand.vmem [shape: f32[4,1,8], index: 3, kind: input, shape index: {}]
  %s4 = inlined_call_operand.vmem [shape: bf16[4,8,64], index: 4, kind: input, shape index: {}]
  %s5 = inlined_call_operand.vmem [shape: f32[1,64], index: 5, kind: input, shape index: {}]
  %s6 = inlined_call_operand.vmem [shape: f32[1,64], index: 6, kind: input, shape index: {}]
  %s7 = inlined_call_operand.vmem [shape: bf16[128,64], index: 7, kind: input, shape index: {}]
  %s8 = inlined_call_operand.vmem [shape: bf16[64,256], index: 8, kind: input, shape index: {}]
  %s9 = inlined_call_operand.vmem [shape: f32[1,256], index: 9, kind: input, shape index: {}]
  %s10 = inlined_call_operand.vmem [shape: f32[1,256], index: 10, kind: input, shape index: {}]
  %s11 = inlined_call_operand.vmem [shape: f32[1,256], index: 11, kind: input, shape index: {}]
  %s12 = inlined_call_operand.vmem [shape: bf16[128,256], index: 12, kind: output, shape index: {}]
  %s13 = sld [smem:[#allocation0]]
  $region122: #{resfacenext_forward.4} parent=0
    _
  %s15 = ssub.s32 1, %s13
  %s16 = scalar_select 0, %s15, %s13
  $region1: #{resfacenext_forward.4} parent=0
    #allocation2 [shape = 'u8[131072]{0}', space=vmem, size = 0x20000, scoped, tag = 'input window, operand 0']
    loop: start=0, step=1, limit=4
    $region2: #{resfacenext_forward.4} parent=1 // loop_pre_header
      _
    $region3: #{resfacenext_forward.4} parent=1 // loop_header
      %s18 = sphi 0, %s22
      %p19 = scmp.ge.s32.totalorder %s18, 4
      %s28 = sphi 0, %s30
      %s31 = sphi 0, %s28
      %s32 = sphi 0, %s31
      %s48 = sphi 0, %s32
      %s52 = sphi 0, %s52
      %s54 = sphi 0, %s52
      %s55 = sphi 0, %s54
      %s69 = sphi 0, %s55
      %s73 = sphi 0, %s73
      %s75 = sphi 0, %s73
      %s76 = sphi 0, %s75
      %s90 = sphi 0, %s76
      %s94 = sphi 0, %s94
      %s96 = sphi 0, %s94
      %s97 = sphi 0, %s96
      %s111 = sphi 0, %s97
      %s115 = sphi 0, %s115
      %s117 = sphi 0, %s115
      %s118 = sphi 0, %s117
      %s132 = sphi 0, %s118
      %s136 = sphi 0, %s136
      %s138 = sphi 0, %s136
      %s139 = sphi 0, %s138
      %s153 = sphi 0, %s139
      %s157 = sphi 0, %s157
      %s159 = sphi 0, %s157
      %s160 = sphi 0, %s159
      %s174 = sphi 0, %s160
      %s180 = sphi 0, %s182
      %s183 = sphi 0, %s180
      %s184 = sphi 0, %s183
      %s200 = sphi 0, %s184
      %s204 = sphi 0, %s204
      %s206 = sphi 0, %s204
      %s207 = sphi 0, %s206
      %s221 = sphi 0, %s207
      %s225 = sphi 0, %s225
      %s227 = sphi 0, %s225
      %s228 = sphi 0, %s227
      %s242 = sphi 0, %s228
      %s246 = sphi 0, %s246
      %s248 = sphi 0, %s246
      %s249 = sphi 0, %s248
      %s263 = sphi 0, %s249
      %s267 = sphi 0, %s267
      %s269 = sphi 0, %s267
      %s270 = sphi 0, %s269
      %s284 = sphi 0, %s270
      %s290 = sphi 0, %s292
      %s293 = sphi 0, %s290
      %s294 = sphi 0, %s293
      %s310 = sphi 0, %s294
    $region4: #{resfacenext_forward.4} parent=1 // loop_header_branch
      %21 = sbr.rel (%p19) target = $region8
    $region5: #{resfacenext_forward.4} parent=1 // loop_body
      %s23 = ssub.s32 %s18, 1
      %s24 = ssub.s32 %s18, 2
      %s25 = sadd.s32 %s18, 1
      %s26 = ssub.s32 %s18, %s25
      %p27 = scmp.eq.s32.totalorder %s26, 0
      %s29 = sadd.s32 %s28, 1
      %s30 = scalar_select %p27, %s28, %s29
      %p33 = pneg %p27
      %p34 = scmp.eq.s32.totalorder %s18, 1
      %p35 = por %p33, %p34
      %p36 = scmp.ne.s32.totalorder %s28, %s31
      %p37 = scmp.eq.s32.totalorder %s18, 0
      %p38 = por %p36, %p37
      %p39 = scmp.ne.s32.totalorder %s28, %s31
      %p40 = scmp.eq.s32.totalorder %s23, 1
      %p41 = por %p39, %p40
      %p42 = scmp.ne.s32.totalorder %s31, %s32
      %p43 = scmp.eq.s32.totalorder %s23, 0
      %p44 = por %p42, %p43
      %p45 = scmp.ne.s32.totalorder %s31, %s32
      %p46 = scmp.eq.s32.totalorder %s24, 1
      %p47 = por %p45, %p46
      %p49 = scmp.ne.s32.totalorder %s32, %s48
      %p50 = scmp.eq.s32.totalorder %s24, 0
      %p51 = por %p49, %p50
      %s53 = sadd.s32 %s52, 1
      %p56 = scmp.eq.s32.totalorder %s18, 1
      %p57 = scmp.ne.s32.totalorder %s52, %s54
      %p58 = scmp.eq.s32.totalorder %s18, 0
      %p59 = por %p57, %p58
      %p60 = scmp.ne.s32.totalorder %s52, %s54
      %p61 = scmp.eq.s32.totalorder %s23, 1
      %p62 = por %p60, %p61
      %p63 = scmp.ne.s32.totalorder %s54, %s55
      %p64 = scmp.eq.s32.totalorder %s23, 0
      %p65 = por %p63, %p64
      %p66 = scmp.ne.s32.totalorder %s54, %s55
      %p67 = scmp.eq.s32.totalorder %s24, 1
      %p68 = por %p66, %p67
      %p70 = scmp.ne.s32.totalorder %s55, %s69
      %p71 = scmp.eq.s32.totalorder %s24, 0
      %p72 = por %p70, %p71
      %s74 = sadd.s32 %s73, 1
      %p77 = scmp.eq.s32.totalorder %s18, 1
      %p78 = scmp.ne.s32.totalorder %s73, %s75
      %p79 = scmp.eq.s32.totalorder %s18, 0
      %p80 = por %p78, %p79
      %p81 = scmp.ne.s32.totalorder %s73, %s75
      %p82 = scmp.eq.s32.totalorder %s23, 1
      %p83 = por %p81, %p82
      %p84 = scmp.ne.s32.totalorder %s75, %s76
      %p85 = scmp.eq.s32.totalorder %s23, 0
      %p86 = por %p84, %p85
      %p87 = scmp.ne.s32.totalorder %s75, %s76
      %p88 = scmp.eq.s32.totalorder %s24, 1
      %p89 = por %p87, %p88
      %p91 = scmp.ne.s32.totalorder %s76, %s90
      %p92 = scmp.eq.s32.totalorder %s24, 0
      %p93 = por %p91, %p92
      %s95 = sadd.s32 %s94, 1
      %p98 = scmp.eq.s32.totalorder %s18, 1
      %p99 = scmp.ne.s32.totalorder %s94, %s96
      %p100 = scmp.eq.s32.totalorder %s18, 0
      %p101 = por %p99, %p100
      %p102 = scmp.ne.s32.totalorder %s94, %s96
      %p103 = scmp.eq.s32.totalorder %s23, 1
      %p104 = por %p102, %p103
      %p105 = scmp.ne.s32.totalorder %s96, %s97
      %p106 = scmp.eq.s32.totalorder %s23, 0
      %p107 = por %p105, %p106
      %p108 = scmp.ne.s32.totalorder %s96, %s97
      %p109 = scmp.eq.s32.totalorder %s24, 1
      %p110 = por %p108, %p109
      %p112 = scmp.ne.s32.totalorder %s97, %s111
      %p113 = scmp.eq.s32.totalorder %s24, 0
      %p114 = por %p112, %p113
      %s116 = sadd.s32 %s115, 1
      %p119 = scmp.eq.s32.totalorder %s18, 1
      %p120 = scmp.ne.s32.totalorder %s115, %s117
      %p121 = scmp.eq.s32.totalorder %s18, 0
      %p122 = por %p120, %p121
      %p123 = scmp.ne.s32.totalorder %s115, %s117
      %p124 = scmp.eq.s32.totalorder %s23, 1
      %p125 = por %p123, %p124
      %p126 = scmp.ne.s32.totalorder %s117, %s118
      %p127 = scmp.eq.s32.totalorder %s23, 0
      %p128 = por %p126, %p127
      %p129 = scmp.ne.s32.totalorder %s117, %s118
      %p130 = scmp.eq.s32.totalorder %s24, 1
      %p131 = por %p129, %p130
      %p133 = scmp.ne.s32.totalorder %s118, %s132
      %p134 = scmp.eq.s32.totalorder %s24, 0
      %p135 = por %p133, %p134
      %s137 = sadd.s32 %s136, 1
      %p140 = scmp.eq.s32.totalorder %s18, 1
      %p141 = scmp.ne.s32.totalorder %s136, %s138
      %p142 = scmp.eq.s32.totalorder %s18, 0
      %p143 = por %p141, %p142
      %p144 = scmp.ne.s32.totalorder %s136, %s138
      %p145 = scmp.eq.s32.totalorder %s23, 1
      %p146 = por %p144, %p145
      %p147 = scmp.ne.s32.totalorder %s138, %s139
      %p148 = scmp.eq.s32.totalorder %s23, 0
      %p149 = por %p147, %p148
      %p150 = scmp.ne.s32.totalorder %s138, %s139
      %p151 = scmp.eq.s32.totalorder %s24, 1
      %p152 = por %p150, %p151
      %p154 = scmp.ne.s32.totalorder %s139, %s153
      %p155 = scmp.eq.s32.totalorder %s24, 0
      %p156 = por %p154, %p155
      %s158 = sadd.s32 %s157, 1
      %p161 = scmp.eq.s32.totalorder %s18, 1
      %p162 = scmp.ne.s32.totalorder %s157, %s159
      %p163 = scmp.eq.s32.totalorder %s18, 0
      %p164 = por %p162, %p163
      %p165 = scmp.ne.s32.totalorder %s157, %s159
      %p166 = scmp.eq.s32.totalorder %s23, 1
      %p167 = por %p165, %p166
      %p168 = scmp.ne.s32.totalorder %s159, %s160
      %p169 = scmp.eq.s32.totalorder %s23, 0
      %p170 = por %p168, %p169
      %p171 = scmp.ne.s32.totalorder %s159, %s160
      %p172 = scmp.eq.s32.totalorder %s24, 1
      %p173 = por %p171, %p172
      %p175 = scmp.ne.s32.totalorder %s160, %s174
      %p176 = scmp.eq.s32.totalorder %s24, 0
      %p177 = por %p175, %p176
      %s178 = ssub.s32 %s18, %s25
      %p179 = scmp.eq.s32.totalorder %s178, 0
      %s181 = sadd.s32 %s180, 1
      %s182 = scalar_select %p179, %s180, %s181
      %p185 = pneg %p179
      %p186 = scmp.eq.s32.totalorder %s18, 1
      %p187 = por %p185, %p186
      %p188 = scmp.ne.s32.totalorder %s180, %s183
      %p189 = scmp.eq.s32.totalorder %s18, 0
      %p190 = por %p188, %p189
      %p191 = scmp.ne.s32.totalorder %s180, %s183
      %p192 = scmp.eq.s32.totalorder %s23, 1
      %p193 = por %p191, %p192
      %p194 = scmp.ne.s32.totalorder %s183, %s184
      %p195 = scmp.eq.s32.totalorder %s23, 0
      %p196 = por %p194, %p195
      %p197 = scmp.ne.s32.totalorder %s183, %s184
      %p198 = scmp.eq.s32.totalorder %s24, 1
      %p199 = por %p197, %p198
      %p201 = scmp.ne.s32.totalorder %s184, %s200
      %p202 = scmp.eq.s32.totalorder %s24, 0
      %p203 = por %p201, %p202
      %s205 = sadd.s32 %s204, 1
      %p208 = scmp.eq.s32.totalorder %s18, 1
      %p209 = scmp.ne.s32.totalorder %s204, %s206
      %p210 = scmp.eq.s32.totalorder %s18, 0
      %p211 = por %p209, %p210
      %p212 = scmp.ne.s32.totalorder %s204, %s206
      %p213 = scmp.eq.s32.totalorder %s23, 1
      %p214 = por %p212, %p213
      %p215 = scmp.ne.s32.totalorder %s206, %s207
      %p216 = scmp.eq.s32.totalorder %s23, 0
      %p217 = por %p215, %p216
      %p218 = scmp.ne.s32.totalorder %s206, %s207
      %p219 = scmp.eq.s32.totalorder %s24, 1
      %p220 = por %p218, %p219
      %p222 = scmp.ne.s32.totalorder %s207, %s221
      %p223 = scmp.eq.s32.totalorder %s24, 0
      %p224 = por %p222, %p223
      %s226 = sadd.s32 %s225, 1
      %p229 = scmp.eq.s32.totalorder %s18, 1
      %p230 = scmp.ne.s32.totalorder %s225, %s227
      %p231 = scmp.eq.s32.totalorder %s18, 0
      %p232 = por %p230, %p231
      %p233 = scmp.ne.s32.totalorder %s225, %s227
      %p234 = scmp.eq.s32.totalorder %s23, 1
      %p235 = por %p233, %p234
      %p236 = scmp.ne.s32.totalorder %s227, %s228
      %p237 = scmp.eq.s32.totalorder %s23, 0
      %p238 = por %p236, %p237
      %p239 = scmp.ne.s32.totalorder %s227, %s228
      %p240 = scmp.eq.s32.totalorder %s24, 1
      %p241 = por %p239, %p240
      %p243 = scmp.ne.s32.totalorder %s228, %s242
      %p244 = scmp.eq.s32.totalorder %s24, 0
      %p245 = por %p243, %p244
      %s247 = sadd.s32 %s246, 1
      %p250 = scmp.eq.s32.totalorder %s18, 1
      %p251 = scmp.ne.s32.totalorder %s246, %s248
      %p252 = scmp.eq.s32.totalorder %s18, 0
      %p253 = por %p251, %p252
      %p254 = scmp.ne.s32.totalorder %s246, %s248
      %p255 = scmp.eq.s32.totalorder %s23, 1
      %p256 = por %p254, %p255
      %p257 = scmp.ne.s32.totalorder %s248, %s249
      %p258 = scmp.eq.s32.totalorder %s23, 0
      %p259 = por %p257, %p258
      %p260 = scmp.ne.s32.totalorder %s248, %s249
      %p261 = scmp.eq.s32.totalorder %s24, 1
      %p262 = por %p260, %p261
      %p264 = scmp.ne.s32.totalorder %s249, %s263
      %p265 = scmp.eq.s32.totalorder %s24, 0
      %p266 = por %p264, %p265
      %s268 = sadd.s32 %s267, 1
      %p271 = scmp.eq.s32.totalorder %s18, 1
      %p272 = scmp.ne.s32.totalorder %s267, %s269
      %p273 = scmp.eq.s32.totalorder %s18, 0
      %p274 = por %p272, %p273
      %p275 = scmp.ne.s32.totalorder %s267, %s269
      %p276 = scmp.eq.s32.totalorder %s23, 1
      %p277 = por %p275, %p276
      %p278 = scmp.ne.s32.totalorder %s269, %s270
      %p279 = scmp.eq.s32.totalorder %s23, 0
      %p280 = por %p278, %p279
      %p281 = scmp.ne.s32.totalorder %s269, %s270
      %p282 = scmp.eq.s32.totalorder %s24, 1
      %p283 = por %p281, %p282
      %p285 = scmp.ne.s32.totalorder %s270, %s284
      %p286 = scmp.eq.s32.totalorder %s24, 0
      %p287 = por %p285, %p286
      %s288 = ssub.s32 %s18, %s25
      %p289 = scmp.eq.s32.totalorder %s288, 0
      %s291 = sadd.s32 %s290, 1
      %s292 = scalar_select %p289, %s290, %s291
      %p295 = pneg %p289
      %p296 = scmp.eq.s32.totalorder %s18, 1
      %p297 = por %p295, %p296
      %p298 = scmp.ne.s32.totalorder %s290, %s293
      %p299 = scmp.eq.s32.totalorder %s18, 0
      %p300 = por %p298, %p299
      %p301 = scmp.ne.s32.totalorder %s290, %s293
      %p302 = scmp.eq.s32.totalorder %s23, 1
      %p303 = por %p301, %p302
      %p304 = scmp.ne.s32.totalorder %s293, %s294
      %p305 = scmp.eq.s32.totalorder %s23, 0
      %p306 = por %p304, %p305
      %p307 = scmp.ne.s32.totalorder %s293, %s294
      %p308 = scmp.eq.s32.totalorder %s24, 1
      %p309 = por %p307, %p308
      %p311 = scmp.ne.s32.totalorder %s294, %s310
      %p312 = scmp.eq.s32.totalorder %s24, 0
      %p313 = por %p311, %p312
      %p314 = scmp.le.s32.totalorder 1, %s18
      %p315 = scmp.lt.s32.totalorder %s18, 3
      %p316 = pnand %p314, %p315
      %p317 = pneg %p316
      // Predicated region
      $region9: #{resfacenext_forward.4} parent=5 // pred_check
        _
      $region10: #{resfacenext_forward.4} parent=5 // pred_check_branch
        %319 = sbr.rel (%p316) target = $region12
      $region11: #{resfacenext_forward.4} parent=5 // pred_region
        %s320 = ssub.s32 %s18, 1
        // Predicated region
        $region13: #{resfacenext_forward.4} parent=11 // pred_check
          %p321 = pneg %p65
        $region14: #{resfacenext_forward.4} parent=11 // pred_check_branch
          %323 = sbr.rel (%p321) target = $region16
        $region15: #{resfacenext_forward.4} parent=11 // pred_region
          _
        $region16: #{resfacenext_forward.4} parent=11 // pred_fallthru
          _
        // Predicated region
        $region17: #{resfacenext_forward.4} parent=11 // pred_check
          %p324 = pneg %p86
        $region18: #{resfacenext_forward.4} parent=11 // pred_check_branch
          %326 = sbr.rel (%p324) target = $region20
        $region19: #{resfacenext_forward.4} parent=11 // pred_region
          _
        $region20: #{resfacenext_forward.4} parent=11 // pred_fallthru
          _
        // Predicated region
        $region21: #{resfacenext_forward.4} parent=11 // pred_check
          %p327 = pneg %p107
        $region22: #{resfacenext_forward.4} parent=11 // pred_check_branch
          %329 = sbr.rel (%p327) target = $region24
        $region23: #{resfacenext_forward.4} parent=11 // pred_region
          _
        $region24: #{resfacenext_forward.4} parent=11 // pred_fallthru
          _
        // Predicated region
        $region25: #{resfacenext_forward.4} parent=11 // pred_check
          %p330 = pneg %p128
        $region26: #{resfacenext_forward.4} parent=11 // pred_check_branch
          %332 = sbr.rel (%p330) target = $region28
        $region27: #{resfacenext_forward.4} parent=11 // pred_region
          _
        $region28: #{resfacenext_forward.4} parent=11 // pred_fallthru
          _
        // Predicated region
        $region29: #{resfacenext_forward.4} parent=11 // pred_check
          %p333 = pneg %p149
        $region30: #{resfacenext_forward.4} parent=11 // pred_check_branch
          %335 = sbr.rel (%p333) target = $region32
        $region31: #{resfacenext_forward.4} parent=11 // pred_region
          _
        $region32: #{resfacenext_forward.4} parent=11 // pred_fallthru
          _
        // Predicated region
        $region33: #{resfacenext_forward.4} parent=11 // pred_check
          %p336 = pneg %p170
        $region34: #{resfacenext_forward.4} parent=11 // pred_check_branch
          %338 = sbr.rel (%p336) target = $region36
        $region35: #{resfacenext_forward.4} parent=11 // pred_region
          _
        $region36: #{resfacenext_forward.4} parent=11 // pred_fallthru
          _
        // Predicated region
        $region37: #{resfacenext_forward.4} parent=11 // pred_check
          %p339 = pneg %p217
        $region38: #{resfacenext_forward.4} parent=11 // pred_check_branch
          %341 = sbr.rel (%p339) target = $region40
        $region39: #{resfacenext_forward.4} parent=11 // pred_region
          _
        $region40: #{resfacenext_forward.4} parent=11 // pred_fallthru
          _
        // Predicated region
        $region41: #{resfacenext_forward.4} parent=11 // pred_check
          %p342 = pneg %p238
        $region42: #{resfacenext_forward.4} parent=11 // pred_check_branch
          %344 = sbr.rel (%p342) target = $region44
        $region43: #{resfacenext_forward.4} parent=11 // pred_region
          _
        $region44: #{resfacenext_forward.4} parent=11 // pred_fallthru
          _
        // Predicated region
        $region45: #{resfacenext_forward.4} parent=11 // pred_check
          %p345 = pneg %p259
        $region46: #{resfacenext_forward.4} parent=11 // pred_check_branch
          %347 = sbr.rel (%p345) target = $region48
        $region47: #{resfacenext_forward.4} parent=11 // pred_region
          _
        $region48: #{resfacenext_forward.4} parent=11 // pred_fallthru
          _
        // Predicated region
        $region49: #{resfacenext_forward.4} parent=11 // pred_check
          %p348 = pneg %p280
        $region50: #{resfacenext_forward.4} parent=11 // pred_check_branch
          %350 = sbr.rel (%p348) target = $region52
        $region51: #{resfacenext_forward.4} parent=11 // pred_region
          _
        $region52: #{resfacenext_forward.4} parent=11 // pred_fallthru
          _
      $region12: #{resfacenext_forward.4} parent=5 // pred_fallthru
        _
      %p351 = scmp.lt.s32.totalorder %s18, 2
      // Predicated region
      $region53: #{resfacenext_forward.4} parent=5 // pred_check
        %p352 = pneg %p351
      $region54: #{resfacenext_forward.4} parent=5 // pred_check_branch
        %354 = sbr.rel (%p352) target = $region56
      $region55: #{resfacenext_forward.4} parent=5 // pred_region
        // Predicated region
        $region57: #{resfacenext_forward.4} parent=55 // pred_check
          %p355 = pneg %p38
        $region58: #{resfacenext_forward.4} parent=55 // pred_check_branch
          %357 = sbr.rel (%p355) target = $region60
        $region59: #{resfacenext_forward.4} parent=55 // pred_region
          %s358 = sand.u32 %s28, 1
          %s359 = sand.u32 %s28, 1
          %s360 = smul.addr %s359, 128
          %s361 = scalar_lea.vmem [#allocation2], %s360
          %s362 = smul.u32 8, %s18
          %s363 = smul.addr %s362, 4
          %s364 = scalar_lea.vmem %s0, %s363
          // Predicated region
          $region61: #{resfacenext_forward.4} parent=59 // pred_check
            _
          $region62: #{resfacenext_forward.4} parent=59 // pred_check_branch
            %366 = sbr.rel (0) target = $region64
          $region63: #{resfacenext_forward.4} parent=59 // pred_region
            // Predicated region
            $region65: #{resfacenext_forward.4} parent=63 // pred_check
              _
            $region66: #{resfacenext_forward.4} parent=63 // pred_check_branch
              %368 = sbr.rel target = $region68
            $region67: #{resfacenext_forward.4} parent=63 // pred_region
              // Predicated region
              $region80: #{resfacenext_forward.4} parent=67 // pred_check
                _
              $region81: #{resfacenext_forward.4} parent=67 // pred_check_branch
                %446 = sbr.rel (0) target = $region83
              $region82: #{resfacenext_forward.4} parent=67 // pred_region
                loop: start=0, step=1, limit=1
                $region84: #{resfacenext_forward.4} parent=82 // loop_pre_header
                  _
                $region85: #{resfacenext_forward.4} parent=82 // loop_header
                  %s448 = sphi 0, %s452
                  %p449 = scmp.ge.s32.totalorder %s448, 1
                  %s453 = sphi %s364, %s364
                  %s454 = sphi %s361, %s361
                $region86: #{resfacenext_forward.4} parent=82 // loop_header_branch
                  %451 = sbr.rel (%p449) target = $region90
                $region87: #{resfacenext_forward.4} parent=82 // loop_body
                  _
                $region88: #{resfacenext_forward.4} parent=82 // loop_footer
                  %s452 = sadd.s32 1, %s448
                $region89: #{resfacenext_forward.4} parent=82 // loop_footer_branch
                  %447 = sbr.rel target = $region85
                $region90: #{resfacenext_forward.4} parent=82 // loop_exit
                  _
                %s456 = ssub.s32 16, 1
                loop: start=0, step=1, limit=1
                $region91: #{resfacenext_forward.4} parent=82 // loop_pre_header
                  _
                $region92: #{resfacenext_forward.4} parent=82 // loop_header
                  %s458 = sphi 0, %s462
                  %p459 = scmp.ge.s32.totalorder %s458, 1
                  %s463 = sphi %s364, %s364
                  %s464 = sphi %s361, %s361
                $region93: #{resfacenext_forward.4} parent=82 // loop_header_branch
                  %461 = sbr.rel (%p459) target = $region97
                $region94: #{resfacenext_forward.4} parent=82 // loop_body
                  %v465 = vld [vmem:[%s463] sm:%s456]
                  %466 = vst [vmem:[%s464] sm:%s456] %v465
                  %v467 = vld [vmem:[%s463 + $0x4] sm:%s456]
                  %468 = vst [vmem:[%s464 + $0x4] sm:%s456] %v467
                  %v469 = vld [vmem:[%s463 + $0x8] sm:%s456]
                  %470 = vst [vmem:[%s464 + $0x8] sm:%s456] %v469
                  %v471 = vld [vmem:[%s463 + $0xc] sm:%s456]
                  %472 = vst [vmem:[%s464 + $0xc] sm:%s456] %v471
                  %v473 = vld [vmem:[%s463 + $0x10] sm:%s456]
                  %474 = vst [vmem:[%s464 + $0x10] sm:%s456] %v473
                  %v475 = vld [vmem:[%s463 + $0x14] sm:%s456]
                  %476 = vst [vmem:[%s464 + $0x14] sm:%s456] %v475
                  %v477 = vld [vmem:[%s463 + $0x18] sm:%s456]
                  %478 = vst [vmem:[%s464 + $0x18] sm:%s456] %v477
                  %v479 = vld [vmem:[%s463 + $0x1c] sm:%s456]
                  %480 = vst [vmem:[%s464 + $0x1c] sm:%s456] %v479
                  %v481 = vld [vmem:[%s463 + $0x40] sm:%s456]
                  %482 = vst [vmem:[%s464 + $0x20] sm:%s456] %v481
                  %v483 = vld [vmem:[%s463 + $0x44] sm:%s456]
                  %484 = vst [vmem:[%s464 + $0x24] sm:%s456] %v483
                  %v485 = vld [vmem:[%s463 + $0x48] sm:%s456]
                  %486 = vst [vmem:[%s464 + $0x28] sm:%s456] %v485
                  %v487 = vld [vmem:[%s463 + $0x4c] sm:%s456]
                  %488 = vst [vmem:[%s464 + $0x2c] sm:%s456] %v487
                  %v489 = vld [vmem:[%s463 + $0x50] sm:%s456]
                  %490 = vst [vmem:[%s464 + $0x30] sm:%s456] %v489
                  %v491 = vld [vmem:[%s463 + $0x54] sm:%s456]
                  %492 = vst [vmem:[%s464 + $0x34] sm:%s456] %v491
                  %v493 = vld [vmem:[%s463 + $0x58] sm:%s456]
                  %494 = vst [vmem:[%s464 + $0x38] sm:%s456] %v493
                  %v495 = vld [vmem:[%s463 + $0x5c] sm:%s456]
                  %496 = vst [vmem:[%s464 + $0x3c] sm:%s456] %v495
                  %v497 = vld [vmem:[%s463 + $0x80] sm:%s456]
                  %498 = vst [vmem:[%s464 + $0x40] sm:%s456] %v497
                  %v499 = vld [vmem:[%s463 + $0x84] sm:%s456]
                  %500 = vst [vmem:[%s464 + $0x44] sm:%s456] %v499
                  %v501 = vld [vmem:[%s463 + $0x88] sm:%s456]
                  %502 = vst [vmem:[%s464 + $0x48] sm:%s456] %v501
                  %v503 = vld [vmem:[%s463 + $0x8c] sm:%s456]
                  %504 = vst [vmem:[%s464 + $0x4c] sm:%s456] %v503
                  %v505 = vld [vmem:[%s463 + $0x90] sm:%s456]
                  %506 = vst [vmem:[%s464 + $0x50] sm:%s456] %v505
                  %v507 = vld [vmem:[%s463 + $0x94] sm:%s456]
                  %508 = vst [vmem:[%s464 + $0x54] sm:%s456] %v507
                  %v509 = vld [vmem:[%s463 + $0x98] sm:%s456]
                  %510 = vst [vmem:[%s464 + $0x58] sm:%s456] %v509
                  %v511 = vld [vmem:[%s463 + $0x9c] sm:%s456]
                  %512 = vst [vmem:[%s464 + $0x5c] sm:%s456] %v511
                  %v513 = vld [vmem:[%s463 + $0xc0] sm:%s456]
                  %514 = vst [vmem:[%s464 + $0x60] sm:%s456] %v513
                  %v515 = vld [vmem:[%s463 + $0xc4] sm:%s456]
                  %516 = vst [vmem:[%s464 + $0x64] sm:%s456] %v515
                  %v517 = vld [vmem:[%s463 + $0xc8] sm:%s456]
                  %518 = vst [vmem:[%s464 + $0x68] sm:%s456] %v517
                  %v519 = vld [vmem:[%s463 + $0xcc] sm:%s456]
                  %520 = vst [vmem:[%s464 + $0x6c] sm:%s456] %v519
                  %v521 = vld [vmem:[%s463 + $0xd0] sm:%s456]
                  %522 = vst [vmem:[%s464 + $0x70] sm:%s456] %v521
                  %v523 = vld [vmem:[%s463 + $0xd4] sm:%s456]
                  %524 = vst [vmem:[%s464 + $0x74] sm:%s456] %v523
                  %v525 = vld [vmem:[%s463 + $0xd8] sm:%s456]
                  %526 = vst [vmem:[%s464 + $0x78] sm:%s456] %v525
                  %v527 = vld [vmem:[%s463 + $0xdc] sm:%s456]
                  %528 = vst [vmem:[%s464 + $0x7c] sm:%s456] %v527
                $region95: #{resfacenext_forward.4} parent=82 // loop_footer
                  %s462 = sadd.s32 1, %s458
                $region96: #{resfacenext_forward.4} parent=82 // loop_footer_branch
                  %457 = sbr.rel target = $region92
                $region97: #{resfacenext_forward.4} parent=82 // loop_exit
                  _
              $region83: #{resfacenext_forward.4} parent=67 // pred_fallthru
                _
            $region68: #{resfacenext_forward.4} parent=63 // pred_fallthru
              _
            // Predicated region
            $region69: #{resfacenext_forward.4} parent=63 // pred_check
              _
            $region70: #{resfacenext_forward.4} parent=63 // pred_check_branch
              %370 = sbr.rel (0) target = $region72
            $region71: #{resfacenext_forward.4} parent=63 // pred_region
              %s372 = ssub.s32 16, 1
              loop: start=0, step=1, limit=1
              $region73: #{resfacenext_forward.4} parent=71 // loop_pre_header
                _
              $region74: #{resfacenext_forward.4} parent=71 // loop_header
                %s374 = sphi 0, %s378
                %p375 = scmp.ge.s32.totalorder %s374, 1
                %s379 = sphi %s364, %s364
                %s380 = sphi %s361, %s361
              $region75: #{resfacenext_forward.4} parent=71 // loop_header_branch
                %377 = sbr.rel (%p375) target = $region79
              $region76: #{resfacenext_forward.4} parent=71 // loop_body
                %v381 = vld [vmem:[%s379] sm:%s372]
                %382 = vst [vmem:[%s380] sm:%s372] %v381
                %v383 = vld [vmem:[%s379 + $0x4] sm:%s372]
                %384 = vst [vmem:[%s380 + $0x4] sm:%s372] %v383
                %v385 = vld [vmem:[%s379 + $0x8] sm:%s372]
                %386 = vst [vmem:[%s380 + $0x8] sm:%s372] %v385
                %v387 = vld [vmem:[%s379 + $0xc] sm:%s372]
                %388 = vst [vmem:[%s380 + $0xc] sm:%s372] %v387
                %v389 = vld [vmem:[%s379 + $0x10] sm:%s372]
                %390 = vst [vmem:[%s380 + $0x10] sm:%s372] %v389
                %v391 = vld [vmem:[%s379 + $0x14] sm:%s372]
                %392 = vst [vmem:[%s380 + $0x14] sm:%s372] %v391
                %v393 = vld [vmem:[%s379 + $0x18] sm:%s372]
                %394 = vst [vmem:[%s380 + $0x18] sm:%s372] %v393
                %v395 = vld [vmem:[%s379 + $0x1c] sm:%s372]
                %396 = vst [vmem:[%s380 + $0x1c] sm:%s372] %v395
                %v397 = vld [vmem:[%s379 + $0x40] sm:%s372]
                %398 = vst [vmem:[%s380 + $0x20] sm:%s372] %v397
                %v399 = vld [vmem:[%s379 + $0x44] sm:%s372]
                %400 = vst [vmem:[%s380 + $0x24] sm:%s372] %v399
                %v401 = vld [vmem:[%s379 + $0x48] sm:%s372]
                %402 = vst [vmem:[%s380 + $0x28] sm:%s372] %v401
                %v403 = vld [vmem:[%s379 + $0x4c] sm:%s372]
                %404 = vst [vmem:[%s380 + $0x2c] sm:%s372] %v403
                %v405 = vld [vmem:[%s379 + $0x50] sm:%s372]
                %406 = vst [vmem:[%s380 + $0x30] sm:%s372] %v405
                %v407 = vld [vmem:[%s379 + $0x54] sm:%s372]
                %408 = vst [vmem:[%s380 + $0x34] sm:%s372] %v407
                %v409 = vld [vmem:[%s379 + $0x58] sm:%s372]
                %410 = vst [vmem:[%s380 + $0x38] sm:%s372] %v409
                %v411 = vld [vmem:[%s379 + $0x5c] sm:%s372]
                %412 = vst [vmem:[%s380 + $0x3c] sm:%s372] %v411
                %v413 = vld [vmem:[%s379 + $0x80] sm:%s372]
                %414 = vst [vmem:[%s380 + $0x40] sm:%s372] %v413
                %v415 = vld [vmem:[%s379 + $0x84] sm:%s372]
                %416 = vst [vmem:[%s380 + $0x44] sm:%s372] %v415
                %v417 = vld [vmem:[%s379 + $0x88] sm:%s372]
                %418 = vst [vmem:[%s380 + $0x48] sm:%s372] %v417
                %v419 = vld [vmem:[%s379 + $0x8c] sm:%s372]
                %420 = vst [vmem:[%s380 + $0x4c] sm:%s372] %v419
                %v421 = vld [vmem:[%s379 + $0x90] sm:%s372]
                %422 = vst [vmem:[%s380 + $0x50] sm:%s372] %v421
                %v423 = vld [vmem:[%s379 + $0x94] sm:%s372]
                %424 = vst [vmem:[%s380 + $0x54] sm:%s372] %v423
                %v425 = vld [vmem:[%s379 + $0x98] sm:%s372]
                %426 = vst [vmem:[%s380 + $0x58] sm:%s372] %v425
                %v427 = vld [vmem:[%s379 + $0x9c] sm:%s372]
                %428 = vst [vmem:[%s380 + $0x5c] sm:%s372] %v427
                %v429 = vld [vmem:[%s379 + $0xc0] sm:%s372]
                %430 = vst [vmem:[%s380 + $0x60] sm:%s372] %v429
                %v431 = vld [vmem:[%s379 + $0xc4] sm:%s372]
                %432 = vst [vmem:[%s380 + $0x64] sm:%s372] %v431
                %v433 = vld [vmem:[%s379 + $0xc8] sm:%s372]
                %434 = vst [vmem:[%s380 + $0x68] sm:%s372] %v433
                %v435 = vld [vmem:[%s379 + $0xcc] sm:%s372]
                %436 = vst [vmem:[%s380 + $0x6c] sm:%s372] %v435
                %v437 = vld [vmem:[%s379 + $0xd0] sm:%s372]
                %438 = vst [vmem:[%s380 + $0x70] sm:%s372] %v437
                %v439 = vld [vmem:[%s379 + $0xd4] sm:%s372]
                %440 = vst [vmem:[%s380 + $0x74] sm:%s372] %v439
                %v441 = vld [vmem:[%s379 + $0xd8] sm:%s372]
                %442 = vst [vmem:[%s380 + $0x78] sm:%s372] %v441
                %v443 = vld [vmem:[%s379 + $0xdc] sm:%s372]
                %444 = vst [vmem:[%s380 + $0x7c] sm:%s372] %v443
              $region77: #{resfacenext_forward.4} parent=71 // loop_footer
                %s378 = sadd.s32 1, %s374
              $region78: #{resfacenext_forward.4} parent=71 // loop_footer_branch
                %373 = sbr.rel target = $region74
              $region79: #{resfacenext_forward.4} parent=71 // loop_exit
                _
            $region72: #{resfacenext_forward.4} parent=63 // pred_fallthru
              _
          $region64: #{resfacenext_forward.4} parent=59 // pred_fallthru
            _
          %529 = vnop
        $region60: #{resfacenext_forward.4} parent=55 // pred_fallthru
          _
        // Predicated region
        $region98: #{resfacenext_forward.4} parent=55 // pred_check
          %p530 = pneg %p190
        $region99: #{resfacenext_forward.4} parent=55 // pred_check_branch
          %532 = sbr.rel (%p530) target = $region101
        $region100: #{resfacenext_forward.4} parent=55 // pred_region
          %s533 = smul.u32 8, %s18
          %p534 = scmp.lt.s32.totalorder %s533, 15
          %s535 = scalar_select %p534, %s533, 15
          %s536 = smul.addr %s535, 4
          %s537 = scalar_lea.vmem %s7, %s536
          %s538 = smul.u32 8, %s18
        $region101: #{resfacenext_forward.4} parent=55 // pred_fallthru
          _
      $region56: #{resfacenext_forward.4} parent=5 // pred_fallthru
        _
      %p539 = scmp.le.s32.totalorder 1, %s18
      %p540 = scmp.lt.s32.totalorder %s18, 3
      %p541 = pnand %p539, %p540
      %p542 = pneg %p541
      // Predicated region
      $region102: #{resfacenext_forward.4} parent=5 // pred_check
        _
      $region103: #{resfacenext_forward.4} parent=5 // pred_check_branch
        %544 = sbr.rel (%p541) target = $region105
      $region104: #{resfacenext_forward.4} parent=5 // pred_region
        %s545 = ssub.s32 %s18, 1
        %s546 = sand.u32 %s31, 1
        %s547 = sand.u32 %s31, 1
        %s548 = smul.addr %s547, 128
        %s549 = scalar_lea.vmem [#allocation2], %s548
        // Predicated region
        $region106: #{resfacenext_forward.4} parent=104 // pred_check
          %p550 = pneg %p44
        $region107: #{resfacenext_forward.4} parent=104 // pred_check_branch
          %552 = sbr.rel (%p550) target = $region109
        $region108: #{resfacenext_forward.4} parent=104 // pred_region
          _
        $region109: #{resfacenext_forward.4} parent=104 // pred_fallthru
          _
        %s553 = sand.u32 %s31, 1
        %s554 = sand.u32 %s31, 1
        %s555 = smul.addr %s554, 128
        %s556 = scalar_lea.vmem [#allocation2], %s555
        %p557 = pneg %p44
        %p558 = pneg %p41
        %p559 = pneg %p65
        %p560 = pneg %p62
        %p561 = pneg %p86
        %p562 = pneg %p83
        %p563 = pneg %p107
        %p564 = pneg %p104
        %p565 = pneg %p128
        %p566 = pneg %p125
        %p567 = pneg %p149
        %p568 = pneg %p146
        %p569 = pneg %p170
        %p570 = pneg %p167
        %s571 = smul.u32 8, %s23
        %p572 = scmp.lt.s32.totalorder %s571, 15
        %s573 = scalar_select %p572, %s571, 15
        %s574 = smul.addr %s573, 4
        %s575 = scalar_lea.vmem %s7, %s574
        %p576 = pneg %p196
        %p577 = pneg %p193
        %p578 = pneg %p217
        %p579 = pneg %p214
        %p580 = pneg %p238
        %p581 = pneg %p235
        %p582 = pneg %p259
        %p583 = pneg %p256
        %p584 = pneg %p280
        %p585 = pneg %p277
        %p586 = pneg %p306
        %p587 = pneg %p303
        %s588 = smul.u32 8, %s23
        %p589 = scmp.lt.s32.totalorder %s588, 15
        %s590 = scalar_select %p589, %s588, 15
        %s591 = smul.addr %s590, 2
        %s592 = smul.addr %s591, 4
        %s593 = scalar_lea.vmem %s12, %s592
        %s594 = smul.u32 8, %s23
        %s595 = smul.u32 8, %s23
        %p596 = scmp.lt.s32.totalorder %s595, 15
        %s597 = scalar_select %p596, %s595, 15
        %s598 = smul.addr %s597, 4
        %s599 = scalar_lea.vmem %s7, %s598
        %s600 = smul.u32 8, %s23
        %s601 = smul.u32 8, %s23
        %p602 = scmp.lt.s32.totalorder %s601, 15
        %s603 = scalar_select %p602, %s601, 15
        %s604 = smul.addr %s603, 2
        %s605 = smul.addr %s604, 4
        %s606 = scalar_lea.vmem %s12, %s605
        %s607 = smul.u32 8, %s23
        %v609 = vld [vmem:[%s549] sm:$0xf]
        %v610 = vld [vmem:[%s549 + $0x4] sm:$0xf]
        %v611 = vld [vmem:[%s549 + $0x8] sm:$0xf]
        %v612 = vld [vmem:[%s549 + $0xc] sm:$0xf]
        %v613 = vld [vmem:[%s549 + $0x10] sm:$0xf]
        %v614 = vld [vmem:[%s549 + $0x14] sm:$0xf]
        %v615 = vld [vmem:[%s549 + $0x18] sm:$0xf]
        %v616 = vld [vmem:[%s549 + $0x1c] sm:$0xf]
        %v617 = vld [vmem:[%s1] sm:$0xf]
        %v618 = vld [vmem:[%s1 + $0x4] sm:$0xf]
        %v619 = vld [vmem:[%s1 + $0x8] sm:$0xf]
        %v620 = vld [vmem:[%s1 + $0xc] sm:$0xf]
        %v621 = vld [vmem:[%s1 + $0x10] sm:$0xf]
        %v622 = vld [vmem:[%s1 + $0x14] sm:$0xf]
        %v623 = vld [vmem:[%s1 + $0x18] sm:$0xf]
        %v624 = vld [vmem:[%s1 + $0x1c] sm:$0xf]
        %v625 = vld [vmem:[%s1 + $0x20] sm:$0xf]
        %v634 = vunpack.c.l.b16 %v609
        %v635 = vunpack.c.l.b16 %v610
        %v636 = vunpack.c.l.b16 %v611
        %v637 = vunpack.c.l.b16 %v612
        %v638 = vunpack.c.l.b16 %v613
        %v639 = vunpack.c.l.b16 %v614
        %v640 = vunpack.c.l.b16 %v615
        %v641 = vunpack.c.l.b16 %v616
        %v642 = vpack.c.b16 %v635, %v634
        %v643 = vpack.c.b16 %v637, %v636
        %v644 = vpack.c.b16 %v639, %v638
        %v645 = vpack.c.b16 %v641, %v640
        %v655 = vunpack.c.l.b16 %v617
        %v656 = vunpack.c.l.b16 %v618
        %v657 = vunpack.c.l.b16 %v619
        %v658 = vunpack.c.l.b16 %v620
        %v659 = vunpack.c.l.b16 %v621
        %v660 = vunpack.c.l.b16 %v622
        %v661 = vunpack.c.l.b16 %v623
        %v662 = vunpack.c.l.b16 %v624
        %v663 = vunpack.c.l.b16 %v625
        %v664 = vpack.c.b16 %v656, %v655
        %v665 = vpack.c.b16 %v658, %v657
        %v666 = vpack.c.b16 %v660, %v659
        %v667 = vpack.c.b16 %v662, %v661
        %v668 = vpack.c.b16 %v663, %v663
        %vm673 = vcmask 588800
        %v675 = vsel %vm673, %v642, 0
        %v678 = vsel %vm673, %v643, 0
        %v681 = vsel %vm673, %v644, 0
        %v684 = vsel %vm673, %v645, 0
        %vm686 = vcmask 1043456
        %v688 = vsel %vm686, %v668, 0
        %690 = vmatpush.bf16.msra.mxu0 0
        %691 = vmatpush.bf16.msra.mxu0 0
        %692 = vmatpush.bf16.msra.mxu0 0
        %693 = vmatpush.bf16.msra.mxu0 %v688
        %694 = vmatpush.bf16.msra.mxu0 %v667
        %695 = vmatpush.bf16.msra.mxu0 %v666
        %696 = vmatpush.bf16.msra.mxu0 %v665
        %697 = vmatpush.bf16.msra.mxu0 %v664
        %698 = vmatmul.bf16.gmra.mxu0 %v675
        %v699 = vpop.f32.mrf.mxu0
        %v700 = vadd.f32 0.0, %v699
        %v701 = vpop.f32.mrf.mxu0
        %v702 = vadd.f32 0.0, %v701
        %703 = vmatmul.bf16.gmra.mxu0 %v678
        %v704 = vpop.f32.mrf.mxu0
        %v705 = vadd.f32 0.0, %v704
        %v706 = vpop.f32.mrf.mxu0
        %v707 = vadd.f32 0.0, %v706
        %708 = vmatmul.bf16.gmra.mxu0 %v681
        %v709 = vpop.f32.mrf.mxu0
        %v710 = vadd.f32 0.0, %v709
        %v711 = vpop.f32.mrf.mxu0
        %v712 = vadd.f32 0.0, %v711
        %713 = vmatmul.bf16.gmra.mxu0 %v684
        %v714 = vpop.f32.mrf.mxu0
        %v715 = vadd.f32 0.0, %v714
        %v716 = vpop.f32.mrf.mxu0
        %v717 = vadd.f32 0.0, %v716
        %718 = vdwg.mxu0
        %v719 = vld [vmem:[%s2] sm:$0x1]
        %v721 = vperm.slane %v719, 0
        %v723 = vmul.f32 %v700, %v721
        %v724 = vmul.f32 %v702, %v721
        %v725 = vmul.f32 %v705, %v721
        %v726 = vmul.f32 %v707, %v721
        %v727 = vmul.f32 %v710, %v721
        %v728 = vmul.f32 %v712, %v721
        %v729 = vmul.f32 %v715, %v721
        %v730 = vmul.f32 %v717, %v721
        %v731 = vld [vmem:[%s3] sm:$0x1]
        %v733 = vperm.slane %v731, 0
        %v735 = vadd.f32 %v723, %v733
        %v736 = vadd.f32 %v724, %v733
        %v737 = vadd.f32 %v725, %v733
        %v738 = vadd.f32 %v726, %v733
        %v739 = vadd.f32 %v727, %v733
        %v740 = vadd.f32 %v728, %v733
        %v741 = vadd.f32 %v729, %v733
        %v742 = vadd.f32 %v730, %v733
        %v743 = vmax.f32 %v735, 0.0
        %v744 = vmax.f32 %v736, 0.0
        %v745 = vmax.f32 %v737, 0.0
        %v746 = vmax.f32 %v738, 0.0
        %v747 = vmax.f32 %v739, 0.0
        %v748 = vmax.f32 %v740, 0.0
        %v749 = vmax.f32 %v741, 0.0
        %v750 = vmax.f32 %v742, 0.0
        %v751 = vpack.c.bf16 %v744, %v743
        %v752 = vpack.c.bf16 %v746, %v745
        %v753 = vpack.c.bf16 %v748, %v747
        %v754 = vpack.c.bf16 %v750, %v749
        %v755 = vld [vmem:[%s4] sm:$0xf]
        %s756 = scalar_lea.vmem %s549, 32 [#allocation2]
        %v757 = vld [vmem:[%s756] sm:$0xf]
        %v758 = vld [vmem:[%s756 + $0x4] sm:$0xf]
        %v759 = vld [vmem:[%s756 + $0x8] sm:$0xf]
        %v760 = vld [vmem:[%s756 + $0xc] sm:$0xf]
        %v761 = vld [vmem:[%s756 + $0x10] sm:$0xf]
        %v762 = vld [vmem:[%s756 + $0x14] sm:$0xf]
        %v763 = vld [vmem:[%s756 + $0x18] sm:$0xf]
        %v764 = vld [vmem:[%s756 + $0x1c] sm:$0xf]
        %s765 = scalar_lea.vmem %s1, 36
        %v766 = vld [vmem:[%s765] sm:$0xf]
        %v767 = vld [vmem:[%s765 + $0x4] sm:$0xf]
        %v768 = vld [vmem:[%s765 + $0x8] sm:$0xf]
        %v769 = vld [vmem:[%s765 + $0xc] sm:$0xf]
        %v770 = vld [vmem:[%s765 + $0x10] sm:$0xf]
        %v771 = vld [vmem:[%s765 + $0x14] sm:$0xf]
        %v772 = vld [vmem:[%s765 + $0x18] sm:$0xf]
        %v773 = vld [vmem:[%s765 + $0x1c] sm:$0xf]
        %v774 = vld [vmem:[%s765 + $0x20] sm:$0xf]
        %v783 = vunpack.c.l.b16 %v757
        %v784 = vunpack.c.l.b16 %v758
        %v785 = vunpack.c.l.b16 %v759
        %v786 = vunpack.c.l.b16 %v760
        %v787 = vunpack.c.l.b16 %v761
        %v788 = vunpack.c.l.b16 %v762
        %v789 = vunpack.c.l.b16 %v763
        %v790 = vunpack.c.l.b16 %v764
        %v791 = vpack.c.b16 %v784, %v783
        %v792 = vpack.c.b16 %v786, %v785
        %v793 = vpack.c.b16 %v788, %v787
        %v794 = vpack.c.b16 %v790, %v789
        %v804 = vunpack.c.l.b16 %v766
        %v805 = vunpack.c.l.b16 %v767
        %v806 = vunpack.c.l.b16 %v768
        %v807 = vunpack.c.l.b16 %v769
        %v808 = vunpack.c.l.b16 %v770
        %v809 = vunpack.c.l.b16 %v771
        %v810 = vunpack.c.l.b16 %v772
        %v811 = vunpack.c.l.b16 %v773
        %v812 = vunpack.c.l.b16 %v774
        %v813 = vpack.c.b16 %v805, %v804
        %v814 = vpack.c.b16 %v807, %v806
        %v815 = vpack.c.b16 %v809, %v808
        %v816 = vpack.c.b16 %v811, %v810
        %v817 = vpack.c.b16 %v812, %v812
        %v823 = vsel %vm673, %v791, 0
        %v826 = vsel %vm673, %v792, 0
        %v829 = vsel %vm673, %v793, 0
        %v832 = vsel %vm673, %v794, 0
        %v835 = vsel %vm686, %v817, 0
        %837 = vmatpush.bf16.msra.mxu0 0
        %838 = vmatpush.bf16.msra.mxu0 0
        %839 = vmatpush.bf16.msra.mxu0 0
        %840 = vmatpush.bf16.msra.mxu0 %v835
        %841 = vmatpush.bf16.msra.mxu0 %v816
        %842 = vmatpush.bf16.msra.mxu0 %v815
        %843 = vmatpush.bf16.msra.mxu0 %v814
        %844 = vmatpush.bf16.msra.mxu0 %v813
        %845 = vmatmul.bf16.gmra.mxu0 %v823
        %v846 = vpop.f32.mrf.mxu0
        %v847 = vadd.f32 0.0, %v846
        %v848 = vpop.f32.mrf.mxu0
        %v849 = vadd.f32 0.0, %v848
        %850 = vmatmul.bf16.gmra.mxu0 %v826
        %v851 = vpop.f32.mrf.mxu0
        %v852 = vadd.f32 0.0, %v851
        %v853 = vpop.f32.mrf.mxu0
        %v854 = vadd.f32 0.0, %v853
        %855 = vmatmul.bf16.gmra.mxu0 %v829
        %v856 = vpop.f32.mrf.mxu0
        %v857 = vadd.f32 0.0, %v856
        %v858 = vpop.f32.mrf.mxu0
        %v859 = vadd.f32 0.0, %v858
        %860 = vmatmul.bf16.gmra.mxu0 %v832
        %v861 = vpop.f32.mrf.mxu0
        %v862 = vadd.f32 0.0, %v861
        %v863 = vpop.f32.mrf.mxu0
        %v864 = vadd.f32 0.0, %v863
        %865 = vdwg.mxu0
        %s866 = scalar_lea.vmem %s2, 1
        %v867 = vld [vmem:[%s866] sm:$0x1]
        %v869 = vperm.slane %v867, 0
        %v871 = vmul.f32 %v847, %v869
        %v872 = vmul.f32 %v849, %v869
        %v873 = vmul.f32 %v852, %v869
        %v874 = vmul.f32 %v854, %v869
        %v875 = vmul.f32 %v857, %v869
        %v876 = vmul.f32 %v859, %v869
        %v877 = vmul.f32 %v862, %v869
        %v878 = vmul.f32 %v864, %v869
        %s879 = scalar_lea.vmem %s3, 1
        %v880 = vld [vmem:[%s879] sm:$0x1]
        %v882 = vperm.slane %v880, 0
        %v884 = vadd.f32 %v871, %v882
        %v885 = vadd.f32 %v872, %v882
        %v886 = vadd.f32 %v873, %v882
        %v887 = vadd.f32 %v874, %v882
        %v888 = vadd.f32 %v875, %v882
        %v889 = vadd.f32 %v876, %v882
        %v890 = vadd.f32 %v877, %v882
        %v891 = vadd.f32 %v878, %v882
        %v892 = vmax.f32 %v884, 0.0
        %v893 = vmax.f32 %v885, 0.0
        %v894 = vmax.f32 %v886, 0.0
        %v895 = vmax.f32 %v887, 0.0
        %v896 = vmax.f32 %v888, 0.0
        %v897 = vmax.f32 %v889, 0.0
        %v898 = vmax.f32 %v890, 0.0
        %v899 = vmax.f32 %v891, 0.0
        %v900 = vpack.c.bf16 %v893, %v892
        %v901 = vpack.c.bf16 %v895, %v894
        %v902 = vpack.c.bf16 %v897, %v896
        %v903 = vpack.c.bf16 %v899, %v898
        %s904 = scalar_lea.vmem %s4, 4
        %v905 = vld [vmem:[%s904] sm:$0xf]
        %vm906 = vcmask 64512
        %v908 = vsel %vm906, %v900, 0
        %v911 = vsel %vm906, %v901, 0
        %v914 = vsel %vm906, %v902, 0
        %v917 = vsel %vm906, %v903, 0
        %v920 = vsel %vm686, %v905, 0
        %922 = vmatpush.bf16.msra.mxu0 0
        %923 = vmatpush.bf16.msra.mxu0 0
        %924 = vmatpush.bf16.msra.mxu0 0
        %925 = vmatpush.bf16.msra.mxu0 0
        %926 = vmatpush.bf16.msra.mxu0 0
        %927 = vmatpush.bf16.msra.mxu0 0
        %928 = vmatpush.bf16.msra.mxu0 0
        %929 = vmatpush.bf16.msra.mxu0 %v920
        %930 = vmatmul.bf16.gmra.mxu0 %v908
        %v931 = vpop.f32.mrf.mxu0
        %v932 = vadd.f32 0.0, %v931
        %v933 = vpop.f32.mrf.mxu0
        %v934 = vadd.f32 0.0, %v933
        %935 = vmatmul.bf16.gmra.mxu0 %v911
        %v936 = vpop.f32.mrf.mxu0
        %v937 = vadd.f32 0.0, %v936
        %v938 = vpop.f32.mrf.mxu0
        %v939 = vadd.f32 0.0, %v938
        %940 = vmatmul.bf16.gmra.mxu0 %v914
        %v941 = vpop.f32.mrf.mxu0
        %v942 = vadd.f32 0.0, %v941
        %v943 = vpop.f32.mrf.mxu0
        %v944 = vadd.f32 0.0, %v943
        %945 = vmatmul.bf16.gmra.mxu0 %v917
        %v946 = vpop.f32.mrf.mxu0
        %v947 = vadd.f32 0.0, %v946
        %v948 = vpop.f32.mrf.mxu0
        %v949 = vadd.f32 0.0, %v948
        %950 = vdwg.mxu0
        %v952 = vsel %vm906, %v751, 0
        %v955 = vsel %vm906, %v752, 0
        %v958 = vsel %vm906, %v753, 0
        %v961 = vsel %vm906, %v754, 0
        %v964 = vsel %vm686, %v755, 0
        %966 = vmatpush.bf16.msra.mxu0 0
        %967 = vmatpush.bf16.msra.mxu0 0
        %968 = vmatpush.bf16.msra.mxu0 0
        %969 = vmatpush.bf16.msra.mxu0 0
        %970 = vmatpush.bf16.msra.mxu0 0
        %971 = vmatpush.bf16.msra.mxu0 0
        %972 = vmatpush.bf16.msra.mxu0 0
        %973 = vmatpush.bf16.msra.mxu0 %v964
        %974 = vmatmul.bf16.gmra.mxu0 %v952
        %v975 = vpop.f32.mrf.mxu0
        %v976 = vadd.f32 %v932, %v975
        %v977 = vpop.f32.mrf.mxu0
        %v978 = vadd.f32 %v934, %v977
        %979 = vmatmul.bf16.gmra.mxu0 %v955
        %v980 = vpop.f32.mrf.mxu0
        %v981 = vadd.f32 %v937, %v980
        %v982 = vpop.f32.mrf.mxu0
        %v983 = vadd.f32 %v939, %v982
        %984 = vmatmul.bf16.gmra.mxu0 %v958
        %v985 = vpop.f32.mrf.mxu0
        %v986 = vadd.f32 %v942, %v985
        %v987 = vpop.f32.mrf.mxu0
        %v988 = vadd.f32 %v944, %v987
        %989 = vmatmul.bf16.gmra.mxu0 %v961
        %v990 = vpop.f32.mrf.mxu0
        %v991 = vadd.f32 %v947, %v990
        %v992 = vpop.f32.mrf.mxu0
        %v993 = vadd.f32 %v949, %v992
        %994 = vdwg.mxu0
        %s995 = scalar_lea.vmem %s549, 64 [#allocation2]
        %v996 = vld [vmem:[%s995] sm:$0xf]
        %v997 = vld [vmem:[%s995 + $0x4] sm:$0xf]
        %v998 = vld [vmem:[%s995 + $0x8] sm:$0xf]
        %v999 = vld [vmem:[%s995 + $0xc] sm:$0xf]
        %v1000 = vld [vmem:[%s995 + $0x10] sm:$0xf]
        %v1001 = vld [vmem:[%s995 + $0x14] sm:$0xf]
        %v1002 = vld [vmem:[%s995 + $0x18] sm:$0xf]
        %v1003 = vld [vmem:[%s995 + $0x1c] sm:$0xf]
        %s1004 = scalar_lea.vmem %s1, 72
        %v1005 = vld [vmem:[%s1004] sm:$0xf]
        %v1006 = vld [vmem:[%s1004 + $0x4] sm:$0xf]
        %v1007 = vld [vmem:[%s1004 + $0x8] sm:$0xf]
        %v1008 = vld [vmem:[%s1004 + $0xc] sm:$0xf]
        %v1009 = vld [vmem:[%s1004 + $0x10] sm:$0xf]
        %v1010 = vld [vmem:[%s1004 + $0x14] sm:$0xf]
        %v1011 = vld [vmem:[%s1004 + $0x18] sm:$0xf]
        %v1012 = vld [vmem:[%s1004 + $0x1c] sm:$0xf]
        %v1013 = vld [vmem:[%s1004 + $0x20] sm:$0xf]
        %v1022 = vunpack.c.l.b16 %v996
        %v1023 = vunpack.c.l.b16 %v997
        %v1024 = vunpack.c.l.b16 %v998
        %v1025 = vunpack.c.l.b16 %v999
        %v1026 = vunpack.c.l.b16 %v1000
        %v1027 = vunpack.c.l.b16 %v1001
        %v1028 = vunpack.c.l.b16 %v1002
        %v1029 = vunpack.c.l.b16 %v1003
        %v1030 = vpack.c.b16 %v1023, %v1022
        %v1031 = vpack.c.b16 %v1025, %v1024
        %v1032 = vpack.c.b16 %v1027, %v1026
        %v1033 = vpack.c.b16 %v1029, %v1028
        %v1043 = vunpack.c.l.b16 %v1005
        %v1044 = vunpack.c.l.b16 %v1006
        %v1045 = vunpack.c.l.b16 %v1007
        %v1046 = vunpack.c.l.b16 %v1008
        %v1047 = vunpack.c.l.b16 %v1009
        %v1048 = vunpack.c.l.b16 %v1010
        %v1049 = vunpack.c.l.b16 %v1011
        %v1050 = vunpack.c.l.b16 %v1012
        %v1051 = vunpack.c.l.b16 %v1013
        %v1052 = vpack.c.b16 %v1044, %v1043
        %v1053 = vpack.c.b16 %v1046, %v1045
        %v1054 = vpack.c.b16 %v1048, %v1047
        %v1055 = vpack.c.b16 %v1050, %v1049
        %v1056 = vpack.c.b16 %v1051, %v1051
        %v1062 = vsel %vm673, %v1030, 0
        %v1065 = vsel %vm673, %v1031, 0
        %v1068 = vsel %vm673, %v1032, 0
        %v1071 = vsel %vm673, %v1033, 0
        %v1074 = vsel %vm686, %v1056, 0
        %1076 = vmatpush.bf16.msra.mxu0 0
        %1077 = vmatpush.bf16.msra.mxu0 0
        %1078 = vmatpush.bf16.msra.mxu0 0
        %1079 = vmatpush.bf16.msra.mxu0 %v1074
        %1080 = vmatpush.bf16.msra.mxu0 %v1055
        %1081 = vmatpush.bf16.msra.mxu0 %v1054
        %1082 = vmatpush.bf16.msra.mxu0 %v1053
        %1083 = vmatpush.bf16.msra.mxu0 %v1052
        %1084 = vmatmul.bf16.gmra.mxu0 %v1062
        %v1085 = vpop.f32.mrf.mxu0
        %v1086 = vadd.f32 0.0, %v1085
        %v1087 = vpop.f32.mrf.mxu0
        %v1088 = vadd.f32 0.0, %v1087
        %1089 = vmatmul.bf16.gmra.mxu0 %v1065
        %v1090 = vpop.f32.mrf.mxu0
        %v1091 = vadd.f32 0.0, %v1090
        %v1092 = vpop.f32.mrf.mxu0
        %v1093 = vadd.f32 0.0, %v1092
        %1094 = vmatmul.bf16.gmra.mxu0 %v1068
        %v1095 = vpop.f32.mrf.mxu0
        %v1096 = vadd.f32 0.0, %v1095
        %v1097 = vpop.f32.mrf.mxu0
        %v1098 = vadd.f32 0.0, %v1097
        %1099 = vmatmul.bf16.gmra.mxu0 %v1071
        %v1100 = vpop.f32.mrf.mxu0
        %v1101 = vadd.f32 0.0, %v1100
        %v1102 = vpop.f32.mrf.mxu0
        %v1103 = vadd.f32 0.0, %v1102
        %1104 = vdwg.mxu0
        %s1105 = scalar_lea.vmem %s2, 2
        %v1106 = vld [vmem:[%s1105] sm:$0x1]
        %v1108 = vperm.slane %v1106, 0
        %v1110 = vmul.f32 %v1086, %v1108
        %v1111 = vmul.f32 %v1088, %v1108
        %v1112 = vmul.f32 %v1091, %v1108
        %v1113 = vmul.f32 %v1093, %v1108
        %v1114 = vmul.f32 %v1096, %v1108
        %v1115 = vmul.f32 %v1098, %v1108
        %v1116 = vmul.f32 %v1101, %v1108
        %v1117 = vmul.f32 %v1103, %v1108
        %s1118 = scalar_lea.vmem %s3, 2
        %v1119 = vld [vmem:[%s1118] sm:$0x1]
        %v1121 = vperm.slane %v1119, 0
        %v1123 = vadd.f32 %v1110, %v1121
        %v1124 = vadd.f32 %v1111, %v1121
        %v1125 = vadd.f32 %v1112, %v1121
        %v1126 = vadd.f32 %v1113, %v1121
        %v1127 = vadd.f32 %v1114, %v1121
        %v1128 = vadd.f32 %v1115, %v1121
        %v1129 = vadd.f32 %v1116, %v1121
        %v1130 = vadd.f32 %v1117, %v1121
        %v1131 = vmax.f32 %v1123, 0.0
        %v1132 = vmax.f32 %v1124, 0.0
        %v1133 = vmax.f32 %v1125, 0.0
        %v1134 = vmax.f32 %v1126, 0.0
        %v1135 = vmax.f32 %v1127, 0.0
        %v1136 = vmax.f32 %v1128, 0.0
        %v1137 = vmax.f32 %v1129, 0.0
        %v1138 = vmax.f32 %v1130, 0.0
        %v1139 = vpack.c.bf16 %v1132, %v1131
        %v1140 = vpack.c.bf16 %v1134, %v1133
        %v1141 = vpack.c.bf16 %v1136, %v1135
        %v1142 = vpack.c.bf16 %v1138, %v1137
        %s1143 = scalar_lea.vmem %s4, 8
        %v1144 = vld [vmem:[%s1143] sm:$0xf]
        %v1146 = vsel %vm906, %v1139, 0
        %v1149 = vsel %vm906, %v1140, 0
        %v1152 = vsel %vm906, %v1141, 0
        %v1155 = vsel %vm906, %v1142, 0
        %v1158 = vsel %vm686, %v1144, 0
        %1160 = vmatpush.bf16.msra.mxu0 0
        %1161 = vmatpush.bf16.msra.mxu0 0
        %1162 = vmatpush.bf16.msra.mxu0 0
        %1163 = vmatpush.bf16.msra.mxu0 0
        %1164 = vmatpush.bf16.msra.mxu0 0
        %1165 = vmatpush.bf16.msra.mxu0 0
        %1166 = vmatpush.bf16.msra.mxu0 0
        %1167 = vmatpush.bf16.msra.mxu0 %v1158
        %1168 = vmatmul.bf16.gmra.mxu0 %v1146
        %v1169 = vpop.f32.mrf.mxu0
        %v1170 = vadd.f32 0.0, %v1169
        %v1171 = vpop.f32.mrf.mxu0
        %v1172 = vadd.f32 0.0, %v1171
        %1173 = vmatmul.bf16.gmra.mxu0 %v1149
        %v1174 = vpop.f32.mrf.mxu0
        %v1175 = vadd.f32 0.0, %v1174
        %v1176 = vpop.f32.mrf.mxu0
        %v1177 = vadd.f32 0.0, %v1176
        %1178 = vmatmul.bf16.gmra.mxu0 %v1152
        %v1179 = vpop.f32.mrf.mxu0
        %v1180 = vadd.f32 0.0, %v1179
        %v1181 = vpop.f32.mrf.mxu0
        %v1182 = vadd.f32 0.0, %v1181
        %1183 = vmatmul.bf16.gmra.mxu0 %v1155
        %v1184 = vpop.f32.mrf.mxu0
        %v1185 = vadd.f32 0.0, %v1184
        %v1186 = vpop.f32.mrf.mxu0
        %v1187 = vadd.f32 0.0, %v1186
        %1188 = vdwg.mxu0
        %v1189 = vadd.f32 %v976, %v1170
        %v1190 = vadd.f32 %v978, %v1172
        %v1191 = vadd.f32 %v981, %v1175
        %v1192 = vadd.f32 %v983, %v1177
        %v1193 = vadd.f32 %v986, %v1180
        %v1194 = vadd.f32 %v988, %v1182
        %v1195 = vadd.f32 %v991, %v1185
        %v1196 = vadd.f32 %v993, %v1187
        %s1197 = scalar_lea.vmem %s549, 96 [#allocation2]
        %v1198 = vld [vmem:[%s1197] sm:$0xf]
        %v1199 = vld [vmem:[%s1197 + $0x4] sm:$0xf]
        %v1200 = vld [vmem:[%s1197 + $0x8] sm:$0xf]
        %v1201 = vld [vmem:[%s1197 + $0xc] sm:$0xf]
        %v1202 = vld [vmem:[%s1197 + $0x10] sm:$0xf]
        %v1203 = vld [vmem:[%s1197 + $0x14] sm:$0xf]
        %v1204 = vld [vmem:[%s1197 + $0x18] sm:$0xf]
        %v1205 = vld [vmem:[%s1197 + $0x1c] sm:$0xf]
        %s1206 = scalar_lea.vmem %s1, 108
        %v1207 = vld [vmem:[%s1206] sm:$0xf]
        %v1208 = vld [vmem:[%s1206 + $0x4] sm:$0xf]
        %v1209 = vld [vmem:[%s1206 + $0x8] sm:$0xf]
        %v1210 = vld [vmem:[%s1206 + $0xc] sm:$0xf]
        %v1211 = vld [vmem:[%s1206 + $0x10] sm:$0xf]
        %v1212 = vld [vmem:[%s1206 + $0x14] sm:$0xf]
        %v1213 = vld [vmem:[%s1206 + $0x18] sm:$0xf]
        %v1214 = vld [vmem:[%s1206 + $0x1c] sm:$0xf]
        %v1215 = vld [vmem:[%s1206 + $0x20] sm:$0xf]
        %v1224 = vunpack.c.l.b16 %v1198
        %v1225 = vunpack.c.l.b16 %v1199
        %v1226 = vunpack.c.l.b16 %v1200
        %v1227 = vunpack.c.l.b16 %v1201
        %v1228 = vunpack.c.l.b16 %v1202
        %v1229 = vunpack.c.l.b16 %v1203
        %v1230 = vunpack.c.l.b16 %v1204
        %v1231 = vunpack.c.l.b16 %v1205
        %v1232 = vpack.c.b16 %v1225, %v1224
        %v1233 = vpack.c.b16 %v1227, %v1226
        %v1234 = vpack.c.b16 %v1229, %v1228
        %v1235 = vpack.c.b16 %v1231, %v1230
        %v1245 = vunpack.c.l.b16 %v1207
        %v1246 = vunpack.c.l.b16 %v1208
        %v1247 = vunpack.c.l.b16 %v1209
        %v1248 = vunpack.c.l.b16 %v1210
        %v1249 = vunpack.c.l.b16 %v1211
        %v1250 = vunpack.c.l.b16 %v1212
        %v1251 = vunpack.c.l.b16 %v1213
        %v1252 = vunpack.c.l.b16 %v1214
        %v1253 = vunpack.c.l.b16 %v1215
        %v1254 = vpack.c.b16 %v1246, %v1245
        %v1255 = vpack.c.b16 %v1248, %v1247
        %v1256 = vpack.c.b16 %v1250, %v1249
        %v1257 = vpack.c.b16 %v1252, %v1251
        %v1258 = vpack.c.b16 %v1253, %v1253
        %v1264 = vsel %vm673, %v1232, 0
        %v1267 = vsel %vm673, %v1233, 0
        %v1270 = vsel %vm673, %v1234, 0
        %v1273 = vsel %vm673, %v1235, 0
        %v1276 = vsel %vm686, %v1258, 0
        %1278 = vmatpush.bf16.msra.mxu0 0
        %1279 = vmatpush.bf16.msra.mxu0 0
        %1280 = vmatpush.bf16.msra.mxu0 0
        %1281 = vmatpush.bf16.msra.mxu0 %v1276
        %1282 = vmatpush.bf16.msra.mxu0 %v1257
        %1283 = vmatpush.bf16.msra.mxu0 %v1256
        %1284 = vmatpush.bf16.msra.mxu0 %v1255
        %1285 = vmatpush.bf16.msra.mxu0 %v1254
        %1286 = vmatmul.bf16.gmra.mxu0 %v1264
        %v1287 = vpop.f32.mrf.mxu0
        %v1288 = vadd.f32 0.0, %v1287
        %v1289 = vpop.f32.mrf.mxu0
        %v1290 = vadd.f32 0.0, %v1289
        %1291 = vmatmul.bf16.gmra.mxu0 %v1267
        %v1292 = vpop.f32.mrf.mxu0
        %v1293 = vadd.f32 0.0, %v1292
        %v1294 = vpop.f32.mrf.mxu0
        %v1295 = vadd.f32 0.0, %v1294
        %1296 = vmatmul.bf16.gmra.mxu0 %v1270
        %v1297 = vpop.f32.mrf.mxu0
        %v1298 = vadd.f32 0.0, %v1297
        %v1299 = vpop.f32.mrf.mxu0
        %v1300 = vadd.f32 0.0, %v1299
        %1301 = vmatmul.bf16.gmra.mxu0 %v1273
        %v1302 = vpop.f32.mrf.mxu0
        %v1303 = vadd.f32 0.0, %v1302
        %v1304 = vpop.f32.mrf.mxu0
        %v1305 = vadd.f32 0.0, %v1304
        %1306 = vdwg.mxu0
        %s1307 = scalar_lea.vmem %s2, 3
        %v1308 = vld [vmem:[%s1307] sm:$0x1]
        %v1310 = vperm.slane %v1308, 0
        %v1312 = vmul.f32 %v1288, %v1310
        %v1313 = vmul.f32 %v1290, %v1310
        %v1314 = vmul.f32 %v1293, %v1310
        %v1315 = vmul.f32 %v1295, %v1310
        %v1316 = vmul.f32 %v1298, %v1310
        %v1317 = vmul.f32 %v1300, %v1310
        %v1318 = vmul.f32 %v1303, %v1310
        %v1319 = vmul.f32 %v1305, %v1310
        %s1320 = scalar_lea.vmem %s3, 3
        %v1321 = vld [vmem:[%s1320] sm:$0x1]
        %v1323 = vperm.slane %v1321, 0
        %v1325 = vadd.f32 %v1312, %v1323
        %v1326 = vadd.f32 %v1313, %v1323
        %v1327 = vadd.f32 %v1314, %v1323
        %v1328 = vadd.f32 %v1315, %v1323
        %v1329 = vadd.f32 %v1316, %v1323
        %v1330 = vadd.f32 %v1317, %v1323
        %v1331 = vadd.f32 %v1318, %v1323
        %v1332 = vadd.f32 %v1319, %v1323
        %v1333 = vmax.f32 %v1325, 0.0
        %v1334 = vmax.f32 %v1326, 0.0
        %v1335 = vmax.f32 %v1327, 0.0
        %v1336 = vmax.f32 %v1328, 0.0
        %v1337 = vmax.f32 %v1329, 0.0
        %v1338 = vmax.f32 %v1330, 0.0
        %v1339 = vmax.f32 %v1331, 0.0
        %v1340 = vmax.f32 %v1332, 0.0
        %v1341 = vpack.c.bf16 %v1334, %v1333
        %v1342 = vpack.c.bf16 %v1336, %v1335
        %v1343 = vpack.c.bf16 %v1338, %v1337
        %v1344 = vpack.c.bf16 %v1340, %v1339
        %s1345 = scalar_lea.vmem %s4, 12
        %v1346 = vld [vmem:[%s1345] sm:$0xf]
        %v1348 = vsel %vm906, %v1341, 0
        %v1351 = vsel %vm906, %v1342, 0
        %v1354 = vsel %vm906, %v1343, 0
        %v1357 = vsel %vm906, %v1344, 0
        %v1360 = vsel %vm686, %v1346, 0
        %1362 = vmatpush.bf16.msra.mxu0 0
        %1363 = vmatpush.bf16.msra.mxu0 0
        %1364 = vmatpush.bf16.msra.mxu0 0
        %1365 = vmatpush.bf16.msra.mxu0 0
        %1366 = vmatpush.bf16.msra.mxu0 0
        %1367 = vmatpush.bf16.msra.mxu0 0
        %1368 = vmatpush.bf16.msra.mxu0 0
        %1369 = vmatpush.bf16.msra.mxu0 %v1360
        %1370 = vmatmul.bf16.gmra.mxu0 %v1348
        %v1371 = vpop.f32.mrf.mxu0
        %v1372 = vadd.f32 0.0, %v1371
        %v1373 = vpop.f32.mrf.mxu0
        %v1374 = vadd.f32 0.0, %v1373
        %1375 = vmatmul.bf16.gmra.mxu0 %v1351
        %v1376 = vpop.f32.mrf.mxu0
        %v1377 = vadd.f32 0.0, %v1376
        %v1378 = vpop.f32.mrf.mxu0
        %v1379 = vadd.f32 0.0, %v1378
        %1380 = vmatmul.bf16.gmra.mxu0 %v1354
        %v1381 = vpop.f32.mrf.mxu0
        %v1382 = vadd.f32 0.0, %v1381
        %v1383 = vpop.f32.mrf.mxu0
        %v1384 = vadd.f32 0.0, %v1383
        %1385 = vmatmul.bf16.gmra.mxu0 %v1357
        %v1386 = vpop.f32.mrf.mxu0
        %v1387 = vadd.f32 0.0, %v1386
        %v1388 = vpop.f32.mrf.mxu0
        %v1389 = vadd.f32 0.0, %v1388
        %1390 = vdwg.mxu0
        %v1391 = vadd.f32 %v1189, %v1372
        %v1392 = vadd.f32 %v1190, %v1374
        %v1393 = vadd.f32 %v1191, %v1377
        %v1394 = vadd.f32 %v1192, %v1379
        %v1395 = vadd.f32 %v1193, %v1382
        %v1396 = vadd.f32 %v1194, %v1384
        %v1397 = vadd.f32 %v1195, %v1387
        %v1398 = vadd.f32 %v1196, %v1389
        %v1399 = vld [vmem:[%s5] sm:$0x1]
        %v1401 = vperm.slane %v1399, 0
        %v1403 = vmul.f32 %v1391, %v1401
        %v1404 = vmul.f32 %v1392, %v1401
        %v1405 = vmul.f32 %v1393, %v1401
        %v1406 = vmul.f32 %v1394, %v1401
        %v1407 = vmul.f32 %v1395, %v1401
        %v1408 = vmul.f32 %v1396, %v1401
        %v1409 = vmul.f32 %v1397, %v1401
        %v1410 = vmul.f32 %v1398, %v1401
        %v1411 = vld [vmem:[%s6] sm:$0x1]
        %v1413 = vperm.slane %v1411, 0
        %v1415 = vadd.f32 %v1403, %v1413
        %v1416 = vadd.f32 %v1404, %v1413
        %v1417 = vadd.f32 %v1405, %v1413
        %v1418 = vadd.f32 %v1406, %v1413
        %v1419 = vadd.f32 %v1407, %v1413
        %v1420 = vadd.f32 %v1408, %v1413
        %v1421 = vadd.f32 %v1409, %v1413
        %v1422 = vadd.f32 %v1410, %v1413
        %v1423 = vld [vmem:[%s599] sm:$0xf]
        %v1424 = vld [vmem:[%s599 + $0x4] sm:$0xf]
        %v1425 = vld [vmem:[%s599 + $0x8] sm:$0xf]
        %v1426 = vld [vmem:[%s599 + $0xc] sm:$0xf]
        %v1427 = vld [vmem:[%s599 + $0x10] sm:$0xf]
        %v1428 = vld [vmem:[%s599 + $0x14] sm:$0xf]
        %v1429 = vld [vmem:[%s599 + $0x18] sm:$0xf]
        %v1430 = vld [vmem:[%s599 + $0x1c] sm:$0xf]
        %v1431 = vunpack.c.l.bf16 %v1423
        %v1432 = vunpack.c.l.bf16 %v1424
        %v1433 = vunpack.c.l.bf16 %v1425
        %v1434 = vunpack.c.l.bf16 %v1426
        %v1435 = vunpack.c.l.bf16 %v1427
        %v1436 = vunpack.c.l.bf16 %v1428
        %v1437 = vunpack.c.l.bf16 %v1429
        %v1438 = vunpack.c.l.bf16 %v1430
        %v1439 = vadd.f32 %v1415, %v1431
        %v1440 = vadd.f32 %v1416, %v1432
        %v1441 = vadd.f32 %v1417, %v1433
        %v1442 = vadd.f32 %v1418, %v1434
        %v1443 = vadd.f32 %v1419, %v1435
        %v1444 = vadd.f32 %v1420, %v1436
        %v1445 = vadd.f32 %v1421, %v1437
        %v1446 = vadd.f32 %v1422, %v1438
        %v1447 = vmax.f32 %v1439, 0.0
        %v1448 = vmax.f32 %v1440, 0.0
        %v1449 = vmax.f32 %v1441, 0.0
        %v1450 = vmax.f32 %v1442, 0.0
        %v1451 = vmax.f32 %v1443, 0.0
        %v1452 = vmax.f32 %v1444, 0.0
        %v1453 = vmax.f32 %v1445, 0.0
        %v1454 = vmax.f32 %v1446, 0.0
        %v1455 = vpack.c.bf16 %v1448, %v1447
        %v1456 = vpack.c.bf16 %v1450, %v1449
        %v1457 = vpack.c.bf16 %v1452, %v1451
        %v1458 = vpack.c.bf16 %v1454, %v1453
        %v1459 = vld [vmem:[%s8] sm:$0xff]
        %v1460 = vld [vmem:[%s8 + $0x8] sm:$0xff]
        %v1461 = vld [vmem:[%s8 + $0x10] sm:$0xff]
        %v1462 = vld [vmem:[%s8 + $0x18] sm:$0xff]
        %v1463 = vld [vmem:[%s8 + $0x20] sm:$0xff]
        %v1464 = vld [vmem:[%s8 + $0x28] sm:$0xff]
        %v1465 = vld [vmem:[%s8 + $0x30] sm:$0xff]
        %v1466 = vld [vmem:[%s8 + $0x38] sm:$0xff]
        %v1475 = vunpack.c.l.b16 %v1459
        %v1476 = vunpack.c.h.b16 %v1459
        %v1477 = vunpack.c.l.b16 %v1460
        %v1478 = vunpack.c.h.b16 %v1460
        %v1479 = vunpack.c.l.b16 %v1461
        %v1480 = vunpack.c.h.b16 %v1461
        %v1481 = vunpack.c.l.b16 %v1462
        %v1482 = vunpack.c.h.b16 %v1462
        %v1483 = vunpack.c.l.b16 %v1463
        %v1484 = vunpack.c.h.b16 %v1463
        %v1485 = vunpack.c.l.b16 %v1464
        %v1486 = vunpack.c.h.b16 %v1464
        %v1487 = vunpack.c.l.b16 %v1465
        %v1488 = vunpack.c.h.b16 %v1465
        %v1489 = vunpack.c.l.b16 %v1466
        %v1490 = vunpack.c.h.b16 %v1466
        %v1491 = vpack.c.b16 %v1477, %v1475
        %v1492 = vpack.c.b16 %v1478, %v1476
        %v1493 = vpack.c.b16 %v1481, %v1479
        %v1494 = vpack.c.b16 %v1482, %v1480
        %v1495 = vpack.c.b16 %v1485, %v1483
        %v1496 = vpack.c.b16 %v1486, %v1484
        %v1497 = vpack.c.b16 %v1489, %v1487
        %v1498 = vpack.c.b16 %v1490, %v1488
        %vm1507 = vcmask 523264
        %v1509 = vsel %vm1507, %v1455, 0
        %v1512 = vsel %vm1507, %v1456, 0
        %v1515 = vsel %vm1507, %v1457, 0
        %v1518 = vsel %vm1507, %v1458, 0
        %1520 = vmatpush.bf16.msra.mxu0 0
        %1521 = vmatpush.bf16.msra.mxu0 0
        %1522 = vmatpush.bf16.msra.mxu0 0
        %1523 = vmatpush.bf16.msra.mxu0 0
        %1524 = vmatpush.bf16.msra.mxu0 %v1497
        %1525 = vmatpush.bf16.msra.mxu0 %v1495
        %1526 = vmatpush.bf16.msra.mxu0 %v1493
        %1527 = vmatpush.bf16.msra.mxu0 %v1491
        %1528 = vmatmul.bf16.gmra.mxu0 %v1509
        %v1529 = vpop.f32.mrf.mxu0
        %v1530 = vadd.f32 0.0, %v1529
        %v1531 = vpop.f32.mrf.mxu0
        %v1532 = vadd.f32 0.0, %v1531
        %1533 = vmatmul.bf16.gmra.mxu0 %v1512
        %v1534 = vpop.f32.mrf.mxu0
        %v1535 = vadd.f32 0.0, %v1534
        %v1536 = vpop.f32.mrf.mxu0
        %v1537 = vadd.f32 0.0, %v1536
        %1538 = vmatmul.bf16.gmra.mxu0 %v1515
        %v1539 = vpop.f32.mrf.mxu0
        %v1540 = vadd.f32 0.0, %v1539
        %v1541 = vpop.f32.mrf.mxu0
        %v1542 = vadd.f32 0.0, %v1541
        %1543 = vmatmul.bf16.gmra.mxu0 %v1518
        %v1544 = vpop.f32.mrf.mxu0
        %v1545 = vadd.f32 0.0, %v1544
        %v1546 = vpop.f32.mrf.mxu0
        %v1547 = vadd.f32 0.0, %v1546
        %1548 = vdwg.mxu0
        %1549 = vmatpush.bf16.msra.mxu0 0
        %1550 = vmatpush.bf16.msra.mxu0 0
        %1551 = vmatpush.bf16.msra.mxu0 0
        %1552 = vmatpush.bf16.msra.mxu0 0
        %1553 = vmatpush.bf16.msra.mxu0 %v1498
        %1554 = vmatpush.bf16.msra.mxu0 %v1496
        %1555 = vmatpush.bf16.msra.mxu0 %v1494
        %1556 = vmatpush.bf16.msra.mxu0 %v1492
        %1557 = vmatmul.bf16.gmra.mxu0 %v1509
        %v1558 = vpop.f32.mrf.mxu0
        %v1559 = vadd.f32 0.0, %v1558
        %v1560 = vpop.f32.mrf.mxu0
        %v1561 = vadd.f32 0.0, %v1560
        %1562 = vmatmul.bf16.gmra.mxu0 %v1512
        %v1563 = vpop.f32.mrf.mxu0
        %v1564 = vadd.f32 0.0, %v1563
        %v1565 = vpop.f32.mrf.mxu0
        %v1566 = vadd.f32 0.0, %v1565
        %1567 = vmatmul.bf16.gmra.mxu0 %v1515
        %v1568 = vpop.f32.mrf.mxu0
        %v1569 = vadd.f32 0.0, %v1568
        %v1570 = vpop.f32.mrf.mxu0
        %v1571 = vadd.f32 0.0, %v1570
        %1572 = vmatmul.bf16.gmra.mxu0 %v1518
        %v1573 = vpop.f32.mrf.mxu0
        %v1574 = vadd.f32 0.0, %v1573
        %v1575 = vpop.f32.mrf.mxu0
        %v1576 = vadd.f32 0.0, %v1575
        %1577 = vdwg.mxu0
        %v1578 = vld [vmem:[%s9] sm:$0x3]
        %v1580 = vperm.slane %v1578, 0
        %v1581 = vperm.slane %v1578, 1
        %v1584 = vmul.f32 %v1530, %v1580
        %v1585 = vmul.f32 %v1559, %v1581
        %v1586 = vmul.f32 %v1532, %v1580
        %v1587 = vmul.f32 %v1561, %v1581
        %v1588 = vmul.f32 %v1535, %v1580
        %v1589 = vmul.f32 %v1564, %v1581
        %v1590 = vmul.f32 %v1537, %v1580
        %v1591 = vmul.f32 %v1566, %v1581
        %v1592 = vmul.f32 %v1540, %v1580
        %v1593 = vmul.f32 %v1569, %v1581
        %v1594 = vmul.f32 %v1542, %v1580
        %v1595 = vmul.f32 %v1571, %v1581
        %v1596 = vmul.f32 %v1545, %v1580
        %v1597 = vmul.f32 %v1574, %v1581
        %v1598 = vmul.f32 %v1547, %v1580
        %v1599 = vmul.f32 %v1576, %v1581
        %v1600 = vld [vmem:[%s10] sm:$0x3]
        %v1602 = vperm.slane %v1600, 0
        %v1603 = vperm.slane %v1600, 1
        %v1606 = vadd.f32 %v1584, %v1602
        %v1607 = vadd.f32 %v1585, %v1603
        %v1608 = vadd.f32 %v1586, %v1602
        %v1609 = vadd.f32 %v1587, %v1603
        %v1610 = vadd.f32 %v1588, %v1602
        %v1611 = vadd.f32 %v1589, %v1603
        %v1612 = vadd.f32 %v1590, %v1602
        %v1613 = vadd.f32 %v1591, %v1603
        %v1614 = vadd.f32 %v1592, %v1602
        %v1615 = vadd.f32 %v1593, %v1603
        %v1616 = vadd.f32 %v1594, %v1602
        %v1617 = vadd.f32 %v1595, %v1603
        %v1618 = vadd.f32 %v1596, %v1602
        %v1619 = vadd.f32 %v1597, %v1603
        %v1620 = vadd.f32 %v1598, %v1602
        %v1621 = vadd.f32 %v1599, %v1603
        %v1622 = vld [vmem:[%s11] sm:$0x3]
        %vm1623 = vcmp.gt.f32.partialorder %v1622, 0.0
        %v1624 = vmax.f32 %v1606, 0.0
        %v1625 = vmax.f32 %v1607, 0.0
        %v1626 = vmax.f32 %v1608, 0.0
        %v1627 = vmax.f32 %v1609, 0.0
        %v1628 = vmax.f32 %v1610, 0.0
        %v1629 = vmax.f32 %v1611, 0.0
        %v1630 = vmax.f32 %v1612, 0.0
        %v1631 = vmax.f32 %v1613, 0.0
        %v1632 = vmax.f32 %v1614, 0.0
        %v1633 = vmax.f32 %v1615, 0.0
        %v1634 = vmax.f32 %v1616, 0.0
        %v1635 = vmax.f32 %v1617, 0.0
        %v1636 = vmax.f32 %v1618, 0.0
        %v1637 = vmax.f32 %v1619, 0.0
        %v1638 = vmax.f32 %v1620, 0.0
        %v1639 = vmax.f32 %v1621, 0.0
        %v1640 = vsel %vm1623, 1, 0
        %v1641 = vperm.slane %v1640, 0
        %v1642 = vperm.slane %v1640, 1
        %vm1643 = vcmp.eq.s32.totalorder %v1641, 1
        %vm1644 = vcmp.eq.s32.totalorder %v1642, 1
        %v1645 = vsel %vm1643, %v1624, %v1606
        %v1646 = vsel %vm1644, %v1625, %v1607
        %v1647 = vsel %vm1643, %v1626, %v1608
        %v1648 = vsel %vm1644, %v1627, %v1609
        %v1649 = vsel %vm1643, %v1628, %v1610
        %v1650 = vsel %vm1644, %v1629, %v1611
        %v1651 = vsel %vm1643, %v1630, %v1612
        %v1652 = vsel %vm1644, %v1631, %v1613
        %v1653 = vsel %vm1643, %v1632, %v1614
        %v1654 = vsel %vm1644, %v1633, %v1615
        %v1655 = vsel %vm1643, %v1634, %v1616
        %v1656 = vsel %vm1644, %v1635, %v1617
        %v1657 = vsel %vm1643, %v1636, %v1618
        %v1658 = vsel %vm1644, %v1637, %v1619
        %v1659 = vsel %vm1643, %v1638, %v1620
        %v1660 = vsel %vm1644, %v1639, %v1621
        %v1661 = vpack.c.bf16 %v1646, %v1645
        %v1662 = vpack.c.bf16 %v1648, %v1647
        %v1663 = vpack.c.bf16 %v1650, %v1649
        %v1664 = vpack.c.bf16 %v1652, %v1651
        %v1665 = vpack.c.bf16 %v1654, %v1653
        %v1666 = vpack.c.bf16 %v1656, %v1655
        %v1667 = vpack.c.bf16 %v1658, %v1657
        %v1668 = vpack.c.bf16 %v1660, %v1659
        %1669 = vst [vmem:[%s606] sm:$0xff] %v1661
        %1670 = vst [vmem:[%s606 + $0x8] sm:$0xff] %v1662
        %1671 = vst [vmem:[%s606 + $0x10] sm:$0xff] %v1663
        %1672 = vst [vmem:[%s606 + $0x18] sm:$0xff] %v1664
        %1673 = vst [vmem:[%s606 + $0x20] sm:$0xff] %v1665
        %1674 = vst [vmem:[%s606 + $0x28] sm:$0xff] %v1666
        %1675 = vst [vmem:[%s606 + $0x30] sm:$0xff] %v1667
        %1676 = vst [vmem:[%s606 + $0x38] sm:$0xff] %v1668
        %s1677 = smul.u32 8, %s23
        %p1678 = scmp.lt.s32.totalorder %s1677, 15
        %s1679 = scalar_select %p1678, %s1677, 15
        %s1680 = smul.addr %s1679, 2
        %s1681 = smul.addr %s1680, 4
        %s1682 = scalar_lea.vmem %s12, %s1681
        // Predicated region
        $region110: #{resfacenext_forward.4} parent=104 // pred_check
          %p1683 = pneg %p303
        $region111: #{resfacenext_forward.4} parent=104 // pred_check_branch
          %1685 = sbr.rel (%p1683) target = $region113
        $region112: #{resfacenext_forward.4} parent=104 // pred_region
          %s1686 = smul.u32 8, %s23
        $region113: #{resfacenext_forward.4} parent=104 // pred_fallthru
          _
      $region105: #{resfacenext_forward.4} parent=5 // pred_fallthru
        _
      %p1687 = scmp.le.s32.totalorder 2, %s18
      // Predicated region
      $region114: #{resfacenext_forward.4} parent=5 // pred_check
        %p1688 = pneg %p1687
      $region115: #{resfacenext_forward.4} parent=5 // pred_check_branch
        %1690 = sbr.rel (%p1688) target = $region117
      $region116: #{resfacenext_forward.4} parent=5 // pred_region
        %s1691 = ssub.s32 %s18, 2
        // Predicated region
        $region118: #{resfacenext_forward.4} parent=116 // pred_check
          %p1692 = pneg %p309
        $region119: #{resfacenext_forward.4} parent=116 // pred_check_branch
          %1694 = sbr.rel (%p1692) target = $region121
        $region120: #{resfacenext_forward.4} parent=116 // pred_region
          %s1695 = smul.u32 8, %s24
          %p1696 = scmp.lt.s32.totalorder %s1695, 15
          %s1697 = scalar_select %p1696, %s1695, 15
          %s1698 = smul.addr %s1697, 2
          %s1699 = smul.addr %s1698, 4
          %s1700 = scalar_lea.vmem %s12, %s1699
        $region121: #{resfacenext_forward.4} parent=116 // pred_fallthru
          _
      $region117: #{resfacenext_forward.4} parent=5 // pred_fallthru
        _
    $region6: #{resfacenext_forward.4} parent=1 // loop_footer
      %s22 = sadd.s32 1, %s18
    $region7: #{resfacenext_forward.4} parent=1 // loop_footer_branch
      %17 = sbr.rel target = $region3
    $region8: #{resfacenext_forward.4} parent=1 // loop_exit
      _

// kernel: resfacenext_forward.5
$region0: #{resfacenext_forward.5}
  #allocation0 [shape = 'u32[]', space=smem, size = 0x4, offset = 0x4, fixed_abs, tag = 'smem constant byte address 0x4 - core index']
  #allocation1 [shape = 'u32[72,128]{1,0:T(1,128)}', space=vmem, size = 0x9000, scoped, tag = 'internal scratch']
  %s0 = inlined_call_operand.vmem [shape: bf16[4,32,144], index: 0, kind: input, shape index: {}]
  %s1 = inlined_call_operand.vmem [shape: bf16[4,144,16], index: 1, kind: input, shape index: {}]
  %s2 = inlined_call_operand.vmem [shape: f32[4,1,16], index: 2, kind: input, shape index: {}]
  %s3 = inlined_call_operand.vmem [shape: f32[4,1,16], index: 3, kind: input, shape index: {}]
  %s4 = inlined_call_operand.vmem [shape: bf16[4,16,128], index: 4, kind: input, shape index: {}]
  %s5 = inlined_call_operand.vmem [shape: f32[1,128], index: 5, kind: input, shape index: {}]
  %s6 = inlined_call_operand.vmem [shape: f32[1,128], index: 6, kind: input, shape index: {}]
  %s7 = inlined_call_operand.vmem [shape: bf16[32,128], index: 7, kind: input, shape index: {}]
  %s8 = inlined_call_operand.vmem [shape: bf16[2,32], index: 8, kind: input, shape index: {}]
  %s9 = inlined_call_operand.vmem [shape: bf16[128,128], index: 9, kind: input, shape index: {}]
  %s10 = inlined_call_operand.vmem [shape: f32[1,128], index: 10, kind: input, shape index: {}]
  %s11 = inlined_call_operand.hbm [shape: f32[2,128], index: 11, kind: output, shape index: {}]
  %s12 = sld [smem:[#allocation0]]
  $region54: #{resfacenext_forward.5} parent=0
    _
  %s14 = ssub.s32 1, %s12
  %s15 = scalar_select 0, %s14, %s12
  $region1: #{resfacenext_forward.5} parent=0
    #allocation2 [shape = 'u8[1024]{0}', space=vmem, size = 0x400, scoped, tag = 'output window, operand 0, single buffered']
    #allocation3 [shape = 's32[1]{0}', space=sflag, size = 0x4, scoped, tag = 'scoped memory for resfacenext_forward.5']
    %16 = vsyncpa [#allocation3], 0
    // Predicated region
    $region2: #{resfacenext_forward.5} parent=1 // pred_check
      _
    $region3: #{resfacenext_forward.5} parent=1 // pred_check_branch
      %18 = sbr.rel (0) target = $region5
    $region4: #{resfacenext_forward.5} parent=1 // pred_region
      _
    $region5: #{resfacenext_forward.5} parent=1 // pred_fallthru
      _
    // Predicated region
    $region6: #{resfacenext_forward.5} parent=1 // pred_check
      _
    $region7: #{resfacenext_forward.5} parent=1 // pred_check_branch
      %20 = sbr.rel (0) target = $region9
    $region8: #{resfacenext_forward.5} parent=1 // pred_region
      _
    $region9: #{resfacenext_forward.5} parent=1 // pred_fallthru
      _
    // Predicated region
    $region10: #{resfacenext_forward.5} parent=1 // pred_check
      _
    $region11: #{resfacenext_forward.5} parent=1 // pred_check_branch
      %22 = sbr.rel (0) target = $region13
    $region12: #{resfacenext_forward.5} parent=1 // pred_region
      _
    $region13: #{resfacenext_forward.5} parent=1 // pred_fallthru
      _
    // Predicated region
    $region14: #{resfacenext_forward.5} parent=1 // pred_check
      _
    $region15: #{resfacenext_forward.5} parent=1 // pred_check_branch
      %24 = sbr.rel (0) target = $region17
    $region16: #{resfacenext_forward.5} parent=1 // pred_region
      _
    $region17: #{resfacenext_forward.5} parent=1 // pred_fallthru
      _
    // Predicated region
    $region18: #{resfacenext_forward.5} parent=1 // pred_check
      _
    $region19: #{resfacenext_forward.5} parent=1 // pred_check_branch
      %26 = sbr.rel (0) target = $region21
    $region20: #{resfacenext_forward.5} parent=1 // pred_region
      _
    $region21: #{resfacenext_forward.5} parent=1 // pred_fallthru
      _
    // Predicated region
    $region22: #{resfacenext_forward.5} parent=1 // pred_check
      _
    $region23: #{resfacenext_forward.5} parent=1 // pred_check_branch
      %28 = sbr.rel (0) target = $region25
    $region24: #{resfacenext_forward.5} parent=1 // pred_region
      _
    $region25: #{resfacenext_forward.5} parent=1 // pred_fallthru
      _
    // Predicated region
    $region26: #{resfacenext_forward.5} parent=1 // pred_check
      _
    $region27: #{resfacenext_forward.5} parent=1 // pred_check_branch
      %30 = sbr.rel (0) target = $region29
    $region28: #{resfacenext_forward.5} parent=1 // pred_region
      _
    $region29: #{resfacenext_forward.5} parent=1 // pred_fallthru
      _
    // Predicated region
    $region30: #{resfacenext_forward.5} parent=1 // pred_check
      _
    $region31: #{resfacenext_forward.5} parent=1 // pred_check_branch
      %32 = sbr.rel (0) target = $region33
    $region32: #{resfacenext_forward.5} parent=1 // pred_region
      _
    $region33: #{resfacenext_forward.5} parent=1 // pred_fallthru
      _
    // Predicated region
    $region34: #{resfacenext_forward.5} parent=1 // pred_check
      _
    $region35: #{resfacenext_forward.5} parent=1 // pred_check_branch
      %34 = sbr.rel (0) target = $region37
    $region36: #{resfacenext_forward.5} parent=1 // pred_region
      _
    $region37: #{resfacenext_forward.5} parent=1 // pred_fallthru
      _
    // Predicated region
    $region38: #{resfacenext_forward.5} parent=1 // pred_check
      _
    $region39: #{resfacenext_forward.5} parent=1 // pred_check_branch
      %36 = sbr.rel (0) target = $region41
    $region40: #{resfacenext_forward.5} parent=1 // pred_region
      _
    $region41: #{resfacenext_forward.5} parent=1 // pred_fallthru
      _
    // Predicated region
    $region42: #{resfacenext_forward.5} parent=1 // pred_check
      _
    $region43: #{resfacenext_forward.5} parent=1 // pred_check_branch
      %38 = sbr.rel (0) target = $region45
    $region44: #{resfacenext_forward.5} parent=1 // pred_region
      _
    $region45: #{resfacenext_forward.5} parent=1 // pred_fallthru
      _
    %v40 = vld [vmem:[%s0] sm:$0xff]
    %v41 = vld [vmem:[%s0 + $0x8] sm:$0xff]
    %v42 = vld [vmem:[%s0 + $0x10] sm:$0xff]
    %v43 = vld [vmem:[%s0 + $0x18] sm:$0xff]
    %v44 = vld [vmem:[%s1] sm:$0xf]
    %v45 = vld [vmem:[%s1 + $0x4] sm:$0xf]
    %v46 = vld [vmem:[%s1 + $0x8] sm:$0xf]
    %v47 = vld [vmem:[%s1 + $0xc] sm:$0xf]
    %v48 = vld [vmem:[%s1 + $0x10] sm:$0xf]
    %v49 = vld [vmem:[%s1 + $0x14] sm:$0xf]
    %v50 = vld [vmem:[%s1 + $0x18] sm:$0xf]
    %v51 = vld [vmem:[%s1 + $0x1c] sm:$0xf]
    %v52 = vld [vmem:[%s1 + $0x20] sm:$0xf]
    %v53 = vld [vmem:[%s1 + $0x24] sm:$0xf]
    %v54 = vld [vmem:[%s1 + $0x28] sm:$0xf]
    %v55 = vld [vmem:[%s1 + $0x2c] sm:$0xf]
    %v56 = vld [vmem:[%s1 + $0x30] sm:$0xf]
    %v57 = vld [vmem:[%s1 + $0x34] sm:$0xf]
    %v58 = vld [vmem:[%s1 + $0x38] sm:$0xf]
    %v59 = vld [vmem:[%s1 + $0x3c] sm:$0xf]
    %v60 = vld [vmem:[%s1 + $0x40] sm:$0xf]
    %v61 = vld [vmem:[%s1 + $0x44] sm:$0xf]
    %v66 = vunpack.c.l.b16 %v40
    %v67 = vunpack.c.h.b16 %v40
    %v68 = vunpack.c.l.b16 %v41
    %v69 = vunpack.c.h.b16 %v41
    %v70 = vunpack.c.l.b16 %v42
    %v71 = vunpack.c.h.b16 %v42
    %v72 = vunpack.c.l.b16 %v43
    %v73 = vunpack.c.h.b16 %v43
    %v74 = vpack.c.b16 %v68, %v66
    %v75 = vpack.c.b16 %v69, %v67
    %v76 = vpack.c.b16 %v72, %v70
    %v77 = vpack.c.b16 %v73, %v71
    %v98 = vunpack.c.l.b16 %v44
    %v99 = vunpack.c.l.b16 %v45
    %v100 = vunpack.c.l.b16 %v46
    %v101 = vunpack.c.l.b16 %v47
    %v102 = vunpack.c.l.b16 %v48
    %v103 = vunpack.c.l.b16 %v49
    %v104 = vunpack.c.l.b16 %v50
    %v105 = vunpack.c.l.b16 %v51
    %v106 = vunpack.c.l.b16 %v52
    %v107 = vunpack.c.l.b16 %v53
    %v108 = vunpack.c.l.b16 %v54
    %v109 = vunpack.c.l.b16 %v55
    %v110 = vunpack.c.l.b16 %v56
    %v111 = vunpack.c.l.b16 %v57
    %v112 = vunpack.c.l.b16 %v58
    %v113 = vunpack.c.l.b16 %v59
    %v114 = vunpack.c.l.b16 %v60
    %v115 = vunpack.c.l.b16 %v61
    %v116 = vpack.c.b16 %v99, %v98
    %v117 = vpack.c.b16 %v101, %v100
    %v118 = vpack.c.b16 %v103, %v102
    %v119 = vpack.c.b16 %v105, %v104
    %v120 = vpack.c.b16 %v107, %v106
    %v121 = vpack.c.b16 %v109, %v108
    %v122 = vpack.c.b16 %v111, %v110
    %v123 = vpack.c.b16 %v113, %v112
    %v124 = vpack.c.b16 %v115, %v114
    %vm134 = vcmask 130048
    %v136 = vsel %vm134, %v75, 0
    %v139 = vsel %vm134, %v77, 0
    %141 = vmatpush.bf16.msra.mxu0 %v123
    %142 = vmatpush.bf16.msra.mxu0 %v122
    %143 = vmatpush.bf16.msra.mxu0 %v121
    %144 = vmatpush.bf16.msra.mxu0 %v120
    %145 = vmatpush.bf16.msra.mxu0 %v119
    %146 = vmatpush.bf16.msra.mxu0 %v118
    %147 = vmatpush.bf16.msra.mxu0 %v117
    %148 = vmatpush.bf16.msra.mxu0 %v116
    %149 = vmatmul.bf16.gmra.mxu0 %v74
    %v150 = vpop.f32.mrf.mxu0
    %v151 = vadd.f32 0.0, %v150
    %v152 = vpop.f32.mrf.mxu0
    %v153 = vadd.f32 0.0, %v152
    %154 = vmatmul.bf16.gmra.mxu0 %v76
    %v155 = vpop.f32.mrf.mxu0
    %v156 = vadd.f32 0.0, %v155
    %v157 = vpop.f32.mrf.mxu0
    %v158 = vadd.f32 0.0, %v157
    %159 = vdwg.mxu0
    %160 = vmatpush.bf16.msra.mxu0 0
    %161 = vmatpush.bf16.msra.mxu0 0
    %162 = vmatpush.bf16.msra.mxu0 0
    %163 = vmatpush.bf16.msra.mxu0 0
    %164 = vmatpush.bf16.msra.mxu0 0
    %165 = vmatpush.bf16.msra.mxu0 0
    %166 = vmatpush.bf16.msra.mxu0 0
    %167 = vmatpush.bf16.msra.mxu0 %v124
    %168 = vmatmul.bf16.gmra.mxu0 %v136
    %v169 = vpop.f32.mrf.mxu0
    %v170 = vadd.f32 %v151, %v169
    %v171 = vpop.f32.mrf.mxu0
    %v172 = vadd.f32 %v153, %v171
    %173 = vmatmul.bf16.gmra.mxu0 %v139
    %v174 = vpop.f32.mrf.mxu0
    %v175 = vadd.f32 %v156, %v174
    %v176 = vpop.f32.mrf.mxu0
    %v177 = vadd.f32 %v158, %v176
    %178 = vdwg.mxu0
    %v179 = vld [vmem:[%s2] sm:$0x1]
    %v181 = vperm.slane %v179, 0
    %v183 = vmul.f32 %v170, %v181
    %v184 = vmul.f32 %v172, %v181
    %v185 = vmul.f32 %v175, %v181
    %v186 = vmul.f32 %v177, %v181
    %v187 = vld [vmem:[%s3] sm:$0x1]
    %v189 = vperm.slane %v187, 0
    %v191 = vadd.f32 %v183, %v189
    %v192 = vadd.f32 %v184, %v189
    %v193 = vadd.f32 %v185, %v189
    %v194 = vadd.f32 %v186, %v189
    %v195 = vmax.f32 %v191, 0.0
    %v196 = vmax.f32 %v192, 0.0
    %v197 = vmax.f32 %v193, 0.0
    %v198 = vmax.f32 %v194, 0.0
    %v199 = vpack.c.bf16 %v196, %v195
    %v200 = vpack.c.bf16 %v198, %v197
    %v201 = vld [vmem:[%s4] sm:$0xf]
    %v202 = vld [vmem:[%s4 + $0x4] sm:$0xf]
    %s203 = scalar_lea.vmem %s0, 32
    %v204 = vld [vmem:[%s203] sm:$0xff]
    %v205 = vld [vmem:[%s203 + $0x8] sm:$0xff]
    %v206 = vld [vmem:[%s203 + $0x10] sm:$0xff]
    %v207 = vld [vmem:[%s203 + $0x18] sm:$0xff]
    %s208 = scalar_lea.vmem %s1, 72
    %v209 = vld [vmem:[%s208] sm:$0xf]
    %v210 = vld [vmem:[%s208 + $0x4] sm:$0xf]
    %v211 = vld [vmem:[%s208 + $0x8] sm:$0xf]
    %v212 = vld [vmem:[%s208 + $0xc] sm:$0xf]
    %v213 = vld [vmem:[%s208 + $0x10] sm:$0xf]
    %v214 = vld [vmem:[%s208 + $0x14] sm:$0xf]
    %v215 = vld [vmem:[%s208 + $0x18] sm:$0xf]
    %v216 = vld [vmem:[%s208 + $0x1c] sm:$0xf]
    %v217 = vld [vmem:[%s208 + $0x20] sm:$0xf]
    %v218 = vld [vmem:[%s208 + $0x24] sm:$0xf]
    %v219 = vld [vmem:[%s208 + $0x28] sm:$0xf]
    %v220 = vld [vmem:[%s208 + $0x2c] sm:$0xf]
    %v221 = vld [vmem:[%s208 + $0x30] sm:$0xf]
    %v222 = vld [vmem:[%s208 + $0x34] sm:$0xf]
    %v223 = vld [vmem:[%s208 + $0x38] sm:$0xf]
    %v224 = vld [vmem:[%s208 + $0x3c] sm:$0xf]
    %v225 = vld [vmem:[%s208 + $0x40] sm:$0xf]
    %v226 = vld [vmem:[%s208 + $0x44] sm:$0xf]
    %v231 = vunpack.c.l.b16 %v204
    %v232 = vunpack.c.h.b16 %v204
    %v233 = vunpack.c.l.b16 %v205
    %v234 = vunpack.c.h.b16 %v205
    %v235 = vunpack.c.l.b16 %v206
    %v236 = vunpack.c.h.b16 %v206
    %v237 = vunpack.c.l.b16 %v207
    %v238 = vunpack.c.h.b16 %v207
    %v239 = vpack.c.b16 %v233, %v231
    %v240 = vpack.c.b16 %v234, %v232
    %v241 = vpack.c.b16 %v237, %v235
    %v242 = vpack.c.b16 %v238, %v236
    %v263 = vunpack.c.l.b16 %v209
    %v264 = vunpack.c.l.b16 %v210
    %v265 = vunpack.c.l.b16 %v211
    %v266 = vunpack.c.l.b16 %v212
    %v267 = vunpack.c.l.b16 %v213
    %v268 = vunpack.c.l.b16 %v214
    %v269 = vunpack.c.l.b16 %v215
    %v270 = vunpack.c.l.b16 %v216
    %v271 = vunpack.c.l.b16 %v217
    %v272 = vunpack.c.l.b16 %v218
    %v273 = vunpack.c.l.b16 %v219
    %v274 = vunpack.c.l.b16 %v220
    %v275 = vunpack.c.l.b16 %v221
    %v276 = vunpack.c.l.b16 %v222
    %v277 = vunpack.c.l.b16 %v223
    %v278 = vunpack.c.l.b16 %v224
    %v279 = vunpack.c.l.b16 %v225
    %v280 = vunpack.c.l.b16 %v226
    %v281 = vpack.c.b16 %v264, %v263
    %v282 = vpack.c.b16 %v266, %v265
    %v283 = vpack.c.b16 %v268, %v267
    %v284 = vpack.c.b16 %v270, %v269
    %v285 = vpack.c.b16 %v272, %v271
    %v286 = vpack.c.b16 %v274, %v273
    %v287 = vpack.c.b16 %v276, %v275
    %v288 = vpack.c.b16 %v278, %v277
    %v289 = vpack.c.b16 %v280, %v279
    %v300 = vsel %vm134, %v240, 0
    %v303 = vsel %vm134, %v242, 0
    %305 = vmatpush.bf16.msra.mxu0 %v288
    %306 = vmatpush.bf16.msra.mxu0 %v287
    %307 = vmatpush.bf16.msra.mxu0 %v286
    %308 = vmatpush.bf16.msra.mxu0 %v285
    %309 = vmatpush.bf16.msra.mxu0 %v284
    %310 = vmatpush.bf16.msra.mxu0 %v283
    %311 = vmatpush.bf16.msra.mxu0 %v282
    %312 = vmatpush.bf16.msra.mxu0 %v281
    %313 = vmatmul.bf16.gmra.mxu0 %v239
    %v314 = vpop.f32.mrf.mxu0
    %v315 = vadd.f32 0.0, %v314
    %v316 = vpop.f32.mrf.mxu0
    %v317 = vadd.f32 0.0, %v316
    %318 = vmatmul.bf16.gmra.mxu0 %v241
    %v319 = vpop.f32.mrf.mxu0
    %v320 = vadd.f32 0.0, %v319
    %v321 = vpop.f32.mrf.mxu0
    %v322 = vadd.f32 0.0, %v321
    %323 = vdwg.mxu0
    %324 = vmatpush.bf16.msra.mxu0 0
    %325 = vmatpush.bf16.msra.mxu0 0
    %326 = vmatpush.bf16.msra.mxu0 0
    %327 = vmatpush.bf16.msra.mxu0 0
    %328 = vmatpush.bf16.msra.mxu0 0
    %329 = vmatpush.bf16.msra.mxu0 0
    %330 = vmatpush.bf16.msra.mxu0 0
    %331 = vmatpush.bf16.msra.mxu0 %v289
    %332 = vmatmul.bf16.gmra.mxu0 %v300
    %v333 = vpop.f32.mrf.mxu0
    %v334 = vadd.f32 %v315, %v333
    %v335 = vpop.f32.mrf.mxu0
    %v336 = vadd.f32 %v317, %v335
    %337 = vmatmul.bf16.gmra.mxu0 %v303
    %v338 = vpop.f32.mrf.mxu0
    %v339 = vadd.f32 %v320, %v338
    %v340 = vpop.f32.mrf.mxu0
    %v341 = vadd.f32 %v322, %v340
    %342 = vdwg.mxu0
    %s343 = scalar_lea.vmem %s2, 1
    %v344 = vld [vmem:[%s343] sm:$0x1]
    %v346 = vperm.slane %v344, 0
    %v348 = vmul.f32 %v334, %v346
    %v349 = vmul.f32 %v336, %v346
    %v350 = vmul.f32 %v339, %v346
    %v351 = vmul.f32 %v341, %v346
    %s352 = scalar_lea.vmem %s3, 1
    %v353 = vld [vmem:[%s352] sm:$0x1]
    %v355 = vperm.slane %v353, 0
    %v357 = vadd.f32 %v348, %v355
    %v358 = vadd.f32 %v349, %v355
    %v359 = vadd.f32 %v350, %v355
    %v360 = vadd.f32 %v351, %v355
    %v361 = vmax.f32 %v357, 0.0
    %v362 = vmax.f32 %v358, 0.0
    %v363 = vmax.f32 %v359, 0.0
    %v364 = vmax.f32 %v360, 0.0
    %v365 = vpack.c.bf16 %v362, %v361
    %v366 = vpack.c.bf16 %v364, %v363
    %s367 = scalar_lea.vmem %s4, 8
    %v368 = vld [vmem:[%s367] sm:$0xf]
    %v369 = vld [vmem:[%s367 + $0x4] sm:$0xf]
    %v372 = vunpack.c.l.b16 %v368
    %v373 = vunpack.c.l.b16 %v369
    %v374 = vpack.c.b16 %v373, %v372
    %v377 = vsel %vm134, %v365, 0
    %v380 = vsel %vm134, %v366, 0
    %382 = vmatpush.bf16.msra.mxu0 0
    %383 = vmatpush.bf16.msra.mxu0 0
    %384 = vmatpush.bf16.msra.mxu0 0
    %385 = vmatpush.bf16.msra.mxu0 0
    %386 = vmatpush.bf16.msra.mxu0 0
    %387 = vmatpush.bf16.msra.mxu0 0
    %388 = vmatpush.bf16.msra.mxu0 0
    %389 = vmatpush.bf16.msra.mxu0 %v374
    %390 = vmatmul.bf16.gmra.mxu0 %v377
    %v391 = vpop.f32.mrf.mxu0
    %v392 = vadd.f32 0.0, %v391
    %v393 = vpop.f32.mrf.mxu0
    %v394 = vadd.f32 0.0, %v393
    %395 = vmatmul.bf16.gmra.mxu0 %v380
    %v396 = vpop.f32.mrf.mxu0
    %v397 = vadd.f32 0.0, %v396
    %v398 = vpop.f32.mrf.mxu0
    %v399 = vadd.f32 0.0, %v398
    %400 = vdwg.mxu0
    %v403 = vunpack.c.l.b16 %v201
    %v404 = vunpack.c.l.b16 %v202
    %v405 = vpack.c.b16 %v404, %v403
    %v408 = vsel %vm134, %v199, 0
    %v411 = vsel %vm134, %v200, 0
    %413 = vmatpush.bf16.msra.mxu0 0
    %414 = vmatpush.bf16.msra.mxu0 0
    %415 = vmatpush.bf16.msra.mxu0 0
    %416 = vmatpush.bf16.msra.mxu0 0
    %417 = vmatpush.bf16.msra.mxu0 0
    %418 = vmatpush.bf16.msra.mxu0 0
    %419 = vmatpush.bf16.msra.mxu0 0
    %420 = vmatpush.bf16.msra.mxu0 %v405
    %421 = vmatmul.bf16.gmra.mxu0 %v408
    %v422 = vpop.f32.mrf.mxu0
    %v423 = vadd.f32 %v392, %v422
    %v424 = vpop.f32.mrf.mxu0
    %v425 = vadd.f32 %v394, %v424
    %426 = vmatmul.bf16.gmra.mxu0 %v411
    %v427 = vpop.f32.mrf.mxu0
    %v428 = vadd.f32 %v397, %v427
    %v429 = vpop.f32.mrf.mxu0
    %v430 = vadd.f32 %v399, %v429
    %431 = vdwg.mxu0
    %s432 = scalar_lea.vmem %s0, 64
    %v433 = vld [vmem:[%s432] sm:$0xff]
    %v434 = vld [vmem:[%s432 + $0x8] sm:$0xff]
    %v435 = vld [vmem:[%s432 + $0x10] sm:$0xff]
    %v436 = vld [vmem:[%s432 + $0x18] sm:$0xff]
    %s437 = scalar_lea.vmem %s1, 144
    %v438 = vld [vmem:[%s437] sm:$0xf]
    %v439 = vld [vmem:[%s437 + $0x4] sm:$0xf]
    %v440 = vld [vmem:[%s437 + $0x8] sm:$0xf]
    %v441 = vld [vmem:[%s437 + $0xc] sm:$0xf]
    %v442 = vld [vmem:[%s437 + $0x10] sm:$0xf]
    %v443 = vld [vmem:[%s437 + $0x14] sm:$0xf]
    %v444 = vld [vmem:[%s437 + $0x18] sm:$0xf]
    %v445 = vld [vmem:[%s437 + $0x1c] sm:$0xf]
    %v446 = vld [vmem:[%s437 + $0x20] sm:$0xf]
    %v447 = vld [vmem:[%s437 + $0x24] sm:$0xf]
    %v448 = vld [vmem:[%s437 + $0x28] sm:$0xf]
    %v449 = vld [vmem:[%s437 + $0x2c] sm:$0xf]
    %v450 = vld [vmem:[%s437 + $0x30] sm:$0xf]
    %v451 = vld [vmem:[%s437 + $0x34] sm:$0xf]
    %v452 = vld [vmem:[%s437 + $0x38] sm:$0xf]
    %v453 = vld [vmem:[%s437 + $0x3c] sm:$0xf]
    %v454 = vld [vmem:[%s437 + $0x40] sm:$0xf]
    %v455 = vld [vmem:[%s437 + $0x44] sm:$0xf]
    %v460 = vunpack.c.l.b16 %v433
    %v461 = vunpack.c.h.b16 %v433
    %v462 = vunpack.c.l.b16 %v434
    %v463 = vunpack.c.h.b16 %v434
    %v464 = vunpack.c.l.b16 %v435
    %v465 = vunpack.c.h.b16 %v435
    %v466 = vunpack.c.l.b16 %v436
    %v467 = vunpack.c.h.b16 %v436
    %v468 = vpack.c.b16 %v462, %v460
    %v469 = vpack.c.b16 %v463, %v461
    %v470 = vpack.c.b16 %v466, %v464
    %v471 = vpack.c.b16 %v467, %v465
    %v492 = vunpack.c.l.b16 %v438
    %v493 = vunpack.c.l.b16 %v439
    %v494 = vunpack.c.l.b16 %v440
    %v495 = vunpack.c.l.b16 %v441
    %v496 = vunpack.c.l.b16 %v442
    %v497 = vunpack.c.l.b16 %v443
    %v498 = vunpack.c.l.b16 %v444
    %v499 = vunpack.c.l.b16 %v445
    %v500 = vunpack.c.l.b16 %v446
    %v501 = vunpack.c.l.b16 %v447
    %v502 = vunpack.c.l.b16 %v448
    %v503 = vunpack.c.l.b16 %v449
    %v504 = vunpack.c.l.b16 %v450
    %v505 = vunpack.c.l.b16 %v451
    %v506 = vunpack.c.l.b16 %v452
    %v507 = vunpack.c.l.b16 %v453
    %v508 = vunpack.c.l.b16 %v454
    %v509 = vunpack.c.l.b16 %v455
    %v510 = vpack.c.b16 %v493, %v492
    %v511 = vpack.c.b16 %v495, %v494
    %v512 = vpack.c.b16 %v497, %v496
    %v513 = vpack.c.b16 %v499, %v498
    %v514 = vpack.c.b16 %v501, %v500
    %v515 = vpack.c.b16 %v503, %v502
    %v516 = vpack.c.b16 %v505, %v504
    %v517 = vpack.c.b16 %v507, %v506
    %v518 = vpack.c.b16 %v509, %v508
    %v529 = vsel %vm134, %v469, 0
    %v532 = vsel %vm134, %v471, 0
    %534 = vmatpush.bf16.msra.mxu0 %v517
    %535 = vmatpush.bf16.msra.mxu0 %v516
    %536 = vmatpush.bf16.msra.mxu0 %v515
    %537 = vmatpush.bf16.msra.mxu0 %v514
    %538 = vmatpush.bf16.msra.mxu0 %v513
    %539 = vmatpush.bf16.msra.mxu0 %v512
    %540 = vmatpush.bf16.msra.mxu0 %v511
    %541 = vmatpush.bf16.msra.mxu0 %v510
    %542 = vmatmul.bf16.gmra.mxu0 %v468
    %v543 = vpop.f32.mrf.mxu0
    %v544 = vadd.f32 0.0, %v543
    %v545 = vpop.f32.mrf.mxu0
    %v546 = vadd.f32 0.0, %v545
    %547 = vmatmul.bf16.gmra.mxu0 %v470
    %v548 = vpop.f32.mrf.mxu0
    %v549 = vadd.f32 0.0, %v548
    %v550 = vpop.f32.mrf.mxu0
    %v551 = vadd.f32 0.0, %v550
    %552 = vdwg.mxu0
    %553 = vmatpush.bf16.msra.mxu0 0
    %554 = vmatpush.bf16.msra.mxu0 0
    %555 = vmatpush.bf16.msra.mxu0 0
    %556 = vmatpush.bf16.msra.mxu0 0
    %557 = vmatpush.bf16.msra.mxu0 0
    %558 = vmatpush.bf16.msra.mxu0 0
    %559 = vmatpush.bf16.msra.mxu0 0
    %560 = vmatpush.bf16.msra.mxu0 %v518
    %561 = vmatmul.bf16.gmra.mxu0 %v529
    %v562 = vpop.f32.mrf.mxu0
    %v563 = vadd.f32 %v544, %v562
    %v564 = vpop.f32.mrf.mxu0
    %v565 = vadd.f32 %v546, %v564
    %566 = vmatmul.bf16.gmra.mxu0 %v532
    %v567 = vpop.f32.mrf.mxu0
    %v568 = vadd.f32 %v549, %v567
    %v569 = vpop.f32.mrf.mxu0
    %v570 = vadd.f32 %v551, %v569
    %571 = vdwg.mxu0
    %s572 = scalar_lea.vmem %s2, 2
    %v573 = vld [vmem:[%s572] sm:$0x1]
    %v575 = vperm.slane %v573, 0
    %v577 = vmul.f32 %v563, %v575
    %v578 = vmul.f32 %v565, %v575
    %v579 = vmul.f32 %v568, %v575
    %v580 = vmul.f32 %v570, %v575
    %s581 = scalar_lea.vmem %s3, 2
    %v582 = vld [vmem:[%s581] sm:$0x1]
    %v584 = vperm.slane %v582, 0
    %v586 = vadd.f32 %v577, %v584
    %v587 = vadd.f32 %v578, %v584
    %v588 = vadd.f32 %v579, %v584
    %v589 = vadd.f32 %v580, %v584
    %v590 = vmax.f32 %v586, 0.0
    %v591 = vmax.f32 %v587, 0.0
    %v592 = vmax.f32 %v588, 0.0
    %v593 = vmax.f32 %v589, 0.0
    %v594 = vpack.c.bf16 %v591, %v590
    %v595 = vpack.c.bf16 %v593, %v592
    %s596 = scalar_lea.vmem %s4, 16
    %v597 = vld [vmem:[%s596] sm:$0xf]
    %v598 = vld [vmem:[%s596 + $0x4] sm:$0xf]
    %v601 = vunpack.c.l.b16 %v597
    %v602 = vunpack.c.l.b16 %v598
    %v603 = vpack.c.b16 %v602, %v601
    %v606 = vsel %vm134, %v594, 0
    %v609 = vsel %vm134, %v595, 0
    %611 = vmatpush.bf16.msra.mxu0 0
    %612 = vmatpush.bf16.msra.mxu0 0
    %613 = vmatpush.bf16.msra.mxu0 0
    %614 = vmatpush.bf16.msra.mxu0 0
    %615 = vmatpush.bf16.msra.mxu0 0
    %616 = vmatpush.bf16.msra.mxu0 0
    %617 = vmatpush.bf16.msra.mxu0 0
    %618 = vmatpush.bf16.msra.mxu0 %v603
    %619 = vmatmul.bf16.gmra.mxu0 %v606
    %v620 = vpop.f32.mrf.mxu0
    %v621 = vadd.f32 0.0, %v620
    %v622 = vpop.f32.mrf.mxu0
    %v623 = vadd.f32 0.0, %v622
    %624 = vmatmul.bf16.gmra.mxu0 %v609
    %v625 = vpop.f32.mrf.mxu0
    %v626 = vadd.f32 0.0, %v625
    %v627 = vpop.f32.mrf.mxu0
    %v628 = vadd.f32 0.0, %v627
    %629 = vdwg.mxu0
    %v630 = vadd.f32 %v423, %v621
    %v631 = vadd.f32 %v425, %v623
    %v632 = vadd.f32 %v428, %v626
    %v633 = vadd.f32 %v430, %v628
    %s634 = scalar_lea.vmem %s0, 96
    %v635 = vld [vmem:[%s634] sm:$0xff]
    %v636 = vld [vmem:[%s634 + $0x8] sm:$0xff]
    %v637 = vld [vmem:[%s634 + $0x10] sm:$0xff]
    %v638 = vld [vmem:[%s634 + $0x18] sm:$0xff]
    %s639 = scalar_lea.vmem %s1, 216
    %v640 = vld [vmem:[%s639] sm:$0xf]
    %v641 = vld [vmem:[%s639 + $0x4] sm:$0xf]
    %v642 = vld [vmem:[%s639 + $0x8] sm:$0xf]
    %v643 = vld [vmem:[%s639 + $0xc] sm:$0xf]
    %v644 = vld [vmem:[%s639 + $0x10] sm:$0xf]
    %v645 = vld [vmem:[%s639 + $0x14] sm:$0xf]
    %v646 = vld [vmem:[%s639 + $0x18] sm:$0xf]
    %v647 = vld [vmem:[%s639 + $0x1c] sm:$0xf]
    %v648 = vld [vmem:[%s639 + $0x20] sm:$0xf]
    %v649 = vld [vmem:[%s639 + $0x24] sm:$0xf]
    %v650 = vld [vmem:[%s639 + $0x28] sm:$0xf]
    %v651 = vld [vmem:[%s639 + $0x2c] sm:$0xf]
    %v652 = vld [vmem:[%s639 + $0x30] sm:$0xf]
    %v653 = vld [vmem:[%s639 + $0x34] sm:$0xf]
    %v654 = vld [vmem:[%s639 + $0x38] sm:$0xf]
    %v655 = vld [vmem:[%s639 + $0x3c] sm:$0xf]
    %v656 = vld [vmem:[%s639 + $0x40] sm:$0xf]
    %v657 = vld [vmem:[%s639 + $0x44] sm:$0xf]
    %v662 = vunpack.c.l.b16 %v635
    %v663 = vunpack.c.h.b16 %v635
    %v664 = vunpack.c.l.b16 %v636
    %v665 = vunpack.c.h.b16 %v636
    %v666 = vunpack.c.l.b16 %v637
    %v667 = vunpack.c.h.b16 %v637
    %v668 = vunpack.c.l.b16 %v638
    %v669 = vunpack.c.h.b16 %v638
    %v670 = vpack.c.b16 %v664, %v662
    %v671 = vpack.c.b16 %v665, %v663
    %v672 = vpack.c.b16 %v668, %v666
    %v673 = vpack.c.b16 %v669, %v667
    %v694 = vunpack.c.l.b16 %v640
    %v695 = vunpack.c.l.b16 %v641
    %v696 = vunpack.c.l.b16 %v642
    %v697 = vunpack.c.l.b16 %v643
    %v698 = vunpack.c.l.b16 %v644
    %v699 = vunpack.c.l.b16 %v645
    %v700 = vunpack.c.l.b16 %v646
    %v701 = vunpack.c.l.b16 %v647
    %v702 = vunpack.c.l.b16 %v648
    %v703 = vunpack.c.l.b16 %v649
    %v704 = vunpack.c.l.b16 %v650
    %v705 = vunpack.c.l.b16 %v651
    %v706 = vunpack.c.l.b16 %v652
    %v707 = vunpack.c.l.b16 %v653
    %v708 = vunpack.c.l.b16 %v654
    %v709 = vunpack.c.l.b16 %v655
    %v710 = vunpack.c.l.b16 %v656
    %v711 = vunpack.c.l.b16 %v657
    %v712 = vpack.c.b16 %v695, %v694
    %v713 = vpack.c.b16 %v697, %v696
    %v714 = vpack.c.b16 %v699, %v698
    %v715 = vpack.c.b16 %v701, %v700
    %v716 = vpack.c.b16 %v703, %v702
    %v717 = vpack.c.b16 %v705, %v704
    %v718 = vpack.c.b16 %v707, %v706
    %v719 = vpack.c.b16 %v709, %v708
    %v720 = vpack.c.b16 %v711, %v710
    %v731 = vsel %vm134, %v671, 0
    %v734 = vsel %vm134, %v673, 0
    %736 = vmatpush.bf16.msra.mxu0 %v719
    %737 = vmatpush.bf16.msra.mxu0 %v718
    %738 = vmatpush.bf16.msra.mxu0 %v717
    %739 = vmatpush.bf16.msra.mxu0 %v716
    %740 = vmatpush.bf16.msra.mxu0 %v715
    %741 = vmatpush.bf16.msra.mxu0 %v714
    %742 = vmatpush.bf16.msra.mxu0 %v713
    %743 = vmatpush.bf16.msra.mxu0 %v712
    %744 = vmatmul.bf16.gmra.mxu0 %v670
    %v745 = vpop.f32.mrf.mxu0
    %v746 = vadd.f32 0.0, %v745
    %v747 = vpop.f32.mrf.mxu0
    %v748 = vadd.f32 0.0, %v747
    %749 = vmatmul.bf16.gmra.mxu0 %v672
    %v750 = vpop.f32.mrf.mxu0
    %v751 = vadd.f32 0.0, %v750
    %v752 = vpop.f32.mrf.mxu0
    %v753 = vadd.f32 0.0, %v752
    %754 = vdwg.mxu0
    %755 = vmatpush.bf16.msra.mxu0 0
    %756 = vmatpush.bf16.msra.mxu0 0
    %757 = vmatpush.bf16.msra.mxu0 0
    %758 = vmatpush.bf16.msra.mxu0 0
    %759 = vmatpush.bf16.msra.mxu0 0
    %760 = vmatpush.bf16.msra.mxu0 0
    %761 = vmatpush.bf16.msra.mxu0 0
    %762 = vmatpush.bf16.msra.mxu0 %v720
    %763 = vmatmul.bf16.gmra.mxu0 %v731
    %v764 = vpop.f32.mrf.mxu0
    %v765 = vadd.f32 %v746, %v764
    %v766 = vpop.f32.mrf.mxu0
    %v767 = vadd.f32 %v748, %v766
    %768 = vmatmul.bf16.gmra.mxu0 %v734
    %v769 = vpop.f32.mrf.mxu0
    %v770 = vadd.f32 %v751, %v769
    %v771 = vpop.f32.mrf.mxu0
    %v772 = vadd.f32 %v753, %v771
    %773 = vdwg.mxu0
    %s774 = scalar_lea.vmem %s2, 3
    %v775 = vld [vmem:[%s774] sm:$0x1]
    %v777 = vperm.slane %v775, 0
    %v779 = vmul.f32 %v765, %v777
    %v780 = vmul.f32 %v767, %v777
    %v781 = vmul.f32 %v770, %v777
    %v782 = vmul.f32 %v772, %v777
    %s783 = scalar_lea.vmem %s3, 3
    %v784 = vld [vmem:[%s783] sm:$0x1]
    %v786 = vperm.slane %v784, 0
    %v788 = vadd.f32 %v779, %v786
    %v789 = vadd.f32 %v780, %v786
    %v790 = vadd.f32 %v781, %v786
    %v791 = vadd.f32 %v782, %v786
    %v792 = vmax.f32 %v788, 0.0
    %v793 = vmax.f32 %v789, 0.0
    %v794 = vmax.f32 %v790, 0.0
    %v795 = vmax.f32 %v791, 0.0
    %v796 = vpack.c.bf16 %v793, %v792
    %v797 = vpack.c.bf16 %v795, %v794
    %s798 = scalar_lea.vmem %s4, 24
    %v799 = vld [vmem:[%s798] sm:$0xf]
    %v800 = vld [vmem:[%s798 + $0x4] sm:$0xf]
    %v803 = vunpack.c.l.b16 %v799
    %v804 = vunpack.c.l.b16 %v800
    %v805 = vpack.c.b16 %v804, %v803
    %v808 = vsel %vm134, %v796, 0
    %v811 = vsel %vm134, %v797, 0
    %813 = vmatpush.bf16.msra.mxu0 0
    %814 = vmatpush.bf16.msra.mxu0 0
    %815 = vmatpush.bf16.msra.mxu0 0
    %816 = vmatpush.bf16.msra.mxu0 0
    %817 = vmatpush.bf16.msra.mxu0 0
    %818 = vmatpush.bf16.msra.mxu0 0
    %819 = vmatpush.bf16.msra.mxu0 0
    %820 = vmatpush.bf16.msra.mxu0 %v805
    %821 = vmatmul.bf16.gmra.mxu0 %v808
    %v822 = vpop.f32.mrf.mxu0
    %v823 = vadd.f32 0.0, %v822
    %v824 = vpop.f32.mrf.mxu0
    %v825 = vadd.f32 0.0, %v824
    %826 = vmatmul.bf16.gmra.mxu0 %v811
    %v827 = vpop.f32.mrf.mxu0
    %v828 = vadd.f32 0.0, %v827
    %v829 = vpop.f32.mrf.mxu0
    %v830 = vadd.f32 0.0, %v829
    %831 = vdwg.mxu0
    %v832 = vadd.f32 %v630, %v823
    %v833 = vadd.f32 %v631, %v825
    %v834 = vadd.f32 %v632, %v828
    %v835 = vadd.f32 %v633, %v830
    %v836 = vld [vmem:[%s5] sm:$0x1]
    %v838 = vperm.slane %v836, 0
    %v840 = vmul.f32 %v832, %v838
    %v841 = vmul.f32 %v833, %v838
    %v842 = vmul.f32 %v834, %v838
    %v843 = vmul.f32 %v835, %v838
    %v844 = vld [vmem:[%s6] sm:$0x1]
    %v846 = vperm.slane %v844, 0
    %v848 = vadd.f32 %v840, %v846
    %v849 = vadd.f32 %v841, %v846
    %v850 = vadd.f32 %v842, %v846
    %v851 = vadd.f32 %v843, %v846
    %v852 = vld [vmem:[%s7] sm:$0xf]
    %v853 = vld [vmem:[%s7 + $0x4] sm:$0xf]
    %v854 = vld [vmem:[%s7 + $0x8] sm:$0xf]
    %v855 = vld [vmem:[%s7 + $0xc] sm:$0xf]
    %v856 = vunpack.c.l.bf16 %v852
    %v857 = vunpack.c.l.bf16 %v853
    %v858 = vunpack.c.l.bf16 %v854
    %v859 = vunpack.c.l.bf16 %v855
    %v860 = vadd.f32 %v848, %v856
    %v861 = vadd.f32 %v849, %v857
    %v862 = vadd.f32 %v850, %v858
    %v863 = vadd.f32 %v851, %v859
    %v864 = vmax.f32 %v860, 0.0
    %v865 = vmax.f32 %v861, 0.0
    %v866 = vmax.f32 %v862, 0.0
    %v867 = vmax.f32 %v863, 0.0
    %v868 = vld [vmem:[%s8] sm:$0x1]
    %v869 = vpack.c.bf16 %v865, %v864
    %v870 = vpack.c.bf16 %v867, %v866
    %vm871 = vcmask 261120
    %v873 = vsel %vm871, %v868, 0
    %875 = vmatpush.bf16.msra.mxu0 0
    %876 = vmatpush.bf16.msra.mxu0 0
    %877 = vmatpush.bf16.msra.mxu0 0
    %878 = vmatpush.bf16.msra.mxu0 0
    %879 = vmatpush.bf16.msra.mxu0 0
    %880 = vmatpush.bf16.msra.mxu0 0
    %881 = vmatpush.bf16.msra.mxu0 %v870
    %882 = vmatpush.bf16.msra.mxu0 %v869
    %883 = vmatmul.bf16.gmra.mxu0 %v873
    %v884 = vpop.f32.mrf.mxu0
    %v885 = vadd.f32 0.0, %v884
    %v886 = vpop.f32.mrf.mxu0
    %887 = vdwg.mxu0
    %v888 = vpack.c.bf16 %v885, %v885
    %v889 = vld [vmem:[%s9] sm:$0xf]
    %v890 = vld [vmem:[%s9 + $0x4] sm:$0xf]
    %v891 = vld [vmem:[%s9 + $0x8] sm:$0xf]
    %v892 = vld [vmem:[%s9 + $0xc] sm:$0xf]
    %v893 = vld [vmem:[%s9 + $0x10] sm:$0xf]
    %v894 = vld [vmem:[%s9 + $0x14] sm:$0xf]
    %v895 = vld [vmem:[%s9 + $0x18] sm:$0xf]
    %v896 = vld [vmem:[%s9 + $0x1c] sm:$0xf]
    %v897 = vld [vmem:[%s9 + $0x20] sm:$0xf]
    %v898 = vld [vmem:[%s9 + $0x24] sm:$0xf]
    %v899 = vld [vmem:[%s9 + $0x28] sm:$0xf]
    %v900 = vld [vmem:[%s9 + $0x2c] sm:$0xf]
    %v901 = vld [vmem:[%s9 + $0x30] sm:$0xf]
    %v902 = vld [vmem:[%s9 + $0x34] sm:$0xf]
    %v903 = vld [vmem:[%s9 + $0x38] sm:$0xf]
    %v904 = vld [vmem:[%s9 + $0x3c] sm:$0xf]
    %v905 = vld [vmem:[%s10] sm:$0x1]
    %v907 = vperm.slane %v905, 0
    %v925 = vunpack.c.l.b16 %v889
    %v926 = vunpack.c.l.b16 %v890
    %v927 = vunpack.c.l.b16 %v891
    %v928 = vunpack.c.l.b16 %v892
    %v929 = vunpack.c.l.b16 %v893
    %v930 = vunpack.c.l.b16 %v894
    %v931 = vunpack.c.l.b16 %v895
    %v932 = vunpack.c.l.b16 %v896
    %v933 = vunpack.c.l.b16 %v897
    %v934 = vunpack.c.l.b16 %v898
    %v935 = vunpack.c.l.b16 %v899
    %v936 = vunpack.c.l.b16 %v900
    %v937 = vunpack.c.l.b16 %v901
    %v938 = vunpack.c.l.b16 %v902
    %v939 = vunpack.c.l.b16 %v903
    %v940 = vunpack.c.l.b16 %v904
    %v941 = vpack.c.b16 %v926, %v925
    %v942 = vpack.c.b16 %v928, %v927
    %v943 = vpack.c.b16 %v930, %v929
    %v944 = vpack.c.b16 %v932, %v931
    %v945 = vpack.c.b16 %v934, %v933
    %v946 = vpack.c.b16 %v936, %v935
    %v947 = vpack.c.b16 %v938, %v937
    %v948 = vpack.c.b16 %v940, %v939
    %957 = vmatpush.bf16.msra.mxu0 %v948
    %958 = vmatpush.bf16.msra.mxu0 %v947
    %959 = vmatpush.bf16.msra.mxu0 %v946
    %960 = vmatpush.bf16.msra.mxu0 %v945
    %961 = vmatpush.bf16.msra.mxu0 %v944
    %962 = vmatpush.bf16.msra.mxu0 %v943
    %963 = vmatpush.bf16.msra.mxu0 %v942
    %964 = vmatpush.bf16.msra.mxu0 %v941
    %965 = vmatmul.bf16.gmra.mxu0 %v888
    %v966 = vpop.f32.mrf.mxu0
    %v967 = vadd.f32 %v907, %v966
    %v968 = vpop.f32.mrf.mxu0
    %969 = vdwg.mxu0
    %970 = vst [vmem:[#allocation2] sm:$0x3] %v967
    // Predicated region
    $region46: #{resfacenext_forward.5} parent=1 // pred_check
      _
    $region47: #{resfacenext_forward.5} parent=1 // pred_check_branch
      %972 = sbr.rel (0) target = $region49
    $region48: #{resfacenext_forward.5} parent=1 // pred_region
      %974 = vsyncadd [#allocation3], 0
      %s976 = sshll.u32 [#allocation2], 4
      %s977 = int_to_ptr.vmem [resolvable:$true] %s976
      %s978 = sshll.u32 %s11, 4
      %s979 = int_to_ptr.hbm [resolvable:$true] %s978
      %981 = dma.vmem_to_hbm [thread:$0]  %s977, 32, %s979, [#allocation3]
    $region49: #{resfacenext_forward.5} parent=1 // pred_fallthru
      _
    // Predicated region
    $region50: #{resfacenext_forward.5} parent=1 // pred_check
      _
    $region51: #{resfacenext_forward.5} parent=1 // pred_check_branch
      %983 = sbr.rel (0) target = $region53
    $region52: #{resfacenext_forward.5} parent=1 // pred_region
      %985 = dma.done [#allocation3], 32
    $region53: #{resfacenext_forward.5} parent=1 // pred_fallthru
      _
    %986 = vsyncpa [#allocation3], 1

</llo_original>
